<compile_context>
chip_gen: v7x
topology: tpu7x:2x2x1
jax: 0.10.0
libtpu: 0.0.40
codegen_flags: <defaults>
</compile_context>

<pallas_src>
import jax
import jax.numpy as jnp
from jax import lax
from jax.experimental import pallas as pl
from jax.experimental.pallas import tpu as pltpu


# ------------------------------------------------------------------ kernel

def _residual_block_kernel(x_ref, w1_ref, w2_ref, out_ref, xpad_ref, h1pad_ref):
    """out = x + conv2(relu(conv1(x))); 3x3 convs, stride 1, pad 1, no bias.

    x_ref    : (1, H, W, C)  input tile, NHWC
    w1_ref   : (9, C, C)     conv1 taps [kh*3+kw, cin, cout] (bf16)
    w2_ref   : (9, C, C)     conv2 taps (bf16)
    out_ref  : (1, H, W, C)
    xpad_ref, h1pad_ref : (H+2, W+2, C) f32 VMEM scratch with a 1-px zero halo
    """
    _, H, W, C = out_ref.shape

    # In-kernel zero padding: zero the scratch (halo included), then overwrite
    # the interior.  Re-zeroing every step keeps the kernel correct even when
    # the batch grid axis is sharded across TensorCores (scratch is per-core).
    xpad_ref[...] = jnp.zeros_like(xpad_ref)
    h1pad_ref[...] = jnp.zeros_like(h1pad_ref)

    x = x_ref[0].astype(jnp.float32)                       # (H, W, C)
    xpad_ref[1:H + 1, 1:W + 1, :] = x

    def conv3x3(src_ref, w_ref):
        # 9 whole-tile MXU matmuls: (H*W, Cin) @ (Cin, Cout), f32 accumulation.
        acc = jnp.zeros((H * W, C), jnp.float32)
        for kh in range(3):
            for kw in range(3):
                patch = src_ref[kh:kh + H, kw:kw + W, :].reshape(H * W, C)
                acc = acc + jnp.dot(patch.astype(w_ref.dtype),
                                    w_ref[kh * 3 + kw],
                                    preferred_element_type=jnp.float32)
        return acc                                         # (H*W, C) f32

    h1 = jnp.maximum(conv3x3(xpad_ref, w1_ref), 0.0)       # relu(conv1(x)), f32
    h1pad_ref[1:H + 1, 1:W + 1, :] = h1.reshape(H, W, C)   # h1 stays in VMEM

    y = conv3x3(h1pad_ref, w2_ref).reshape(H, W, C) + x    # conv2(h1) + x
    out_ref[0] = y.astype(out_ref.dtype)


# ------------------------------------------------------------ pallas_call glue

def residual_block_forward_nhwc(x_nhwc, w1_oihw, w2_oihw,
                                compute_dtype=jnp.bfloat16):
    """Fused residual block on NHWC activations (no layout transposes)."""
    N, H, W, C = x_nhwc.shape
    if w1_oihw.shape != (C, C, 3, 3) or w2_oihw.shape != (C, C, 3, 3):
        raise ValueError("ResidualBlock requires Cin == Cout and 3x3 kernels")
    if W % 8 != 0:
        raise ValueError("W must be a multiple of 8 (sublane tiling) for the "
                         "in-kernel (H, W, C) -> (H*W, C) reshape")

    # OIHW -> per-tap (Cin, Cout) matrices, tap index t = kh*3 + kw.
    # Weights are cast once to bf16: MXU operands are bf16, accumulation is f32.
    w1_taps = jnp.transpose(w1_oihw, (2, 3, 1, 0)).reshape(9, C, C).astype(compute_dtype)
    w2_taps = jnp.transpose(w2_oihw, (2, 3, 1, 0)).reshape(9, C, C).astype(compute_dtype)

    return pl.pallas_call(
        _residual_block_kernel,
        out_shape=jax.ShapeDtypeStruct((N, H, W, C), x_nhwc.dtype),
        grid=(N,),
        in_specs=[
            pl.BlockSpec((1, H, W, C), lambda b: (b, 0, 0, 0)),
            pl.BlockSpec((9, C, C), lambda b: (0, 0, 0)),
            pl.BlockSpec((9, C, C), lambda b: (0, 0, 0)),
        ],
        out_specs=pl.BlockSpec((1, H, W, C), lambda b: (b, 0, 0, 0)),
        scratch_shapes=[
            pltpu.VMEM((H + 2, W + 2, C), jnp.float32),   # zero-haloed x
            pltpu.VMEM((H + 2, W + 2, C), jnp.float32),   # zero-haloed h1 (never hits HBM)
        ],
        compiler_params=pltpu.CompilerParams(dimension_semantics=("parallel",)),
    )(x_nhwc, w1_taps, w2_taps)


@jax.jit
def residual_block_forward(x_nchw, w1_oihw, w2_oihw):
    """PyTorch-parity entry point: NCHW activations, OIHW weights."""
    x = jnp.transpose(x_nchw, (0, 2, 3, 1))                # NCHW -> NHWC
    out = residual_block_forward_nhwc(x, w1_oihw, w2_oihw)
    # TODO(synk): F.dropout path not implemented; module default dropRate=0.0 makes it a no-op.
    return jnp.transpose(out, (0, 3, 1, 2))                # NHWC -> NCHW


# ------------------------------------------------------------------ reference

def _reference_forward(x_nchw, w1, w2):
    dn = lax.conv_dimension_numbers(x_nchw.shape, w1.shape, ("NCHW", "OIHW", "NCHW"))
    c1 = lax.conv_general_dilated(x_nchw, w1, (1, 1), ((1, 1), (1, 1)),
                                  dimension_numbers=dn)
    h1 = jnp.maximum(c1, 0.0)
    c2 = lax.conv_general_dilated(h1, w2, (1, 1), ((1, 1), (1, 1)),
                                  dimension_numbers=dn)
    return x_nchw + c2


if __name__ == "__main__":
    key = jax.random.PRNGKey(0)
    kx, k1, k2 = jax.random.split(key, 3)

    N, C, H, W = 2, 4, 16, 16                     # in_planes = 4
    x = jax.random.normal(kx, (N, C, H, W), jnp.float32)
    w1 = jax.random.normal(k1, (C, C, 3, 3), jnp.float32) * 0.1   # conv1.weight
    w2 = jax.random.normal(k2, (C, C, 3, 3), jnp.float32) * 0.1   # conv2.weight

    out = jax.block_until_ready(residual_block_forward(x, w1, w2))

    ref = _reference_forward(x, w1, w2)
    assert out.shape == x.shape and out.dtype == x.dtype
    # Tolerance accounts for bf16 MXU operands (f32 accumulation) vs f32 reference.
    if not jnp.allclose(out, ref, atol=5e-2, rtol=5e-2):
        raise AssertionError(
            f"mismatch vs lax.conv reference, max abs err = "
            f"{float(jnp.max(jnp.abs(out - ref)))}"
        )
    print("KERNEL_OK")
</pallas_src>

<mosaic_0001>
module attributes {stable_mosaic.version = 11 : i64} {
  func.func @_residual_block_kernel(%arg0: i32, %arg1: memref<1x16x16x4xf32, #tpu.memory_space<vmem>>, %arg2: memref<9x4x4xbf16, #tpu.memory_space<vmem>>, %arg3: memref<9x4x4xbf16, #tpu.memory_space<vmem>>, %arg4: memref<1x16x16x4xf32, #tpu.memory_space<vmem>>, %arg5: memref<18x18x4xf32, #tpu.memory_space<vmem>>, %arg6: memref<18x18x4xf32, #tpu.memory_space<vmem>>) attributes {dimension_semantics = [#tpu.dimension_semantics<parallel>], iteration_bounds = array<i64: 2>, scalar_prefetch = 0 : i64, scratch_operands = 2 : i64, tpu.core_type = #tpu.core_type<tc>, window_params = [{transform_indices = @transform_0, window_bounds = array<i64: 1, 16, 16, 4>}, {pipeline_mode = #tpu.pipeline_mode<synchronous>, transform_indices = @transform_1, window_bounds = array<i64: 9, 4, 4>}, {pipeline_mode = #tpu.pipeline_mode<synchronous>, transform_indices = @transform_2, window_bounds = array<i64: 9, 4, 4>}, {transform_indices = @transform_3, window_bounds = array<i64: 1, 16, 16, 4>}]} {
    %cst = arith.constant 0.000000e+00 : f32
    %0 = vector.broadcast %cst : f32 to vector<18x18x4xf32>
    %c0 = arith.constant 0 : index
    %c0_0 = arith.constant 0 : index
    %c0_1 = arith.constant 0 : index
    %1 = vector.load %arg5[%c0, %c0_0, %c0_1] : memref<18x18x4xf32, #tpu.memory_space<vmem>>, vector<18x18x4xf32>
    tpu.vector_store %arg5[%c0, %c0_0, %c0_1], %0 {strides = array<i32>} : memref<18x18x4xf32, #tpu.memory_space<vmem>>, vector<18x18x4xf32>,
    %cst_2 = arith.constant 0.000000e+00 : f32
    %2 = vector.broadcast %cst_2 : f32 to vector<18x18x4xf32>
    %c0_3 = arith.constant 0 : index
    %c0_4 = arith.constant 0 : index
    %c0_5 = arith.constant 0 : index
    %3 = vector.load %arg6[%c0_3, %c0_4, %c0_5] : memref<18x18x4xf32, #tpu.memory_space<vmem>>, vector<18x18x4xf32>
    tpu.vector_store %arg6[%c0_3, %c0_4, %c0_5], %2 {strides = array<i32>} : memref<18x18x4xf32, #tpu.memory_space<vmem>>, vector<18x18x4xf32>,
    %c0_6 = arith.constant 0 : index
    %c0_7 = arith.constant 0 : index
    %c0_8 = arith.constant 0 : index
    %c0_9 = arith.constant 0 : index
    %4 = vector.load %arg1[%c0_6, %c0_7, %c0_8, %c0_9] : memref<1x16x16x4xf32, #tpu.memory_space<vmem>>, vector<1x16x16x4xf32>
    %5 = vector.shape_cast %4 : vector<1x16x16x4xf32> to vector<16x16x4xf32>
    %c1 = arith.constant 1 : index
    %c1_10 = arith.constant 1 : index
    %c0_11 = arith.constant 0 : index
    %6 = vector.load %arg5[%c1, %c1_10, %c0_11] : memref<18x18x4xf32, #tpu.memory_space<vmem>>, vector<16x16x4xf32>
    tpu.vector_store %arg5[%c1, %c1_10, %c0_11], %5 {strides = array<i32>} : memref<18x18x4xf32, #tpu.memory_space<vmem>>, vector<16x16x4xf32>,
    %cst_12 = arith.constant 0.000000e+00 : f32
    %7 = vector.broadcast %cst_12 : f32 to vector<256x4xf32>
    %c0_13 = arith.constant 0 : index
    %c0_14 = arith.constant 0 : index
    %c0_15 = arith.constant 0 : index
    %8 = vector.load %arg5[%c0_13, %c0_14, %c0_15] : memref<18x18x4xf32, #tpu.memory_space<vmem>>, vector<16x16x4xf32>
    %9 = vector.shape_cast %8 : vector<16x16x4xf32> to vector<256x4xf32>
    %10 = arith.truncf %9 : vector<256x4xf32> to vector<256x4xbf16>
    %c0_16 = arith.constant 0 : index
    %c0_17 = arith.constant 0 : index
    %c0_18 = arith.constant 0 : index
    %11 = vector.load %arg2[%c0_16, %c0_17, %c0_18] : memref<9x4x4xbf16, #tpu.memory_space<vmem>>, vector<1x4x4xbf16>
    %12 = vector.shape_cast %11 : vector<1x4x4xbf16> to vector<4x4xbf16>
    %cst_19 = arith.constant dense<0.000000e+00> : vector<256x4xf32>
    %13 = tpu.matmul %10, %12, %cst_19 {dimension_numbers = #tpu.dot_dimension_numbers<[1], [0], [0], [1], [0, 0, 1, 1], [], []>} : vector<256x4xbf16>, vector<4x4xbf16>, vector<256x4xf32> -> vector<256x4xf32>
    %14 = arith.addf %7, %13 : vector<256x4xf32>
    %c0_20 = arith.constant 0 : index
    %c1_21 = arith.constant 1 : index
    %c0_22 = arith.constant 0 : index
    %15 = vector.load %arg5[%c0_20, %c1_21, %c0_22] : memref<18x18x4xf32, #tpu.memory_space<vmem>>, vector<16x16x4xf32>
    %16 = vector.shape_cast %15 : vector<16x16x4xf32> to vector<256x4xf32>
    %17 = arith.truncf %16 : vector<256x4xf32> to vector<256x4xbf16>
    %c1_23 = arith.constant 1 : index
    %c0_24 = arith.constant 0 : index
    %c0_25 = arith.constant 0 : index
    %18 = vector.load %arg2[%c1_23, %c0_24, %c0_25] : memref<9x4x4xbf16, #tpu.memory_space<vmem>>, vector<1x4x4xbf16>
    %19 = vector.shape_cast %18 : vector<1x4x4xbf16> to vector<4x4xbf16>
    %cst_26 = arith.constant dense<0.000000e+00> : vector<256x4xf32>
    %20 = tpu.matmul %17, %19, %cst_26 {dimension_numbers = #tpu.dot_dimension_numbers<[1], [0], [0], [1], [0, 0, 1, 1], [], []>} : vector<256x4xbf16>, vector<4x4xbf16>, vector<256x4xf32> -> vector<256x4xf32>
    %21 = arith.addf %14, %20 : vector<256x4xf32>
    %c0_27 = arith.constant 0 : index
    %c2 = arith.constant 2 : index
    %c0_28 = arith.constant 0 : index
    %22 = vector.load %arg5[%c0_27, %c2, %c0_28] : memref<18x18x4xf32, #tpu.memory_space<vmem>>, vector<16x16x4xf32>
    %23 = vector.shape_cast %22 : vector<16x16x4xf32> to vector<256x4xf32>
    %24 = arith.truncf %23 : vector<256x4xf32> to vector<256x4xbf16>
    %c2_29 = arith.constant 2 : index
    %c0_30 = arith.constant 0 : index
    %c0_31 = arith.constant 0 : index
    %25 = vector.load %arg2[%c2_29, %c0_30, %c0_31] : memref<9x4x4xbf16, #tpu.memory_space<vmem>>, vector<1x4x4xbf16>
    %26 = vector.shape_cast %25 : vector<1x4x4xbf16> to vector<4x4xbf16>
    %cst_32 = arith.constant dense<0.000000e+00> : vector<256x4xf32>
    %27 = tpu.matmul %24, %26, %cst_32 {dimension_numbers = #tpu.dot_dimension_numbers<[1], [0], [0], [1], [0, 0, 1, 1], [], []>} : vector<256x4xbf16>, vector<4x4xbf16>, vector<256x4xf32> -> vector<256x4xf32>
    %28 = arith.addf %21, %27 : vector<256x4xf32>
    %c1_33 = arith.constant 1 : index
    %c0_34 = arith.constant 0 : index
    %c0_35 = arith.constant 0 : index
    %29 = vector.load %arg5[%c1_33, %c0_34, %c0_35] : memref<18x18x4xf32, #tpu.memory_space<vmem>>, vector<16x16x4xf32>
    %30 = vector.shape_cast %29 : vector<16x16x4xf32> to vector<256x4xf32>
    %31 = arith.truncf %30 : vector<256x4xf32> to vector<256x4xbf16>
    %c3 = arith.constant 3 : index
    %c0_36 = arith.constant 0 : index
    %c0_37 = arith.constant 0 : index
    %32 = vector.load %arg2[%c3, %c0_36, %c0_37] : memref<9x4x4xbf16, #tpu.memory_space<vmem>>, vector<1x4x4xbf16>
    %33 = vector.shape_cast %32 : vector<1x4x4xbf16> to vector<4x4xbf16>
    %cst_38 = arith.constant dense<0.000000e+00> : vector<256x4xf32>
    %34 = tpu.matmul %31, %33, %cst_38 {dimension_numbers = #tpu.dot_dimension_numbers<[1], [0], [0], [1], [0, 0, 1, 1], [], []>} : vector<256x4xbf16>, vector<4x4xbf16>, vector<256x4xf32> -> vector<256x4xf32>
    %35 = arith.addf %28, %34 : vector<256x4xf32>
    %c1_39 = arith.constant 1 : index
    %c1_40 = arith.constant 1 : index
    %c0_41 = arith.constant 0 : index
    %36 = vector.load %arg5[%c1_39, %c1_40, %c0_41] : memref<18x18x4xf32, #tpu.memory_space<vmem>>, vector<16x16x4xf32>
    %37 = vector.shape_cast %36 : vector<16x16x4xf32> to vector<256x4xf32>
    %38 = arith.truncf %37 : vector<256x4xf32> to vector<256x4xbf16>
    %c4 = arith.constant 4 : index
    %c0_42 = arith.constant 0 : index
    %c0_43 = arith.constant 0 : index
    %39 = vector.load %arg2[%c4, %c0_42, %c0_43] : memref<9x4x4xbf16, #tpu.memory_space<vmem>>, vector<1x4x4xbf16>
    %40 = vector.shape_cast %39 : vector<1x4x4xbf16> to vector<4x4xbf16>
    %cst_44 = arith.constant dense<0.000000e+00> : vector<256x4xf32>
    %41 = tpu.matmul %38, %40, %cst_44 {dimension_numbers = #tpu.dot_dimension_numbers<[1], [0], [0], [1], [0, 0, 1, 1], [], []>} : vector<256x4xbf16>, vector<4x4xbf16>, vector<256x4xf32> -> vector<256x4xf32>
    %42 = arith.addf %35, %41 : vector<256x4xf32>
    %c1_45 = arith.constant 1 : index
    %c2_46 = arith.constant 2 : index
    %c0_47 = arith.constant 0 : index
    %43 = vector.load %arg5[%c1_45, %c2_46, %c0_47] : memref<18x18x4xf32, #tpu.memory_space<vmem>>, vector<16x16x4xf32>
    %44 = vector.shape_cast %43 : vector<16x16x4xf32> to vector<256x4xf32>
    %45 = arith.truncf %44 : vector<256x4xf32> to vector<256x4xbf16>
    %c5 = arith.constant 5 : index
    %c0_48 = arith.constant 0 : index
    %c0_49 = arith.constant 0 : index
    %46 = vector.load %arg2[%c5, %c0_48, %c0_49] : memref<9x4x4xbf16, #tpu.memory_space<vmem>>, vector<1x4x4xbf16>
    %47 = vector.shape_cast %46 : vector<1x4x4xbf16> to vector<4x4xbf16>
    %cst_50 = arith.constant dense<0.000000e+00> : vector<256x4xf32>
    %48 = tpu.matmul %45, %47, %cst_50 {dimension_numbers = #tpu.dot_dimension_numbers<[1], [0], [0], [1], [0, 0, 1, 1], [], []>} : vector<256x4xbf16>, vector<4x4xbf16>, vector<256x4xf32> -> vector<256x4xf32>
    %49 = arith.addf %42, %48 : vector<256x4xf32>
    %c2_51 = arith.constant 2 : index
    %c0_52 = arith.constant 0 : index
    %c0_53 = arith.constant 0 : index
    %50 = vector.load %arg5[%c2_51, %c0_52, %c0_53] : memref<18x18x4xf32, #tpu.memory_space<vmem>>, vector<16x16x4xf32>
    %51 = vector.shape_cast %50 : vector<16x16x4xf32> to vector<256x4xf32>
    %52 = arith.truncf %51 : vector<256x4xf32> to vector<256x4xbf16>
    %c6 = arith.constant 6 : index
    %c0_54 = arith.constant 0 : index
    %c0_55 = arith.constant 0 : index
    %53 = vector.load %arg2[%c6, %c0_54, %c0_55] : memref<9x4x4xbf16, #tpu.memory_space<vmem>>, vector<1x4x4xbf16>
    %54 = vector.shape_cast %53 : vector<1x4x4xbf16> to vector<4x4xbf16>
    %cst_56 = arith.constant dense<0.000000e+00> : vector<256x4xf32>
    %55 = tpu.matmul %52, %54, %cst_56 {dimension_numbers = #tpu.dot_dimension_numbers<[1], [0], [0], [1], [0, 0, 1, 1], [], []>} : vector<256x4xbf16>, vector<4x4xbf16>, vector<256x4xf32> -> vector<256x4xf32>
    %56 = arith.addf %49, %55 : vector<256x4xf32>
    %c2_57 = arith.constant 2 : index
    %c1_58 = arith.constant 1 : index
    %c0_59 = arith.constant 0 : index
    %57 = vector.load %arg5[%c2_57, %c1_58, %c0_59] : memref<18x18x4xf32, #tpu.memory_space<vmem>>, vector<16x16x4xf32>
    %58 = vector.shape_cast %57 : vector<16x16x4xf32> to vector<256x4xf32>
    %59 = arith.truncf %58 : vector<256x4xf32> to vector<256x4xbf16>
    %c7 = arith.constant 7 : index
    %c0_60 = arith.constant 0 : index
    %c0_61 = arith.constant 0 : index
    %60 = vector.load %arg2[%c7, %c0_60, %c0_61] : memref<9x4x4xbf16, #tpu.memory_space<vmem>>, vector<1x4x4xbf16>
    %61 = vector.shape_cast %60 : vector<1x4x4xbf16> to vector<4x4xbf16>
    %cst_62 = arith.constant dense<0.000000e+00> : vector<256x4xf32>
    %62 = tpu.matmul %59, %61, %cst_62 {dimension_numbers = #tpu.dot_dimension_numbers<[1], [0], [0], [1], [0, 0, 1, 1], [], []>} : vector<256x4xbf16>, vector<4x4xbf16>, vector<256x4xf32> -> vector<256x4xf32>
    %63 = arith.addf %56, %62 : vector<256x4xf32>
    %c2_63 = arith.constant 2 : index
    %c2_64 = arith.constant 2 : index
    %c0_65 = arith.constant 0 : index
    %64 = vector.load %arg5[%c2_63, %c2_64, %c0_65] : memref<18x18x4xf32, #tpu.memory_space<vmem>>, vector<16x16x4xf32>
    %65 = vector.shape_cast %64 : vector<16x16x4xf32> to vector<256x4xf32>
    %66 = arith.truncf %65 : vector<256x4xf32> to vector<256x4xbf16>
    %c8 = arith.constant 8 : index
    %c0_66 = arith.constant 0 : index
    %c0_67 = arith.constant 0 : index
    %67 = vector.load %arg2[%c8, %c0_66, %c0_67] : memref<9x4x4xbf16, #tpu.memory_space<vmem>>, vector<1x4x4xbf16>
    %68 = vector.shape_cast %67 : vector<1x4x4xbf16> to vector<4x4xbf16>
    %cst_68 = arith.constant dense<0.000000e+00> : vector<256x4xf32>
    %69 = tpu.matmul %66, %68, %cst_68 {dimension_numbers = #tpu.dot_dimension_numbers<[1], [0], [0], [1], [0, 0, 1, 1], [], []>} : vector<256x4xbf16>, vector<4x4xbf16>, vector<256x4xf32> -> vector<256x4xf32>
    %70 = arith.addf %63, %69 : vector<256x4xf32>
    %cst_69 = arith.constant 0.000000e+00 : f32
    %71 = vector.broadcast %cst_69 : f32 to vector<256x4xf32>
    %72 = arith.maximumf %70, %71 : vector<256x4xf32>
    %73 = vector.shape_cast %72 : vector<256x4xf32> to vector<16x16x4xf32>
    %c1_70 = arith.constant 1 : index
    %c1_71 = arith.constant 1 : index
    %c0_72 = arith.constant 0 : index
    %74 = vector.load %arg6[%c1_70, %c1_71, %c0_72] : memref<18x18x4xf32, #tpu.memory_space<vmem>>, vector<16x16x4xf32>
    tpu.vector_store %arg6[%c1_70, %c1_71, %c0_72], %73 {strides = array<i32>} : memref<18x18x4xf32, #tpu.memory_space<vmem>>, vector<16x16x4xf32>,
    %cst_73 = arith.constant 0.000000e+00 : f32
    %75 = vector.broadcast %cst_73 : f32 to vector<256x4xf32>
    %c0_74 = arith.constant 0 : index
    %c0_75 = arith.constant 0 : index
    %c0_76 = arith.constant 0 : index
    %76 = vector.load %arg6[%c0_74, %c0_75, %c0_76] : memref<18x18x4xf32, #tpu.memory_space<vmem>>, vector<16x16x4xf32>
    %77 = vector.shape_cast %76 : vector<16x16x4xf32> to vector<256x4xf32>
    %78 = arith.truncf %77 : vector<256x4xf32> to vector<256x4xbf16>
    %c0_77 = arith.constant 0 : index
    %c0_78 = arith.constant 0 : index
    %c0_79 = arith.constant 0 : index
    %79 = vector.load %arg3[%c0_77, %c0_78, %c0_79] : memref<9x4x4xbf16, #tpu.memory_space<vmem>>, vector<1x4x4xbf16>
    %80 = vector.shape_cast %79 : vector<1x4x4xbf16> to vector<4x4xbf16>
    %cst_80 = arith.constant dense<0.000000e+00> : vector<256x4xf32>
    %81 = tpu.matmul %78, %80, %cst_80 {dimension_numbers = #tpu.dot_dimension_numbers<[1], [0], [0], [1], [0, 0, 1, 1], [], []>} : vector<256x4xbf16>, vector<4x4xbf16>, vector<256x4xf32> -> vector<256x4xf32>
    %82 = arith.addf %75, %81 : vector<256x4xf32>
    %c0_81 = arith.constant 0 : index
    %c1_82 = arith.constant 1 : index
    %c0_83 = arith.constant 0 : index
    %83 = vector.load %arg6[%c0_81, %c1_82, %c0_83] : memref<18x18x4xf32, #tpu.memory_space<vmem>>, vector<16x16x4xf32>
    %84 = vector.shape_cast %83 : vector<16x16x4xf32> to vector<256x4xf32>
    %85 = arith.truncf %84 : vector<256x4xf32> to vector<256x4xbf16>
    %c1_84 = arith.constant 1 : index
    %c0_85 = arith.constant 0 : index
    %c0_86 = arith.constant 0 : index
    %86 = vector.load %arg3[%c1_84, %c0_85, %c0_86] : memref<9x4x4xbf16, #tpu.memory_space<vmem>>, vector<1x4x4xbf16>
    %87 = vector.shape_cast %86 : vector<1x4x4xbf16> to vector<4x4xbf16>
    %cst_87 = arith.constant dense<0.000000e+00> : vector<256x4xf32>
    %88 = tpu.matmul %85, %87, %cst_87 {dimension_numbers = #tpu.dot_dimension_numbers<[1], [0], [0], [1], [0, 0, 1, 1], [], []>} : vector<256x4xbf16>, vector<4x4xbf16>, vector<256x4xf32> -> vector<256x4xf32>
    %89 = arith.addf %82, %88 : vector<256x4xf32>
    %c0_88 = arith.constant 0 : index
    %c2_89 = arith.constant 2 : index
    %c0_90 = arith.constant 0 : index
    %90 = vector.load %arg6[%c0_88, %c2_89, %c0_90] : memref<18x18x4xf32, #tpu.memory_space<vmem>>, vector<16x16x4xf32>
    %91 = vector.shape_cast %90 : vector<16x16x4xf32> to vector<256x4xf32>
    %92 = arith.truncf %91 : vector<256x4xf32> to vector<256x4xbf16>
    %c2_91 = arith.constant 2 : index
    %c0_92 = arith.constant 0 : index
    %c0_93 = arith.constant 0 : index
    %93 = vector.load %arg3[%c2_91, %c0_92, %c0_93] : memref<9x4x4xbf16, #tpu.memory_space<vmem>>, vector<1x4x4xbf16>
    %94 = vector.shape_cast %93 : vector<1x4x4xbf16> to vector<4x4xbf16>
    %cst_94 = arith.constant dense<0.000000e+00> : vector<256x4xf32>
    %95 = tpu.matmul %92, %94, %cst_94 {dimension_numbers = #tpu.dot_dimension_numbers<[1], [0], [0], [1], [0, 0, 1, 1], [], []>} : vector<256x4xbf16>, vector<4x4xbf16>, vector<256x4xf32> -> vector<256x4xf32>
    %96 = arith.addf %89, %95 : vector<256x4xf32>
    %c1_95 = arith.constant 1 : index
    %c0_96 = arith.constant 0 : index
    %c0_97 = arith.constant 0 : index
    %97 = vector.load %arg6[%c1_95, %c0_96, %c0_97] : memref<18x18x4xf32, #tpu.memory_space<vmem>>, vector<16x16x4xf32>
    %98 = vector.shape_cast %97 : vector<16x16x4xf32> to vector<256x4xf32>
    %99 = arith.truncf %98 : vector<256x4xf32> to vector<256x4xbf16>
    %c3_98 = arith.constant 3 : index
    %c0_99 = arith.constant 0 : index
    %c0_100 = arith.constant 0 : index
    %100 = vector.load %arg3[%c3_98, %c0_99, %c0_100] : memref<9x4x4xbf16, #tpu.memory_space<vmem>>, vector<1x4x4xbf16>
    %101 = vector.shape_cast %100 : vector<1x4x4xbf16> to vector<4x4xbf16>
    %cst_101 = arith.constant dense<0.000000e+00> : vector<256x4xf32>
    %102 = tpu.matmul %99, %101, %cst_101 {dimension_numbers = #tpu.dot_dimension_numbers<[1], [0], [0], [1], [0, 0, 1, 1], [], []>} : vector<256x4xbf16>, vector<4x4xbf16>, vector<256x4xf32> -> vector<256x4xf32>
    %103 = arith.addf %96, %102 : vector<256x4xf32>
    %c1_102 = arith.constant 1 : index
    %c1_103 = arith.constant 1 : index
    %c0_104 = arith.constant 0 : index
    %104 = vector.load %arg6[%c1_102, %c1_103, %c0_104] : memref<18x18x4xf32, #tpu.memory_space<vmem>>, vector<16x16x4xf32>
    %105 = vector.shape_cast %104 : vector<16x16x4xf32> to vector<256x4xf32>
    %106 = arith.truncf %105 : vector<256x4xf32> to vector<256x4xbf16>
    %c4_105 = arith.constant 4 : index
    %c0_106 = arith.constant 0 : index
    %c0_107 = arith.constant 0 : index
    %107 = vector.load %arg3[%c4_105, %c0_106, %c0_107] : memref<9x4x4xbf16, #tpu.memory_space<vmem>>, vector<1x4x4xbf16>
    %108 = vector.shape_cast %107 : vector<1x4x4xbf16> to vector<4x4xbf16>
    %cst_108 = arith.constant dense<0.000000e+00> : vector<256x4xf32>
    %109 = tpu.matmul %106, %108, %cst_108 {dimension_numbers = #tpu.dot_dimension_numbers<[1], [0], [0], [1], [0, 0, 1, 1], [], []>} : vector<256x4xbf16>, vector<4x4xbf16>, vector<256x4xf32> -> vector<256x4xf32>
    %110 = arith.addf %103, %109 : vector<256x4xf32>
    %c1_109 = arith.constant 1 : index
    %c2_110 = arith.constant 2 : index
    %c0_111 = arith.constant 0 : index
    %111 = vector.load %arg6[%c1_109, %c2_110, %c0_111] : memref<18x18x4xf32, #tpu.memory_space<vmem>>, vector<16x16x4xf32>
    %112 = vector.shape_cast %111 : vector<16x16x4xf32> to vector<256x4xf32>
    %113 = arith.truncf %112 : vector<256x4xf32> to vector<256x4xbf16>
    %c5_112 = arith.constant 5 : index
    %c0_113 = arith.constant 0 : index
    %c0_114 = arith.constant 0 : index
    %114 = vector.load %arg3[%c5_112, %c0_113, %c0_114] : memref<9x4x4xbf16, #tpu.memory_space<vmem>>, vector<1x4x4xbf16>
    %115 = vector.shape_cast %114 : vector<1x4x4xbf16> to vector<4x4xbf16>
    %cst_115 = arith.constant dense<0.000000e+00> : vector<256x4xf32>
    %116 = tpu.matmul %113, %115, %cst_115 {dimension_numbers = #tpu.dot_dimension_numbers<[1], [0], [0], [1], [0, 0, 1, 1], [], []>} : vector<256x4xbf16>, vector<4x4xbf16>, vector<256x4xf32> -> vector<256x4xf32>
    %117 = arith.addf %110, %116 : vector<256x4xf32>
    %c2_116 = arith.constant 2 : index
    %c0_117 = arith.constant 0 : index
    %c0_118 = arith.constant 0 : index
    %118 = vector.load %arg6[%c2_116, %c0_117, %c0_118] : memref<18x18x4xf32, #tpu.memory_space<vmem>>, vector<16x16x4xf32>
    %119 = vector.shape_cast %118 : vector<16x16x4xf32> to vector<256x4xf32>
    %120 = arith.truncf %119 : vector<256x4xf32> to vector<256x4xbf16>
    %c6_119 = arith.constant 6 : index
    %c0_120 = arith.constant 0 : index
    %c0_121 = arith.constant 0 : index
    %121 = vector.load %arg3[%c6_119, %c0_120, %c0_121] : memref<9x4x4xbf16, #tpu.memory_space<vmem>>, vector<1x4x4xbf16>
    %122 = vector.shape_cast %121 : vector<1x4x4xbf16> to vector<4x4xbf16>
    %cst_122 = arith.constant dense<0.000000e+00> : vector<256x4xf32>
    %123 = tpu.matmul %120, %122, %cst_122 {dimension_numbers = #tpu.dot_dimension_numbers<[1], [0], [0], [1], [0, 0, 1, 1], [], []>} : vector<256x4xbf16>, vector<4x4xbf16>, vector<256x4xf32> -> vector<256x4xf32>
    %124 = arith.addf %117, %123 : vector<256x4xf32>
    %c2_123 = arith.constant 2 : index
    %c1_124 = arith.constant 1 : index
    %c0_125 = arith.constant 0 : index
    %125 = vector.load %arg6[%c2_123, %c1_124, %c0_125] : memref<18x18x4xf32, #tpu.memory_space<vmem>>, vector<16x16x4xf32>
    %126 = vector.shape_cast %125 : vector<16x16x4xf32> to vector<256x4xf32>
    %127 = arith.truncf %126 : vector<256x4xf32> to vector<256x4xbf16>
    %c7_126 = arith.constant 7 : index
    %c0_127 = arith.constant 0 : index
    %c0_128 = arith.constant 0 : index
    %128 = vector.load %arg3[%c7_126, %c0_127, %c0_128] : memref<9x4x4xbf16, #tpu.memory_space<vmem>>, vector<1x4x4xbf16>
    %129 = vector.shape_cast %128 : vector<1x4x4xbf16> to vector<4x4xbf16>
    %cst_129 = arith.constant dense<0.000000e+00> : vector<256x4xf32>
    %130 = tpu.matmul %127, %129, %cst_129 {dimension_numbers = #tpu.dot_dimension_numbers<[1], [0], [0], [1], [0, 0, 1, 1], [], []>} : vector<256x4xbf16>, vector<4x4xbf16>, vector<256x4xf32> -> vector<256x4xf32>
    %131 = arith.addf %124, %130 : vector<256x4xf32>
    %c2_130 = arith.constant 2 : index
    %c2_131 = arith.constant 2 : index
    %c0_132 = arith.constant 0 : index
    %132 = vector.load %arg6[%c2_130, %c2_131, %c0_132] : memref<18x18x4xf32, #tpu.memory_space<vmem>>, vector<16x16x4xf32>
    %133 = vector.shape_cast %132 : vector<16x16x4xf32> to vector<256x4xf32>
    %134 = arith.truncf %133 : vector<256x4xf32> to vector<256x4xbf16>
    %c8_133 = arith.constant 8 : index
    %c0_134 = arith.constant 0 : index
    %c0_135 = arith.constant 0 : index
    %135 = vector.load %arg3[%c8_133, %c0_134, %c0_135] : memref<9x4x4xbf16, #tpu.memory_space<vmem>>, vector<1x4x4xbf16>
    %136 = vector.shape_cast %135 : vector<1x4x4xbf16> to vector<4x4xbf16>
    %cst_136 = arith.constant dense<0.000000e+00> : vector<256x4xf32>
    %137 = tpu.matmul %134, %136, %cst_136 {dimension_numbers = #tpu.dot_dimension_numbers<[1], [0], [0], [1], [0, 0, 1, 1], [], []>} : vector<256x4xbf16>, vector<4x4xbf16>, vector<256x4xf32> -> vector<256x4xf32>
    %138 = arith.addf %131, %137 : vector<256x4xf32>
    %139 = vector.shape_cast %138 : vector<256x4xf32> to vector<16x16x4xf32>
    %140 = arith.addf %139, %5 : vector<16x16x4xf32>
    %c0_137 = arith.constant 0 : index
    %c0_138 = arith.constant 0 : index
    %c0_139 = arith.constant 0 : index
    %c0_140 = arith.constant 0 : index
    %141 = vector.load %arg4[%c0_137, %c0_138, %c0_139, %c0_140] : memref<1x16x16x4xf32, #tpu.memory_space<vmem>>, vector<1x16x16x4xf32>
    %142 = vector.shape_cast %141 : vector<1x16x16x4xf32> to vector<16x16x4xf32>
    %143 = vector.shape_cast %140 : vector<16x16x4xf32> to vector<1x16x16x4xf32>
    tpu.vector_store %arg4[%c0_137, %c0_138, %c0_139, %c0_140], %143 {strides = array<i32>} : memref<1x16x16x4xf32, #tpu.memory_space<vmem>>, vector<1x16x16x4xf32>,
    return
  }
  func.func @transform_0(%arg0: i32) -> (i32, i32, i32, i32) {
    %c0_i32 = arith.constant 0 : i32
    %c0_i32_0 = arith.constant 0 : i32
    %c0_i32_1 = arith.constant 0 : i32
    %c0_i32_2 = arith.constant 0 : i32
    return %arg0, %c0_i32, %c0_i32_0, %c0_i32_1 : i32, i32, i32, i32
  }
  func.func @transform_1(%arg0: i32) -> (i32, i32, i32) {
    %c0_i32 = arith.constant 0 : i32
    %c0_i32_0 = arith.constant 0 : i32
    %c0_i32_1 = arith.constant 0 : i32
    %c0_i32_2 = arith.constant 0 : i32
    return %c0_i32, %c0_i32_0, %c0_i32_1 : i32, i32, i32
  }
  func.func @transform_2(%arg0: i32) -> (i32, i32, i32) {
    %c0_i32 = arith.constant 0 : i32
    %c0_i32_0 = arith.constant 0 : i32
    %c0_i32_1 = arith.constant 0 : i32
    %c0_i32_2 = arith.constant 0 : i32
    return %c0_i32, %c0_i32_0, %c0_i32_1 : i32, i32, i32
  }
  func.func @transform_3(%arg0: i32) -> (i32, i32, i32, i32) {
    %c0_i32 = arith.constant 0 : i32
    %c0_i32_0 = arith.constant 0 : i32
    %c0_i32_1 = arith.constant 0 : i32
    %c0_i32_2 = arith.constant 0 : i32
    return %arg0, %c0_i32, %c0_i32_0, %c0_i32_1 : i32, i32, i32, i32
  }
}

</mosaic_0001>

<llo_original>
// kernel: residual_block_forward.1
$region0: #{residual_block_forward.1}
  #allocation0 [shape = 'u32[]', space=smem, size = 0x4, offset = 0x4, fixed_abs, tag = 'smem constant byte address 0x4 - core index']
  #allocation1 [shape = 'u32[144,128]{1,0:T(1,128)}', space=vmem, size = 0x12000, scoped, tag = 'internal scratch']
  #allocation2 [shape = 'f32[18,18,4]{2,1,0:T(8,128)}', space=vmem, size = 0x36000, scoped, tag = 'scratch operand']
  #allocation3 [shape = 'f32[18,18,4]{2,1,0:T(8,128)}', space=vmem, size = 0x36000, scoped, tag = 'scratch operand']
  %s0 = inlined_call_operand.vmem [shape: f32[2,16,16,4], index: 0, kind: input, shape index: {}]
  %s1 = inlined_call_operand.vmem [shape: bf16[9,4,4], index: 1, kind: input, shape index: {}]
  %s2 = inlined_call_operand.vmem [shape: bf16[9,4,4], index: 2, kind: input, shape index: {}]
  %s3 = inlined_call_operand.vmem [shape: f32[2,16,16,4], index: 3, kind: output, shape index: {}]
  %s4 = sld [smem:[#allocation0]]
  $region45: #{residual_block_forward.1} parent=0
    _
  %s6 = ssub.s32 1, %s4
  %s7 = scalar_select 0, %s6, %s4
  loop: start=0, step=1, limit=4
  $region2: #{residual_block_forward.1} parent=0 // loop_pre_header
    _
  $region3: #{residual_block_forward.1} parent=0 // loop_header
    %s9 = sphi 0, %s13
    %p10 = scmp.ge.s32.totalorder %s9, 4
    %s19 = sphi 0, %s21
    %s22 = sphi 0, %s19
    %s23 = sphi 0, %s22
    %s39 = sphi 0, %s23
    %s43 = sphi 0, %s43
    %s45 = sphi 0, %s43
    %s46 = sphi 0, %s45
    %s60 = sphi 0, %s46
    %s64 = sphi 0, %s64
    %s66 = sphi 0, %s64
    %s67 = sphi 0, %s66
    %s81 = sphi 0, %s67
    %s87 = sphi 0, %s89
    %s90 = sphi 0, %s87
    %s91 = sphi 0, %s90
    %s107 = sphi 0, %s91
  $region4: #{residual_block_forward.1} parent=0 // loop_header_branch
    %12 = sbr.rel (%p10) target = $region8
  $region5: #{residual_block_forward.1} parent=0 // loop_body
    %s14 = ssub.s32 %s9, 1
    %s15 = ssub.s32 %s9, 2
    %s16 = sadd.s32 %s9, 1
    %s17 = ssub.s32 %s9, %s16
    %p18 = scmp.eq.s32.totalorder %s17, 0
    %s20 = sadd.s32 %s19, 1
    %s21 = scalar_select %p18, %s19, %s20
    %p24 = pneg %p18
    %p25 = scmp.eq.s32.totalorder %s9, 1
    %p26 = por %p24, %p25
    %p27 = scmp.ne.s32.totalorder %s19, %s22
    %p28 = scmp.eq.s32.totalorder %s9, 0
    %p29 = por %p27, %p28
    %p30 = scmp.ne.s32.totalorder %s19, %s22
    %p31 = scmp.eq.s32.totalorder %s14, 1
    %p32 = por %p30, %p31
    %p33 = scmp.ne.s32.totalorder %s22, %s23
    %p34 = scmp.eq.s32.totalorder %s14, 0
    %p35 = por %p33, %p34
    %p36 = scmp.ne.s32.totalorder %s22, %s23
    %p37 = scmp.eq.s32.totalorder %s15, 1
    %p38 = por %p36, %p37
    %p40 = scmp.ne.s32.totalorder %s23, %s39
    %p41 = scmp.eq.s32.totalorder %s15, 0
    %p42 = por %p40, %p41
    %s44 = sadd.s32 %s43, 1
    %p47 = scmp.eq.s32.totalorder %s9, 1
    %p48 = scmp.ne.s32.totalorder %s43, %s45
    %p49 = scmp.eq.s32.totalorder %s9, 0
    %p50 = por %p48, %p49
    %p51 = scmp.ne.s32.totalorder %s43, %s45
    %p52 = scmp.eq.s32.totalorder %s14, 1
    %p53 = por %p51, %p52
    %p54 = scmp.ne.s32.totalorder %s45, %s46
    %p55 = scmp.eq.s32.totalorder %s14, 0
    %p56 = por %p54, %p55
    %p57 = scmp.ne.s32.totalorder %s45, %s46
    %p58 = scmp.eq.s32.totalorder %s15, 1
    %p59 = por %p57, %p58
    %p61 = scmp.ne.s32.totalorder %s46, %s60
    %p62 = scmp.eq.s32.totalorder %s15, 0
    %p63 = por %p61, %p62
    %s65 = sadd.s32 %s64, 1
    %p68 = scmp.eq.s32.totalorder %s9, 1
    %p69 = scmp.ne.s32.totalorder %s64, %s66
    %p70 = scmp.eq.s32.totalorder %s9, 0
    %p71 = por %p69, %p70
    %p72 = scmp.ne.s32.totalorder %s64, %s66
    %p73 = scmp.eq.s32.totalorder %s14, 1
    %p74 = por %p72, %p73
    %p75 = scmp.ne.s32.totalorder %s66, %s67
    %p76 = scmp.eq.s32.totalorder %s14, 0
    %p77 = por %p75, %p76
    %p78 = scmp.ne.s32.totalorder %s66, %s67
    %p79 = scmp.eq.s32.totalorder %s15, 1
    %p80 = por %p78, %p79
    %p82 = scmp.ne.s32.totalorder %s67, %s81
    %p83 = scmp.eq.s32.totalorder %s15, 0
    %p84 = por %p82, %p83
    %s85 = ssub.s32 %s9, %s16
    %p86 = scmp.eq.s32.totalorder %s85, 0
    %s88 = sadd.s32 %s87, 1
    %s89 = scalar_select %p86, %s87, %s88
    %p92 = pneg %p86
    %p93 = scmp.eq.s32.totalorder %s9, 1
    %p94 = por %p92, %p93
    %p95 = scmp.ne.s32.totalorder %s87, %s90
    %p96 = scmp.eq.s32.totalorder %s9, 0
    %p97 = por %p95, %p96
    %p98 = scmp.ne.s32.totalorder %s87, %s90
    %p99 = scmp.eq.s32.totalorder %s14, 1
    %p100 = por %p98, %p99
    %p101 = scmp.ne.s32.totalorder %s90, %s91
    %p102 = scmp.eq.s32.totalorder %s14, 0
    %p103 = por %p101, %p102
    %p104 = scmp.ne.s32.totalorder %s90, %s91
    %p105 = scmp.eq.s32.totalorder %s15, 1
    %p106 = por %p104, %p105
    %p108 = scmp.ne.s32.totalorder %s91, %s107
    %p109 = scmp.eq.s32.totalorder %s15, 0
    %p110 = por %p108, %p109
    %p111 = scmp.le.s32.totalorder 1, %s9
    %p112 = scmp.lt.s32.totalorder %s9, 3
    %p113 = pnand %p111, %p112
    %p114 = pneg %p113
    // Predicated region
    $region9: #{residual_block_forward.1} parent=5 // pred_check
      _
    $region10: #{residual_block_forward.1} parent=5 // pred_check_branch
      %116 = sbr.rel (%p113) target = $region12
    $region11: #{residual_block_forward.1} parent=5 // pred_region
      %s117 = ssub.s32 %s9, 1
      // Predicated region
      $region13: #{residual_block_forward.1} parent=11 // pred_check
        %p118 = pneg %p56
      $region14: #{residual_block_forward.1} parent=11 // pred_check_branch
        %120 = sbr.rel (%p118) target = $region16
      $region15: #{residual_block_forward.1} parent=11 // pred_region
        _
      $region16: #{residual_block_forward.1} parent=11 // pred_fallthru
        _
      // Predicated region
      $region17: #{residual_block_forward.1} parent=11 // pred_check
        %p121 = pneg %p77
      $region18: #{residual_block_forward.1} parent=11 // pred_check_branch
        %123 = sbr.rel (%p121) target = $region20
      $region19: #{residual_block_forward.1} parent=11 // pred_region
        _
      $region20: #{residual_block_forward.1} parent=11 // pred_fallthru
        _
    $region12: #{residual_block_forward.1} parent=5 // pred_fallthru
      _
    %p124 = scmp.lt.s32.totalorder %s9, 2
    // Predicated region
    $region21: #{residual_block_forward.1} parent=5 // pred_check
      %p125 = pneg %p124
    $region22: #{residual_block_forward.1} parent=5 // pred_check_branch
      %127 = sbr.rel (%p125) target = $region24
    $region23: #{residual_block_forward.1} parent=5 // pred_region
      // Predicated region
      $region25: #{residual_block_forward.1} parent=23 // pred_check
        %p128 = pneg %p29
      $region26: #{residual_block_forward.1} parent=23 // pred_check_branch
        %130 = sbr.rel (%p128) target = $region28
      $region27: #{residual_block_forward.1} parent=23 // pred_region
        %p131 = scmp.lt.s32.totalorder %s9, 1
        %s132 = scalar_select %p131, %s9, 1
        %s133 = smul.addr %s132, 32
        %s134 = smul.addr %s133, 8
        %s135 = scalar_lea.vmem %s0, %s134
      $region28: #{residual_block_forward.1} parent=23 // pred_fallthru
        _
    $region24: #{residual_block_forward.1} parent=5 // pred_fallthru
      _
    %p136 = scmp.le.s32.totalorder 1, %s9
    %p137 = scmp.lt.s32.totalorder %s9, 3
    %p138 = pnand %p136, %p137
    %p139 = pneg %p138
    // Predicated region
    $region29: #{residual_block_forward.1} parent=5 // pred_check
      _
    $region30: #{residual_block_forward.1} parent=5 // pred_check_branch
      %141 = sbr.rel (%p138) target = $region32
    $region31: #{residual_block_forward.1} parent=5 // pred_region
      %s142 = ssub.s32 %s9, 1
      %p143 = scmp.lt.s32.totalorder %s14, 1
      %s144 = scalar_select %p143, %s14, 1
      %s145 = smul.addr %s144, 32
      %s146 = smul.addr %s145, 8
      %s147 = scalar_lea.vmem %s0, %s146
      %p148 = pneg %p35
      %p149 = pneg %p32
      %p150 = pneg %p56
      %p151 = pneg %p53
      %p152 = pneg %p77
      %p153 = pneg %p74
      %p154 = pneg %p103
      %p155 = pneg %p100
      %p156 = scmp.lt.s32.totalorder %s14, 1
      %s157 = scalar_select %p156, %s14, 1
      %s158 = smul.addr %s157, 32
      %s159 = smul.addr %s158, 8
      %s160 = scalar_lea.vmem %s3, %s159
      %p161 = scmp.lt.s32.totalorder %s14, 1
      %s162 = scalar_select %p161, %s14, 1
      %s163 = smul.addr %s162, 32
      %s164 = smul.addr %s163, 8
      %s165 = scalar_lea.vmem %s0, %s164
      %p166 = scmp.lt.s32.totalorder %s14, 1
      %s167 = scalar_select %p166, %s14, 1
      %s168 = smul.addr %s167, 32
      %s169 = smul.addr %s168, 8
      %s170 = scalar_lea.vmem %s3, %s169
      %vm172 = vcmask 31744
      %173 = vst.msk [vmem:[#allocation2] sm:$0xff] %vm172, 0.0
      %174 = vst.msk [vmem:[#allocation2 + $0x8] sm:$0xff] %vm172, 0.0
      %vm175 = vcmask 25600
      %176 = vst.msk [vmem:[#allocation2 + $0x10] sm:$0x3] %vm175, 0.0
      %177 = vst.msk [vmem:[#allocation2 + $0x18] sm:$0xff] %vm172, 0.0
      %178 = vst.msk [vmem:[#allocation2 + $0x20] sm:$0xff] %vm172, 0.0
      %179 = vst.msk [vmem:[#allocation2 + $0x28] sm:$0x3] %vm175, 0.0
      %180 = vst.msk [vmem:[#allocation2 + $0x30] sm:$0xff] %vm172, 0.0
      %181 = vst.msk [vmem:[#allocation2 + $0x38] sm:$0xff] %vm172, 0.0
      %182 = vst.msk [vmem:[#allocation2 + $0x40] sm:$0x3] %vm175, 0.0
      %183 = vst.msk [vmem:[#allocation2 + $0x48] sm:$0xff] %vm172, 0.0
      %184 = vst.msk [vmem:[#allocation2 + $0x50] sm:$0xff] %vm172, 0.0
      %185 = vst.msk [vmem:[#allocation2 + $0x58] sm:$0x3] %vm175, 0.0
      %186 = vst.msk [vmem:[#allocation2 + $0x60] sm:$0xff] %vm172, 0.0
      %187 = vst.msk [vmem:[#allocation2 + $0x68] sm:$0xff] %vm172, 0.0
      %188 = vst.msk [vmem:[#allocation2 + $0x70] sm:$0x3] %vm175, 0.0
      %189 = vst.msk [vmem:[#allocation2 + $0x78] sm:$0xff] %vm172, 0.0
      %190 = vst.msk [vmem:[#allocation2 + $0x80] sm:$0xff] %vm172, 0.0
      %191 = vst.msk [vmem:[#allocation2 + $0x88] sm:$0x3] %vm175, 0.0
      %192 = vst.msk [vmem:[#allocation2 + $0x90] sm:$0xff] %vm172, 0.0
      %193 = vst.msk [vmem:[#allocation2 + $0x98] sm:$0xff] %vm172, 0.0
      %194 = vst.msk [vmem:[#allocation2 + $0xa0] sm:$0x3] %vm175, 0.0
      %195 = vst.msk [vmem:[#allocation2 + $0xa8] sm:$0xff] %vm172, 0.0
      %196 = vst.msk [vmem:[#allocation2 + $0xb0] sm:$0xff] %vm172, 0.0
      %197 = vst.msk [vmem:[#allocation2 + $0xb8] sm:$0x3] %vm175, 0.0
      %198 = vst.msk [vmem:[#allocation2 + $0xc0] sm:$0xff] %vm172, 0.0
      %199 = vst.msk [vmem:[#allocation2 + $0xc8] sm:$0xff] %vm172, 0.0
      %200 = vst.msk [vmem:[#allocation2 + $0xd0] sm:$0x3] %vm175, 0.0
      %201 = vst.msk [vmem:[#allocation2 + $0xd8] sm:$0xff] %vm172, 0.0
      %202 = vst.msk [vmem:[#allocation2 + $0xe0] sm:$0xff] %vm172, 0.0
      %203 = vst.msk [vmem:[#allocation2 + $0xe8] sm:$0x3] %vm175, 0.0
      %204 = vst.msk [vmem:[#allocation2 + $0xf0] sm:$0xff] %vm172, 0.0
      %205 = vst.msk [vmem:[#allocation2 + $0xf8] sm:$0xff] %vm172, 0.0
      %206 = vst.msk [vmem:[#allocation2 + $0x100] sm:$0x3] %vm175, 0.0
      %207 = vst.msk [vmem:[#allocation2 + $0x108] sm:$0xff] %vm172, 0.0
      %208 = vst.msk [vmem:[#allocation2 + $0x110] sm:$0xff] %vm172, 0.0
      %209 = vst.msk [vmem:[#allocation2 + $0x118] sm:$0x3] %vm175, 0.0
      %210 = vst.msk [vmem:[#allocation2 + $0x120] sm:$0xff] %vm172, 0.0
      %211 = vst.msk [vmem:[#allocation2 + $0x128] sm:$0xff] %vm172, 0.0
      %212 = vst.msk [vmem:[#allocation2 + $0x130] sm:$0x3] %vm175, 0.0
      %213 = vst.msk [vmem:[#allocation2 + $0x138] sm:$0xff] %vm172, 0.0
      %214 = vst.msk [vmem:[#allocation2 + $0x140] sm:$0xff] %vm172, 0.0
      %215 = vst.msk [vmem:[#allocation2 + $0x148] sm:$0x3] %vm175, 0.0
      %216 = vst.msk [vmem:[#allocation2 + $0x150] sm:$0xff] %vm172, 0.0
      %217 = vst.msk [vmem:[#allocation2 + $0x158] sm:$0xff] %vm172, 0.0
      %218 = vst.msk [vmem:[#allocation2 + $0x160] sm:$0x3] %vm175, 0.0
      %219 = vst.msk [vmem:[#allocation2 + $0x168] sm:$0xff] %vm172, 0.0
      %220 = vst.msk [vmem:[#allocation2 + $0x170] sm:$0xff] %vm172, 0.0
      %221 = vst.msk [vmem:[#allocation2 + $0x178] sm:$0x3] %vm175, 0.0
      %222 = vst.msk [vmem:[#allocation2 + $0x180] sm:$0xff] %vm172, 0.0
      %223 = vst.msk [vmem:[#allocation2 + $0x188] sm:$0xff] %vm172, 0.0
      %224 = vst.msk [vmem:[#allocation2 + $0x190] sm:$0x3] %vm175, 0.0
      %225 = vst.msk [vmem:[#allocation2 + $0x198] sm:$0xff] %vm172, 0.0
      %226 = vst.msk [vmem:[#allocation2 + $0x1a0] sm:$0xff] %vm172, 0.0
      %227 = vst.msk [vmem:[#allocation2 + $0x1a8] sm:$0x3] %vm175, 0.0
      %228 = vst.msk [vmem:[#allocation3] sm:$0xff] %vm172, 0.0
      %229 = vst.msk [vmem:[#allocation3 + $0x8] sm:$0xff] %vm172, 0.0
      %230 = vst.msk [vmem:[#allocation3 + $0x10] sm:$0x3] %vm175, 0.0
      %231 = vst.msk [vmem:[#allocation3 + $0x18] sm:$0xff] %vm172, 0.0
      %232 = vst.msk [vmem:[#allocation3 + $0x20] sm:$0xff] %vm172, 0.0
      %233 = vst.msk [vmem:[#allocation3 + $0x28] sm:$0x3] %vm175, 0.0
      %234 = vst.msk [vmem:[#allocation3 + $0x30] sm:$0xff] %vm172, 0.0
      %235 = vst.msk [vmem:[#allocation3 + $0x38] sm:$0xff] %vm172, 0.0
      %236 = vst.msk [vmem:[#allocation3 + $0x40] sm:$0x3] %vm175, 0.0
      %237 = vst.msk [vmem:[#allocation3 + $0x48] sm:$0xff] %vm172, 0.0
      %238 = vst.msk [vmem:[#allocation3 + $0x50] sm:$0xff] %vm172, 0.0
      %239 = vst.msk [vmem:[#allocation3 + $0x58] sm:$0x3] %vm175, 0.0
      %240 = vst.msk [vmem:[#allocation3 + $0x60] sm:$0xff] %vm172, 0.0
      %241 = vst.msk [vmem:[#allocation3 + $0x68] sm:$0xff] %vm172, 0.0
      %242 = vst.msk [vmem:[#allocation3 + $0x70] sm:$0x3] %vm175, 0.0
      %243 = vst.msk [vmem:[#allocation3 + $0x78] sm:$0xff] %vm172, 0.0
      %244 = vst.msk [vmem:[#allocation3 + $0x80] sm:$0xff] %vm172, 0.0
      %245 = vst.msk [vmem:[#allocation3 + $0x88] sm:$0x3] %vm175, 0.0
      %246 = vst.msk [vmem:[#allocation3 + $0x90] sm:$0xff] %vm172, 0.0
      %247 = vst.msk [vmem:[#allocation3 + $0x98] sm:$0xff] %vm172, 0.0
      %248 = vst.msk [vmem:[#allocation3 + $0xa0] sm:$0x3] %vm175, 0.0
      %249 = vst.msk [vmem:[#allocation3 + $0xa8] sm:$0xff] %vm172, 0.0
      %250 = vst.msk [vmem:[#allocation3 + $0xb0] sm:$0xff] %vm172, 0.0
      %251 = vst.msk [vmem:[#allocation3 + $0xb8] sm:$0x3] %vm175, 0.0
      %252 = vst.msk [vmem:[#allocation3 + $0xc0] sm:$0xff] %vm172, 0.0
      %253 = vst.msk [vmem:[#allocation3 + $0xc8] sm:$0xff] %vm172, 0.0
      %254 = vst.msk [vmem:[#allocation3 + $0xd0] sm:$0x3] %vm175, 0.0
      %255 = vst.msk [vmem:[#allocation3 + $0xd8] sm:$0xff] %vm172, 0.0
      %256 = vst.msk [vmem:[#allocation3 + $0xe0] sm:$0xff] %vm172, 0.0
      %257 = vst.msk [vmem:[#allocation3 + $0xe8] sm:$0x3] %vm175, 0.0
      %258 = vst.msk [vmem:[#allocation3 + $0xf0] sm:$0xff] %vm172, 0.0
      %259 = vst.msk [vmem:[#allocation3 + $0xf8] sm:$0xff] %vm172, 0.0
      %260 = vst.msk [vmem:[#allocation3 + $0x100] sm:$0x3] %vm175, 0.0
      %261 = vst.msk [vmem:[#allocation3 + $0x108] sm:$0xff] %vm172, 0.0
      %262 = vst.msk [vmem:[#allocation3 + $0x110] sm:$0xff] %vm172, 0.0
      %263 = vst.msk [vmem:[#allocation3 + $0x118] sm:$0x3] %vm175, 0.0
      %264 = vst.msk [vmem:[#allocation3 + $0x120] sm:$0xff] %vm172, 0.0
      %265 = vst.msk [vmem:[#allocation3 + $0x128] sm:$0xff] %vm172, 0.0
      %266 = vst.msk [vmem:[#allocation3 + $0x130] sm:$0x3] %vm175, 0.0
      %267 = vst.msk [vmem:[#allocation3 + $0x138] sm:$0xff] %vm172, 0.0
      %268 = vst.msk [vmem:[#allocation3 + $0x140] sm:$0xff] %vm172, 0.0
      %269 = vst.msk [vmem:[#allocation3 + $0x148] sm:$0x3] %vm175, 0.0
      %270 = vst.msk [vmem:[#allocation3 + $0x150] sm:$0xff] %vm172, 0.0
      %271 = vst.msk [vmem:[#allocation3 + $0x158] sm:$0xff] %vm172, 0.0
      %272 = vst.msk [vmem:[#allocation3 + $0x160] sm:$0x3] %vm175, 0.0
      %273 = vst.msk [vmem:[#allocation3 + $0x168] sm:$0xff] %vm172, 0.0
      %274 = vst.msk [vmem:[#allocation3 + $0x170] sm:$0xff] %vm172, 0.0
      %275 = vst.msk [vmem:[#allocation3 + $0x178] sm:$0x3] %vm175, 0.0
      %276 = vst.msk [vmem:[#allocation3 + $0x180] sm:$0xff] %vm172, 0.0
      %277 = vst.msk [vmem:[#allocation3 + $0x188] sm:$0xff] %vm172, 0.0
      %278 = vst.msk [vmem:[#allocation3 + $0x190] sm:$0x3] %vm175, 0.0
      %279 = vst.msk [vmem:[#allocation3 + $0x198] sm:$0xff] %vm172, 0.0
      %280 = vst.msk [vmem:[#allocation3 + $0x1a0] sm:$0xff] %vm172, 0.0
      %281 = vst.msk [vmem:[#allocation3 + $0x1a8] sm:$0x3] %vm175, 0.0
      %v282 = vld [vmem:[%s165] sm:$0xff]
      %v283 = vld [vmem:[%s165 + $0x8] sm:$0xff]
      %v284 = vld [vmem:[%s165 + $0x10] sm:$0xff]
      %v285 = vld [vmem:[%s165 + $0x18] sm:$0xff]
      %v286 = vld [vmem:[%s165 + $0x20] sm:$0xff]
      %v287 = vld [vmem:[%s165 + $0x28] sm:$0xff]
      %v288 = vld [vmem:[%s165 + $0x30] sm:$0xff]
      %v289 = vld [vmem:[%s165 + $0x38] sm:$0xff]
      %v290 = vld [vmem:[%s165 + $0x40] sm:$0xff]
      %v291 = vld [vmem:[%s165 + $0x48] sm:$0xff]
      %v292 = vld [vmem:[%s165 + $0x50] sm:$0xff]
      %v293 = vld [vmem:[%s165 + $0x58] sm:$0xff]
      %v294 = vld [vmem:[%s165 + $0x60] sm:$0xff]
      %v295 = vld [vmem:[%s165 + $0x68] sm:$0xff]
      %v296 = vld [vmem:[%s165 + $0x70] sm:$0xff]
      %v297 = vld [vmem:[%s165 + $0x78] sm:$0xff]
      %v298 = vld [vmem:[%s165 + $0x80] sm:$0xff]
      %v299 = vld [vmem:[%s165 + $0x88] sm:$0xff]
      %v300 = vld [vmem:[%s165 + $0x90] sm:$0xff]
      %v301 = vld [vmem:[%s165 + $0x98] sm:$0xff]
      %v302 = vld [vmem:[%s165 + $0xa0] sm:$0xff]
      %v303 = vld [vmem:[%s165 + $0xa8] sm:$0xff]
      %v304 = vld [vmem:[%s165 + $0xb0] sm:$0xff]
      %v305 = vld [vmem:[%s165 + $0xb8] sm:$0xff]
      %v306 = vld [vmem:[%s165 + $0xc0] sm:$0xff]
      %v307 = vld [vmem:[%s165 + $0xc8] sm:$0xff]
      %v308 = vld [vmem:[%s165 + $0xd0] sm:$0xff]
      %v309 = vld [vmem:[%s165 + $0xd8] sm:$0xff]
      %v310 = vld [vmem:[%s165 + $0xe0] sm:$0xff]
      %v311 = vld [vmem:[%s165 + $0xe8] sm:$0xff]
      %v312 = vld [vmem:[%s165 + $0xf0] sm:$0xff]
      %v313 = vld [vmem:[%s165 + $0xf8] sm:$0xff]
      %s314 = scalar_lea.vmem [#allocation2], 24
      %315 = vst.msk [vmem:[%s314 + $0x1] sm:$0xff] %vm172, %v282
      %316 = vst.msk [vmem:[%s314 + $0x9] sm:$0xff] %vm172, %v283
      %317 = vst.msk [vmem:[%s314 + $0x19] sm:$0xff] %vm172, %v284
      %318 = vst.msk [vmem:[%s314 + $0x21] sm:$0xff] %vm172, %v285
      %319 = vst.msk [vmem:[%s314 + $0x31] sm:$0xff] %vm172, %v286
      %320 = vst.msk [vmem:[%s314 + $0x39] sm:$0xff] %vm172, %v287
      %321 = vst.msk [vmem:[%s314 + $0x49] sm:$0xff] %vm172, %v288
      %322 = vst.msk [vmem:[%s314 + $0x51] sm:$0xff] %vm172, %v289
      %323 = vst.msk [vmem:[%s314 + $0x61] sm:$0xff] %vm172, %v290
      %324 = vst.msk [vmem:[%s314 + $0x69] sm:$0xff] %vm172, %v291
      %325 = vst.msk [vmem:[%s314 + $0x79] sm:$0xff] %vm172, %v292
      %326 = vst.msk [vmem:[%s314 + $0x81] sm:$0xff] %vm172, %v293
      %327 = vst.msk [vmem:[%s314 + $0x91] sm:$0xff] %vm172, %v294
      %328 = vst.msk [vmem:[%s314 + $0x99] sm:$0xff] %vm172, %v295
      %329 = vst.msk [vmem:[%s314 + $0xa9] sm:$0xff] %vm172, %v296
      %330 = vst.msk [vmem:[%s314 + $0xb1] sm:$0xff] %vm172, %v297
      %331 = vst.msk [vmem:[%s314 + $0xc1] sm:$0xff] %vm172, %v298
      %332 = vst.msk [vmem:[%s314 + $0xc9] sm:$0xff] %vm172, %v299
      %333 = vst.msk [vmem:[%s314 + $0xd9] sm:$0xff] %vm172, %v300
      %334 = vst.msk [vmem:[%s314 + $0xe1] sm:$0xff] %vm172, %v301
      %335 = vst.msk [vmem:[%s314 + $0xf1] sm:$0xff] %vm172, %v302
      %336 = vst.msk [vmem:[%s314 + $0xf9] sm:$0xff] %vm172, %v303
      %337 = vst.msk [vmem:[%s314 + $0x109] sm:$0xff] %vm172, %v304
      %338 = vst.msk [vmem:[%s314 + $0x111] sm:$0xff] %vm172, %v305
      %339 = vst.msk [vmem:[%s314 + $0x121] sm:$0xff] %vm172, %v306
      %340 = vst.msk [vmem:[%s314 + $0x129] sm:$0xff] %vm172, %v307
      %341 = vst.msk [vmem:[%s314 + $0x139] sm:$0xff] %vm172, %v308
      %342 = vst.msk [vmem:[%s314 + $0x141] sm:$0xff] %vm172, %v309
      %343 = vst.msk [vmem:[%s314 + $0x151] sm:$0xff] %vm172, %v310
      %344 = vst.msk [vmem:[%s314 + $0x159] sm:$0xff] %vm172, %v311
      %345 = vst.msk [vmem:[%s314 + $0x169] sm:$0xff] %vm172, %v312
      %346 = vst.msk [vmem:[%s314 + $0x171] sm:$0xff] %vm172, %v313
      %v347 = vld [vmem:[#allocation2] sm:$0xff]
      %v348 = vld [vmem:[#allocation2 + $0x8] sm:$0xff]
      %v349 = vld [vmem:[#allocation2 + $0x18] sm:$0xff]
      %v350 = vld [vmem:[#allocation2 + $0x20] sm:$0xff]
      %v351 = vld [vmem:[#allocation2 + $0x30] sm:$0xff]
      %v352 = vld [vmem:[#allocation2 + $0x38] sm:$0xff]
      %v353 = vld [vmem:[#allocation2 + $0x48] sm:$0xff]
      %v354 = vld [vmem:[#allocation2 + $0x50] sm:$0xff]
      %v355 = vld [vmem:[#allocation2 + $0x60] sm:$0xff]
      %v356 = vld [vmem:[#allocation2 + $0x68] sm:$0xff]
      %v357 = vld [vmem:[#allocation2 + $0x78] sm:$0xff]
      %v358 = vld [vmem:[#allocation2 + $0x80] sm:$0xff]
      %v359 = vld [vmem:[#allocation2 + $0x90] sm:$0xff]
      %v360 = vld [vmem:[#allocation2 + $0x98] sm:$0xff]
      %v361 = vld [vmem:[#allocation2 + $0xa8] sm:$0xff]
      %v362 = vld [vmem:[#allocation2 + $0xb0] sm:$0xff]
      %v363 = vld [vmem:[#allocation2 + $0xc0] sm:$0xff]
      %v364 = vld [vmem:[#allocation2 + $0xc8] sm:$0xff]
      %v365 = vld [vmem:[#allocation2 + $0xd8] sm:$0xff]
      %v366 = vld [vmem:[#allocation2 + $0xe0] sm:$0xff]
      %v367 = vld [vmem:[#allocation2 + $0xf0] sm:$0xff]
      %v368 = vld [vmem:[#allocation2 + $0xf8] sm:$0xff]
      %v369 = vld [vmem:[#allocation2 + $0x108] sm:$0xff]
      %v370 = vld [vmem:[#allocation2 + $0x110] sm:$0xff]
      %v371 = vld [vmem:[#allocation2 + $0x120] sm:$0xff]
      %v372 = vld [vmem:[#allocation2 + $0x128] sm:$0xff]
      %v373 = vld [vmem:[#allocation2 + $0x138] sm:$0xff]
      %v374 = vld [vmem:[#allocation2 + $0x140] sm:$0xff]
      %v375 = vld [vmem:[#allocation2 + $0x150] sm:$0xff]
      %v376 = vld [vmem:[#allocation2 + $0x158] sm:$0xff]
      %v377 = vld [vmem:[#allocation2 + $0x168] sm:$0xff]
      %v378 = vld [vmem:[#allocation2 + $0x170] sm:$0xff]
      %v379 = vpack.c.bf16 %v348, %v347
      %v380 = vpack.c.bf16 %v350, %v349
      %v381 = vpack.c.bf16 %v352, %v351
      %v382 = vpack.c.bf16 %v354, %v353
      %v383 = vpack.c.bf16 %v356, %v355
      %v384 = vpack.c.bf16 %v358, %v357
      %v385 = vpack.c.bf16 %v360, %v359
      %v386 = vpack.c.bf16 %v362, %v361
      %v387 = vpack.c.bf16 %v364, %v363
      %v388 = vpack.c.bf16 %v366, %v365
      %v389 = vpack.c.bf16 %v368, %v367
      %v390 = vpack.c.bf16 %v370, %v369
      %v391 = vpack.c.bf16 %v372, %v371
      %v392 = vpack.c.bf16 %v374, %v373
      %v393 = vpack.c.bf16 %v376, %v375
      %v394 = vpack.c.bf16 %v378, %v377
      %v395 = vld [vmem:[%s1] sm:$0x3]
      %v396 = vld [vmem:[#allocation2 + $0x1] sm:$0xff]
      %v397 = vld [vmem:[#allocation2 + $0x9] sm:$0xff]
      %v398 = vld [vmem:[#allocation2 + $0x19] sm:$0xff]
      %v399 = vld [vmem:[#allocation2 + $0x21] sm:$0xff]
      %v400 = vld [vmem:[#allocation2 + $0x31] sm:$0xff]
      %v401 = vld [vmem:[#allocation2 + $0x39] sm:$0xff]
      %v402 = vld [vmem:[#allocation2 + $0x49] sm:$0xff]
      %v403 = vld [vmem:[#allocation2 + $0x51] sm:$0xff]
      %v404 = vld [vmem:[#allocation2 + $0x61] sm:$0xff]
      %v405 = vld [vmem:[#allocation2 + $0x69] sm:$0xff]
      %v406 = vld [vmem:[#allocation2 + $0x79] sm:$0xff]
      %v407 = vld [vmem:[#allocation2 + $0x81] sm:$0xff]
      %v408 = vld [vmem:[#allocation2 + $0x91] sm:$0xff]
      %v409 = vld [vmem:[#allocation2 + $0x99] sm:$0xff]
      %v410 = vld [vmem:[#allocation2 + $0xa9] sm:$0xff]
      %v411 = vld [vmem:[#allocation2 + $0xb1] sm:$0xff]
      %v412 = vld [vmem:[#allocation2 + $0xc1] sm:$0xff]
      %v413 = vld [vmem:[#allocation2 + $0xc9] sm:$0xff]
      %v414 = vld [vmem:[#allocation2 + $0xd9] sm:$0xff]
      %v415 = vld [vmem:[#allocation2 + $0xe1] sm:$0xff]
      %v416 = vld [vmem:[#allocation2 + $0xf1] sm:$0xff]
      %v417 = vld [vmem:[#allocation2 + $0xf9] sm:$0xff]
      %v418 = vld [vmem:[#allocation2 + $0x109] sm:$0xff]
      %v419 = vld [vmem:[#allocation2 + $0x111] sm:$0xff]
      %v420 = vld [vmem:[#allocation2 + $0x121] sm:$0xff]
      %v421 = vld [vmem:[#allocation2 + $0x129] sm:$0xff]
      %v422 = vld [vmem:[#allocation2 + $0x139] sm:$0xff]
      %v423 = vld [vmem:[#allocation2 + $0x141] sm:$0xff]
      %v424 = vld [vmem:[#allocation2 + $0x151] sm:$0xff]
      %v425 = vld [vmem:[#allocation2 + $0x159] sm:$0xff]
      %v426 = vld [vmem:[#allocation2 + $0x169] sm:$0xff]
      %v427 = vld [vmem:[#allocation2 + $0x171] sm:$0xff]
      %v428 = vpack.c.bf16 %v397, %v396
      %v429 = vpack.c.bf16 %v399, %v398
      %v430 = vpack.c.bf16 %v401, %v400
      %v431 = vpack.c.bf16 %v403, %v402
      %v432 = vpack.c.bf16 %v405, %v404
      %v433 = vpack.c.bf16 %v407, %v406
      %v434 = vpack.c.bf16 %v409, %v408
      %v435 = vpack.c.bf16 %v411, %v410
      %v436 = vpack.c.bf16 %v413, %v412
      %v437 = vpack.c.bf16 %v415, %v414
      %v438 = vpack.c.bf16 %v417, %v416
      %v439 = vpack.c.bf16 %v419, %v418
      %v440 = vpack.c.bf16 %v421, %v420
      %v441 = vpack.c.bf16 %v423, %v422
      %v442 = vpack.c.bf16 %v425, %v424
      %v443 = vpack.c.bf16 %v427, %v426
      %s444 = scalar_lea.vmem %s1, 2
      %v445 = vld [vmem:[%s444] sm:$0x3]
      %v447 = vsel %vm172, %v428, 0
      %v450 = vsel %vm172, %v429, 0
      %v453 = vsel %vm172, %v430, 0
      %v456 = vsel %vm172, %v431, 0
      %v459 = vsel %vm172, %v432, 0
      %v462 = vsel %vm172, %v433, 0
      %v465 = vsel %vm172, %v434, 0
      %v468 = vsel %vm172, %v435, 0
      %v471 = vsel %vm172, %v436, 0
      %v474 = vsel %vm172, %v437, 0
      %v477 = vsel %vm172, %v438, 0
      %v480 = vsel %vm172, %v439, 0
      %v483 = vsel %vm172, %v440, 0
      %v486 = vsel %vm172, %v441, 0
      %v489 = vsel %vm172, %v442, 0
      %v492 = vsel %vm172, %v443, 0
      %vm494 = vcmask 1041408
      %v496 = vsel %vm494, %v445, 0
      %498 = vmatprep.subr.bf16.mxu0 0
      %499 = vmatpush1.bf16.msra.mxu0 %v496
      %500 = vmatprep.subr.bf16.mxu0 0
      %501 = vmatpush1.bf16.msra.mxu0 0
      %502 = vmatprep.subr.bf16.mxu0 0
      %503 = vmatpush1.bf16.msra.mxu0 0
      %504 = vmatprep.subr.bf16.mxu0 0
      %505 = vmatpush1.bf16.msra.mxu0 0
      %506 = vmatprep.subr.bf16.mxu0 0
      %507 = vmatpush1.bf16.msra.mxu0 0
      %508 = vmatprep.subr.bf16.mxu0 0
      %509 = vmatpush1.bf16.msra.mxu0 0
      %510 = vmatprep.subr.bf16.mxu0 0
      %511 = vmatpush1.bf16.msra.mxu0 0
      %512 = vmatprep.subr.bf16.mxu0 0
      %513 = vmatpush1.bf16.msra.mxu0 0
      %514 = vmatprep.subr.bf16.mxu0 0
      %515 = vmatpush1.bf16.msra.mxu0 0
      %516 = vmatprep.subr.bf16.mxu0 0
      %517 = vmatpush1.bf16.msra.mxu0 0
      %518 = vmatprep.subr.bf16.mxu0 0
      %519 = vmatpush1.bf16.msra.mxu0 0
      %520 = vmatprep.subr.bf16.mxu0 0
      %521 = vmatpush1.bf16.msra.mxu0 0
      %522 = vmatprep.subr.bf16.mxu0 0
      %523 = vmatpush1.bf16.msra.mxu0 0
      %524 = vmatprep.subr.bf16.mxu0 0
      %525 = vmatpush1.bf16.msra.mxu0 0
      %526 = vmatprep.subr.bf16.mxu0 0
      %527 = vmatpush1.bf16.msra.mxu0 0
      %528 = vmatprep.subr.bf16.mxu0 0
      %529 = vmatpush1.bf16.msra.mxu0 0
      %530 = vmatprep.mubr.bf16.mxu0 0
      %531 = vmatmul.mubr.bf16.gmra.mrb[0].mxu0 %v447
      %v532 = vpop.f32.mrb[0].mxu0
      %v533 = vadd.f32 0.0, %v532
      %v534 = vpop.f32.mrb[0].mxu0
      %v535 = vpop.f32.mrb[0].mxu0
      %v536 = vadd.f32 0.0, %v535
      %v537 = vpop.f32.mrb[0].mxu0
      %538 = vmatprep.mubr.bf16.mxu0 0
      %539 = vmatmul.mubr.bf16.gmra.mrb[0].mxu0 %v450
      %v540 = vpop.f32.mrb[0].mxu0
      %v541 = vadd.f32 0.0, %v540
      %v542 = vpop.f32.mrb[0].mxu0
      %v543 = vpop.f32.mrb[0].mxu0
      %v544 = vadd.f32 0.0, %v543
      %v545 = vpop.f32.mrb[0].mxu0
      %546 = vmatprep.mubr.bf16.mxu0 0
      %547 = vmatmul.mubr.bf16.gmra.mrb[0].mxu0 %v453
      %v548 = vpop.f32.mrb[0].mxu0
      %v549 = vadd.f32 0.0, %v548
      %v550 = vpop.f32.mrb[0].mxu0
      %v551 = vpop.f32.mrb[0].mxu0
      %v552 = vadd.f32 0.0, %v551
      %v553 = vpop.f32.mrb[0].mxu0
      %554 = vmatprep.mubr.bf16.mxu0 0
      %555 = vmatmul.mubr.bf16.gmra.mrb[0].mxu0 %v456
      %v556 = vpop.f32.mrb[0].mxu0
      %v557 = vadd.f32 0.0, %v556
      %v558 = vpop.f32.mrb[0].mxu0
      %v559 = vpop.f32.mrb[0].mxu0
      %v560 = vadd.f32 0.0, %v559
      %v561 = vpop.f32.mrb[0].mxu0
      %562 = vmatprep.mubr.bf16.mxu0 0
      %563 = vmatmul.mubr.bf16.gmra.mrb[0].mxu0 %v459
      %v564 = vpop.f32.mrb[0].mxu0
      %v565 = vadd.f32 0.0, %v564
      %v566 = vpop.f32.mrb[0].mxu0
      %v567 = vpop.f32.mrb[0].mxu0
      %v568 = vadd.f32 0.0, %v567
      %v569 = vpop.f32.mrb[0].mxu0
      %570 = vmatprep.mubr.bf16.mxu0 0
      %571 = vmatmul.mubr.bf16.gmra.mrb[0].mxu0 %v462
      %v572 = vpop.f32.mrb[0].mxu0
      %v573 = vadd.f32 0.0, %v572
      %v574 = vpop.f32.mrb[0].mxu0
      %v575 = vpop.f32.mrb[0].mxu0
      %v576 = vadd.f32 0.0, %v575
      %v577 = vpop.f32.mrb[0].mxu0
      %578 = vmatprep.mubr.bf16.mxu0 0
      %579 = vmatmul.mubr.bf16.gmra.mrb[0].mxu0 %v465
      %v580 = vpop.f32.mrb[0].mxu0
      %v581 = vadd.f32 0.0, %v580
      %v582 = vpop.f32.mrb[0].mxu0
      %v583 = vpop.f32.mrb[0].mxu0
      %v584 = vadd.f32 0.0, %v583
      %v585 = vpop.f32.mrb[0].mxu0
      %586 = vmatprep.mubr.bf16.mxu0 0
      %587 = vmatmul.mubr.bf16.gmra.mrb[0].mxu0 %v468
      %v588 = vpop.f32.mrb[0].mxu0
      %v589 = vadd.f32 0.0, %v588
      %v590 = vpop.f32.mrb[0].mxu0
      %v591 = vpop.f32.mrb[0].mxu0
      %v592 = vadd.f32 0.0, %v591
      %v593 = vpop.f32.mrb[0].mxu0
      %594 = vmatprep.mubr.bf16.mxu0 0
      %595 = vmatmul.mubr.bf16.gmra.mrb[0].mxu0 %v471
      %v596 = vpop.f32.mrb[0].mxu0
      %v597 = vadd.f32 0.0, %v596
      %v598 = vpop.f32.mrb[0].mxu0
      %v599 = vpop.f32.mrb[0].mxu0
      %v600 = vadd.f32 0.0, %v599
      %v601 = vpop.f32.mrb[0].mxu0
      %602 = vmatprep.mubr.bf16.mxu0 0
      %603 = vmatmul.mubr.bf16.gmra.mrb[0].mxu0 %v474
      %v604 = vpop.f32.mrb[0].mxu0
      %v605 = vadd.f32 0.0, %v604
      %v606 = vpop.f32.mrb[0].mxu0
      %v607 = vpop.f32.mrb[0].mxu0
      %v608 = vadd.f32 0.0, %v607
      %v609 = vpop.f32.mrb[0].mxu0
      %610 = vmatprep.mubr.bf16.mxu0 0
      %611 = vmatmul.mubr.bf16.gmra.mrb[0].mxu0 %v477
      %v612 = vpop.f32.mrb[0].mxu0
      %v613 = vadd.f32 0.0, %v612
      %v614 = vpop.f32.mrb[0].mxu0
      %v615 = vpop.f32.mrb[0].mxu0
      %v616 = vadd.f32 0.0, %v615
      %v617 = vpop.f32.mrb[0].mxu0
      %618 = vmatprep.mubr.bf16.mxu0 0
      %619 = vmatmul.mubr.bf16.gmra.mrb[0].mxu0 %v480
      %v620 = vpop.f32.mrb[0].mxu0
      %v621 = vadd.f32 0.0, %v620
      %v622 = vpop.f32.mrb[0].mxu0
      %v623 = vpop.f32.mrb[0].mxu0
      %v624 = vadd.f32 0.0, %v623
      %v625 = vpop.f32.mrb[0].mxu0
      %626 = vmatprep.mubr.bf16.mxu0 0
      %627 = vmatmul.mubr.bf16.gmra.mrb[0].mxu0 %v483
      %v628 = vpop.f32.mrb[0].mxu0
      %v629 = vadd.f32 0.0, %v628
      %v630 = vpop.f32.mrb[0].mxu0
      %v631 = vpop.f32.mrb[0].mxu0
      %v632 = vadd.f32 0.0, %v631
      %v633 = vpop.f32.mrb[0].mxu0
      %634 = vmatprep.mubr.bf16.mxu0 0
      %635 = vmatmul.mubr.bf16.gmra.mrb[0].mxu0 %v486
      %v636 = vpop.f32.mrb[0].mxu0
      %v637 = vadd.f32 0.0, %v636
      %v638 = vpop.f32.mrb[0].mxu0
      %v639 = vpop.f32.mrb[0].mxu0
      %v640 = vadd.f32 0.0, %v639
      %v641 = vpop.f32.mrb[0].mxu0
      %642 = vmatprep.mubr.bf16.mxu0 0
      %643 = vmatmul.mubr.bf16.gmra.mrb[0].mxu0 %v489
      %v644 = vpop.f32.mrb[0].mxu0
      %v645 = vadd.f32 0.0, %v644
      %v646 = vpop.f32.mrb[0].mxu0
      %v647 = vpop.f32.mrb[0].mxu0
      %v648 = vadd.f32 0.0, %v647
      %v649 = vpop.f32.mrb[0].mxu0
      %650 = vmatprep.mubr.bf16.mxu0 0
      %651 = vmatmul.mubr.bf16.gmra.mrb[0].mxu0 %v492
      %v652 = vpop.f32.mrb[0].mxu0
      %v653 = vadd.f32 0.0, %v652
      %v654 = vpop.f32.mrb[0].mxu0
      %v655 = vpop.f32.mrb[0].mxu0
      %v656 = vadd.f32 0.0, %v655
      %v657 = vpop.f32.mrb[0].mxu0
      %658 = vdwg.mxu0
      %v660 = vsel %vm172, %v379, 0
      %v663 = vsel %vm172, %v380, 0
      %v666 = vsel %vm172, %v381, 0
      %v669 = vsel %vm172, %v382, 0
      %v672 = vsel %vm172, %v383, 0
      %v675 = vsel %vm172, %v384, 0
      %v678 = vsel %vm172, %v385, 0
      %v681 = vsel %vm172, %v386, 0
      %v684 = vsel %vm172, %v387, 0
      %v687 = vsel %vm172, %v388, 0
      %v690 = vsel %vm172, %v389, 0
      %v693 = vsel %vm172, %v390, 0
      %v696 = vsel %vm172, %v391, 0
      %v699 = vsel %vm172, %v392, 0
      %v702 = vsel %vm172, %v393, 0
      %v705 = vsel %vm172, %v394, 0
      %v708 = vsel %vm494, %v395, 0
      %710 = vmatprep.subr.bf16.mxu0 0
      %711 = vmatpush1.bf16.msra.mxu0 %v708
      %712 = vmatprep.subr.bf16.mxu0 0
      %713 = vmatpush1.bf16.msra.mxu0 0
      %714 = vmatprep.subr.bf16.mxu0 0
      %715 = vmatpush1.bf16.msra.mxu0 0
      %716 = vmatprep.subr.bf16.mxu0 0
      %717 = vmatpush1.bf16.msra.mxu0 0
      %718 = vmatprep.subr.bf16.mxu0 0
      %719 = vmatpush1.bf16.msra.mxu0 0
      %720 = vmatprep.subr.bf16.mxu0 0
      %721 = vmatpush1.bf16.msra.mxu0 0
      %722 = vmatprep.subr.bf16.mxu0 0
      %723 = vmatpush1.bf16.msra.mxu0 0
      %724 = vmatprep.subr.bf16.mxu0 0
      %725 = vmatpush1.bf16.msra.mxu0 0
      %726 = vmatprep.subr.bf16.mxu0 0
      %727 = vmatpush1.bf16.msra.mxu0 0
      %728 = vmatprep.subr.bf16.mxu0 0
      %729 = vmatpush1.bf16.msra.mxu0 0
      %730 = vmatprep.subr.bf16.mxu0 0
      %731 = vmatpush1.bf16.msra.mxu0 0
      %732 = vmatprep.subr.bf16.mxu0 0
      %733 = vmatpush1.bf16.msra.mxu0 0
      %734 = vmatprep.subr.bf16.mxu0 0
      %735 = vmatpush1.bf16.msra.mxu0 0
      %736 = vmatprep.subr.bf16.mxu0 0
      %737 = vmatpush1.bf16.msra.mxu0 0
      %738 = vmatprep.subr.bf16.mxu0 0
      %739 = vmatpush1.bf16.msra.mxu0 0
      %740 = vmatprep.subr.bf16.mxu0 0
      %741 = vmatpush1.bf16.msra.mxu0 0
      %742 = vmatprep.mubr.bf16.mxu0 0
      %743 = vmatmul.mubr.bf16.gmra.mrb[0].mxu0 %v660
      %v744 = vpop.f32.mrb[0].mxu0
      %v745 = vadd.f32 %v533, %v744
      %v746 = vpop.f32.mrb[0].mxu0
      %v747 = vpop.f32.mrb[0].mxu0
      %v748 = vadd.f32 %v536, %v747
      %v749 = vpop.f32.mrb[0].mxu0
      %750 = vmatprep.mubr.bf16.mxu0 0
      %751 = vmatmul.mubr.bf16.gmra.mrb[0].mxu0 %v663
      %v752 = vpop.f32.mrb[0].mxu0
      %v753 = vadd.f32 %v541, %v752
      %v754 = vpop.f32.mrb[0].mxu0
      %v755 = vpop.f32.mrb[0].mxu0
      %v756 = vadd.f32 %v544, %v755
      %v757 = vpop.f32.mrb[0].mxu0
      %758 = vmatprep.mubr.bf16.mxu0 0
      %759 = vmatmul.mubr.bf16.gmra.mrb[0].mxu0 %v666
      %v760 = vpop.f32.mrb[0].mxu0
      %v761 = vadd.f32 %v549, %v760
      %v762 = vpop.f32.mrb[0].mxu0
      %v763 = vpop.f32.mrb[0].mxu0
      %v764 = vadd.f32 %v552, %v763
      %v765 = vpop.f32.mrb[0].mxu0
      %766 = vmatprep.mubr.bf16.mxu0 0
      %767 = vmatmul.mubr.bf16.gmra.mrb[0].mxu0 %v669
      %v768 = vpop.f32.mrb[0].mxu0
      %v769 = vadd.f32 %v557, %v768
      %v770 = vpop.f32.mrb[0].mxu0
      %v771 = vpop.f32.mrb[0].mxu0
      %v772 = vadd.f32 %v560, %v771
      %v773 = vpop.f32.mrb[0].mxu0
      %774 = vmatprep.mubr.bf16.mxu0 0
      %775 = vmatmul.mubr.bf16.gmra.mrb[0].mxu0 %v672
      %v776 = vpop.f32.mrb[0].mxu0
      %v777 = vadd.f32 %v565, %v776
      %v778 = vpop.f32.mrb[0].mxu0
      %v779 = vpop.f32.mrb[0].mxu0
      %v780 = vadd.f32 %v568, %v779
      %v781 = vpop.f32.mrb[0].mxu0
      %782 = vmatprep.mubr.bf16.mxu0 0
      %783 = vmatmul.mubr.bf16.gmra.mrb[0].mxu0 %v675
      %v784 = vpop.f32.mrb[0].mxu0
      %v785 = vadd.f32 %v573, %v784
      %v786 = vpop.f32.mrb[0].mxu0
      %v787 = vpop.f32.mrb[0].mxu0
      %v788 = vadd.f32 %v576, %v787
      %v789 = vpop.f32.mrb[0].mxu0
      %790 = vmatprep.mubr.bf16.mxu0 0
      %791 = vmatmul.mubr.bf16.gmra.mrb[0].mxu0 %v678
      %v792 = vpop.f32.mrb[0].mxu0
      %v793 = vadd.f32 %v581, %v792
      %v794 = vpop.f32.mrb[0].mxu0
      %v795 = vpop.f32.mrb[0].mxu0
      %v796 = vadd.f32 %v584, %v795
      %v797 = vpop.f32.mrb[0].mxu0
      %798 = vmatprep.mubr.bf16.mxu0 0
      %799 = vmatmul.mubr.bf16.gmra.mrb[0].mxu0 %v681
      %v800 = vpop.f32.mrb[0].mxu0
      %v801 = vadd.f32 %v589, %v800
      %v802 = vpop.f32.mrb[0].mxu0
      %v803 = vpop.f32.mrb[0].mxu0
      %v804 = vadd.f32 %v592, %v803
      %v805 = vpop.f32.mrb[0].mxu0
      %806 = vmatprep.mubr.bf16.mxu0 0
      %807 = vmatmul.mubr.bf16.gmra.mrb[0].mxu0 %v684
      %v808 = vpop.f32.mrb[0].mxu0
      %v809 = vadd.f32 %v597, %v808
      %v810 = vpop.f32.mrb[0].mxu0
      %v811 = vpop.f32.mrb[0].mxu0
      %v812 = vadd.f32 %v600, %v811
      %v813 = vpop.f32.mrb[0].mxu0
      %814 = vmatprep.mubr.bf16.mxu0 0
      %815 = vmatmul.mubr.bf16.gmra.mrb[0].mxu0 %v687
      %v816 = vpop.f32.mrb[0].mxu0
      %v817 = vadd.f32 %v605, %v816
      %v818 = vpop.f32.mrb[0].mxu0
      %v819 = vpop.f32.mrb[0].mxu0
      %v820 = vadd.f32 %v608, %v819
      %v821 = vpop.f32.mrb[0].mxu0
      %822 = vmatprep.mubr.bf16.mxu0 0
      %823 = vmatmul.mubr.bf16.gmra.mrb[0].mxu0 %v690
      %v824 = vpop.f32.mrb[0].mxu0
      %v825 = vadd.f32 %v613, %v824
      %v826 = vpop.f32.mrb[0].mxu0
      %v827 = vpop.f32.mrb[0].mxu0
      %v828 = vadd.f32 %v616, %v827
      %v829 = vpop.f32.mrb[0].mxu0
      %830 = vmatprep.mubr.bf16.mxu0 0
      %831 = vmatmul.mubr.bf16.gmra.mrb[0].mxu0 %v693
      %v832 = vpop.f32.mrb[0].mxu0
      %v833 = vadd.f32 %v621, %v832
      %v834 = vpop.f32.mrb[0].mxu0
      %v835 = vpop.f32.mrb[0].mxu0
      %v836 = vadd.f32 %v624, %v835
      %v837 = vpop.f32.mrb[0].mxu0
      %838 = vmatprep.mubr.bf16.mxu0 0
      %839 = vmatmul.mubr.bf16.gmra.mrb[0].mxu0 %v696
      %v840 = vpop.f32.mrb[0].mxu0
      %v841 = vadd.f32 %v629, %v840
      %v842 = vpop.f32.mrb[0].mxu0
      %v843 = vpop.f32.mrb[0].mxu0
      %v844 = vadd.f32 %v632, %v843
      %v845 = vpop.f32.mrb[0].mxu0
      %846 = vmatprep.mubr.bf16.mxu0 0
      %847 = vmatmul.mubr.bf16.gmra.mrb[0].mxu0 %v699
      %v848 = vpop.f32.mrb[0].mxu0
      %v849 = vadd.f32 %v637, %v848
      %v850 = vpop.f32.mrb[0].mxu0
      %v851 = vpop.f32.mrb[0].mxu0
      %v852 = vadd.f32 %v640, %v851
      %v853 = vpop.f32.mrb[0].mxu0
      %854 = vmatprep.mubr.bf16.mxu0 0
      %855 = vmatmul.mubr.bf16.gmra.mrb[0].mxu0 %v702
      %v856 = vpop.f32.mrb[0].mxu0
      %v857 = vadd.f32 %v645, %v856
      %v858 = vpop.f32.mrb[0].mxu0
      %v859 = vpop.f32.mrb[0].mxu0
      %v860 = vadd.f32 %v648, %v859
      %v861 = vpop.f32.mrb[0].mxu0
      %862 = vmatprep.mubr.bf16.mxu0 0
      %863 = vmatmul.mubr.bf16.gmra.mrb[0].mxu0 %v705
      %v864 = vpop.f32.mrb[0].mxu0
      %v865 = vadd.f32 %v653, %v864
      %v866 = vpop.f32.mrb[0].mxu0
      %v867 = vpop.f32.mrb[0].mxu0
      %v868 = vadd.f32 %v656, %v867
      %v869 = vpop.f32.mrb[0].mxu0
      %870 = vdwg.mxu0
      %v871 = vld [vmem:[#allocation2 + $0x2] sm:$0xff]
      %v872 = vld [vmem:[#allocation2 + $0xa] sm:$0xff]
      %v873 = vld [vmem:[#allocation2 + $0x1a] sm:$0xff]
      %v874 = vld [vmem:[#allocation2 + $0x22] sm:$0xff]
      %v875 = vld [vmem:[#allocation2 + $0x32] sm:$0xff]
      %v876 = vld [vmem:[#allocation2 + $0x3a] sm:$0xff]
      %v877 = vld [vmem:[#allocation2 + $0x4a] sm:$0xff]
      %v878 = vld [vmem:[#allocation2 + $0x52] sm:$0xff]
      %v879 = vld [vmem:[#allocation2 + $0x62] sm:$0xff]
      %v880 = vld [vmem:[#allocation2 + $0x6a] sm:$0xff]
      %v881 = vld [vmem:[#allocation2 + $0x7a] sm:$0xff]
      %v882 = vld [vmem:[#allocation2 + $0x82] sm:$0xff]
      %v883 = vld [vmem:[#allocation2 + $0x92] sm:$0xff]
      %v884 = vld [vmem:[#allocation2 + $0x9a] sm:$0xff]
      %v885 = vld [vmem:[#allocation2 + $0xaa] sm:$0xff]
      %v886 = vld [vmem:[#allocation2 + $0xb2] sm:$0xff]
      %v887 = vld [vmem:[#allocation2 + $0xc2] sm:$0xff]
      %v888 = vld [vmem:[#allocation2 + $0xca] sm:$0xff]
      %v889 = vld [vmem:[#allocation2 + $0xda] sm:$0xff]
      %v890 = vld [vmem:[#allocation2 + $0xe2] sm:$0xff]
      %v891 = vld [vmem:[#allocation2 + $0xf2] sm:$0xff]
      %v892 = vld [vmem:[#allocation2 + $0xfa] sm:$0xff]
      %v893 = vld [vmem:[#allocation2 + $0x10a] sm:$0xff]
      %v894 = vld [vmem:[#allocation2 + $0x112] sm:$0xff]
      %v895 = vld [vmem:[#allocation2 + $0x122] sm:$0xff]
      %v896 = vld [vmem:[#allocation2 + $0x12a] sm:$0xff]
      %v897 = vld [vmem:[#allocation2 + $0x13a] sm:$0xff]
      %v898 = vld [vmem:[#allocation2 + $0x142] sm:$0xff]
      %v899 = vld [vmem:[#allocation2 + $0x152] sm:$0xff]
      %v900 = vld [vmem:[#allocation2 + $0x15a] sm:$0xff]
      %v901 = vld [vmem:[#allocation2 + $0x16a] sm:$0xff]
      %v902 = vld [vmem:[#allocation2 + $0x172] sm:$0xff]
      %v903 = vpack.c.bf16 %v872, %v871
      %v904 = vpack.c.bf16 %v874, %v873
      %v905 = vpack.c.bf16 %v876, %v875
      %v906 = vpack.c.bf16 %v878, %v877
      %v907 = vpack.c.bf16 %v880, %v879
      %v908 = vpack.c.bf16 %v882, %v881
      %v909 = vpack.c.bf16 %v884, %v883
      %v910 = vpack.c.bf16 %v886, %v885
      %v911 = vpack.c.bf16 %v888, %v887
      %v912 = vpack.c.bf16 %v890, %v889
      %v913 = vpack.c.bf16 %v892, %v891
      %v914 = vpack.c.bf16 %v894, %v893
      %v915 = vpack.c.bf16 %v896, %v895
      %v916 = vpack.c.bf16 %v898, %v897
      %v917 = vpack.c.bf16 %v900, %v899
      %v918 = vpack.c.bf16 %v902, %v901
      %s919 = scalar_lea.vmem %s1, 4
      %v920 = vld [vmem:[%s919] sm:$0x3]
      %v922 = vsel %vm172, %v903, 0
      %v925 = vsel %vm172, %v904, 0
      %v928 = vsel %vm172, %v905, 0
      %v931 = vsel %vm172, %v906, 0
      %v934 = vsel %vm172, %v907, 0
      %v937 = vsel %vm172, %v908, 0
      %v940 = vsel %vm172, %v909, 0
      %v943 = vsel %vm172, %v910, 0
      %v946 = vsel %vm172, %v911, 0
      %v949 = vsel %vm172, %v912, 0
      %v952 = vsel %vm172, %v913, 0
      %v955 = vsel %vm172, %v914, 0
      %v958 = vsel %vm172, %v915, 0
      %v961 = vsel %vm172, %v916, 0
      %v964 = vsel %vm172, %v917, 0
      %v967 = vsel %vm172, %v918, 0
      %v970 = vsel %vm494, %v920, 0
      %972 = vmatprep.subr.bf16.mxu0 0
      %973 = vmatpush1.bf16.msra.mxu0 %v970
      %974 = vmatprep.subr.bf16.mxu0 0
      %975 = vmatpush1.bf16.msra.mxu0 0
      %976 = vmatprep.subr.bf16.mxu0 0
      %977 = vmatpush1.bf16.msra.mxu0 0
      %978 = vmatprep.subr.bf16.mxu0 0
      %979 = vmatpush1.bf16.msra.mxu0 0
      %980 = vmatprep.subr.bf16.mxu0 0
      %981 = vmatpush1.bf16.msra.mxu0 0
      %982 = vmatprep.subr.bf16.mxu0 0
      %983 = vmatpush1.bf16.msra.mxu0 0
      %984 = vmatprep.subr.bf16.mxu0 0
      %985 = vmatpush1.bf16.msra.mxu0 0
      %986 = vmatprep.subr.bf16.mxu0 0
      %987 = vmatpush1.bf16.msra.mxu0 0
      %988 = vmatprep.subr.bf16.mxu0 0
      %989 = vmatpush1.bf16.msra.mxu0 0
      %990 = vmatprep.subr.bf16.mxu0 0
      %991 = vmatpush1.bf16.msra.mxu0 0
      %992 = vmatprep.subr.bf16.mxu0 0
      %993 = vmatpush1.bf16.msra.mxu0 0
      %994 = vmatprep.subr.bf16.mxu0 0
      %995 = vmatpush1.bf16.msra.mxu0 0
      %996 = vmatprep.subr.bf16.mxu0 0
      %997 = vmatpush1.bf16.msra.mxu0 0
      %998 = vmatprep.subr.bf16.mxu0 0
      %999 = vmatpush1.bf16.msra.mxu0 0
      %1000 = vmatprep.subr.bf16.mxu0 0
      %1001 = vmatpush1.bf16.msra.mxu0 0
      %1002 = vmatprep.subr.bf16.mxu0 0
      %1003 = vmatpush1.bf16.msra.mxu0 0
      %1004 = vmatprep.mubr.bf16.mxu0 0
      %1005 = vmatmul.mubr.bf16.gmra.mrb[0].mxu0 %v922
      %v1006 = vpop.f32.mrb[0].mxu0
      %v1007 = vadd.f32 0.0, %v1006
      %v1008 = vpop.f32.mrb[0].mxu0
      %v1009 = vpop.f32.mrb[0].mxu0
      %v1010 = vadd.f32 0.0, %v1009
      %v1011 = vpop.f32.mrb[0].mxu0
      %1012 = vmatprep.mubr.bf16.mxu0 0
      %1013 = vmatmul.mubr.bf16.gmra.mrb[0].mxu0 %v925
      %v1014 = vpop.f32.mrb[0].mxu0
      %v1015 = vadd.f32 0.0, %v1014
      %v1016 = vpop.f32.mrb[0].mxu0
      %v1017 = vpop.f32.mrb[0].mxu0
      %v1018 = vadd.f32 0.0, %v1017
      %v1019 = vpop.f32.mrb[0].mxu0
      %1020 = vmatprep.mubr.bf16.mxu0 0
      %1021 = vmatmul.mubr.bf16.gmra.mrb[0].mxu0 %v928
      %v1022 = vpop.f32.mrb[0].mxu0
      %v1023 = vadd.f32 0.0, %v1022
      %v1024 = vpop.f32.mrb[0].mxu0
      %v1025 = vpop.f32.mrb[0].mxu0
      %v1026 = vadd.f32 0.0, %v1025
      %v1027 = vpop.f32.mrb[0].mxu0
      %1028 = vmatprep.mubr.bf16.mxu0 0
      %1029 = vmatmul.mubr.bf16.gmra.mrb[0].mxu0 %v931
      %v1030 = vpop.f32.mrb[0].mxu0
      %v1031 = vadd.f32 0.0, %v1030
      %v1032 = vpop.f32.mrb[0].mxu0
      %v1033 = vpop.f32.mrb[0].mxu0
      %v1034 = vadd.f32 0.0, %v1033
      %v1035 = vpop.f32.mrb[0].mxu0
      %1036 = vmatprep.mubr.bf16.mxu0 0
      %1037 = vmatmul.mubr.bf16.gmra.mrb[0].mxu0 %v934
      %v1038 = vpop.f32.mrb[0].mxu0
      %v1039 = vadd.f32 0.0, %v1038
      %v1040 = vpop.f32.mrb[0].mxu0
      %v1041 = vpop.f32.mrb[0].mxu0
      %v1042 = vadd.f32 0.0, %v1041
      %v1043 = vpop.f32.mrb[0].mxu0
      %1044 = vmatprep.mubr.bf16.mxu0 0
      %1045 = vmatmul.mubr.bf16.gmra.mrb[0].mxu0 %v937
      %v1046 = vpop.f32.mrb[0].mxu0
      %v1047 = vadd.f32 0.0, %v1046
      %v1048 = vpop.f32.mrb[0].mxu0
      %v1049 = vpop.f32.mrb[0].mxu0
      %v1050 = vadd.f32 0.0, %v1049
      %v1051 = vpop.f32.mrb[0].mxu0
      %1052 = vmatprep.mubr.bf16.mxu0 0
      %1053 = vmatmul.mubr.bf16.gmra.mrb[0].mxu0 %v940
      %v1054 = vpop.f32.mrb[0].mxu0
      %v1055 = vadd.f32 0.0, %v1054
      %v1056 = vpop.f32.mrb[0].mxu0
      %v1057 = vpop.f32.mrb[0].mxu0
      %v1058 = vadd.f32 0.0, %v1057
      %v1059 = vpop.f32.mrb[0].mxu0
      %1060 = vmatprep.mubr.bf16.mxu0 0
      %1061 = vmatmul.mubr.bf16.gmra.mrb[0].mxu0 %v943
      %v1062 = vpop.f32.mrb[0].mxu0
      %v1063 = vadd.f32 0.0, %v1062
      %v1064 = vpop.f32.mrb[0].mxu0
      %v1065 = vpop.f32.mrb[0].mxu0
      %v1066 = vadd.f32 0.0, %v1065
      %v1067 = vpop.f32.mrb[0].mxu0
      %1068 = vmatprep.mubr.bf16.mxu0 0
      %1069 = vmatmul.mubr.bf16.gmra.mrb[0].mxu0 %v946
      %v1070 = vpop.f32.mrb[0].mxu0
      %v1071 = vadd.f32 0.0, %v1070
      %v1072 = vpop.f32.mrb[0].mxu0
      %v1073 = vpop.f32.mrb[0].mxu0
      %v1074 = vadd.f32 0.0, %v1073
      %v1075 = vpop.f32.mrb[0].mxu0
      %1076 = vmatprep.mubr.bf16.mxu0 0
      %1077 = vmatmul.mubr.bf16.gmra.mrb[0].mxu0 %v949
      %v1078 = vpop.f32.mrb[0].mxu0
      %v1079 = vadd.f32 0.0, %v1078
      %v1080 = vpop.f32.mrb[0].mxu0
      %v1081 = vpop.f32.mrb[0].mxu0
      %v1082 = vadd.f32 0.0, %v1081
      %v1083 = vpop.f32.mrb[0].mxu0
      %1084 = vmatprep.mubr.bf16.mxu0 0
      %1085 = vmatmul.mubr.bf16.gmra.mrb[0].mxu0 %v952
      %v1086 = vpop.f32.mrb[0].mxu0
      %v1087 = vadd.f32 0.0, %v1086
      %v1088 = vpop.f32.mrb[0].mxu0
      %v1089 = vpop.f32.mrb[0].mxu0
      %v1090 = vadd.f32 0.0, %v1089
      %v1091 = vpop.f32.mrb[0].mxu0
      %1092 = vmatprep.mubr.bf16.mxu0 0
      %1093 = vmatmul.mubr.bf16.gmra.mrb[0].mxu0 %v955
      %v1094 = vpop.f32.mrb[0].mxu0
      %v1095 = vadd.f32 0.0, %v1094
      %v1096 = vpop.f32.mrb[0].mxu0
      %v1097 = vpop.f32.mrb[0].mxu0
      %v1098 = vadd.f32 0.0, %v1097
      %v1099 = vpop.f32.mrb[0].mxu0
      %1100 = vmatprep.mubr.bf16.mxu0 0
      %1101 = vmatmul.mubr.bf16.gmra.mrb[0].mxu0 %v958
      %v1102 = vpop.f32.mrb[0].mxu0
      %v1103 = vadd.f32 0.0, %v1102
      %v1104 = vpop.f32.mrb[0].mxu0
      %v1105 = vpop.f32.mrb[0].mxu0
      %v1106 = vadd.f32 0.0, %v1105
      %v1107 = vpop.f32.mrb[0].mxu0
      %1108 = vmatprep.mubr.bf16.mxu0 0
      %1109 = vmatmul.mubr.bf16.gmra.mrb[0].mxu0 %v961
      %v1110 = vpop.f32.mrb[0].mxu0
      %v1111 = vadd.f32 0.0, %v1110
      %v1112 = vpop.f32.mrb[0].mxu0
      %v1113 = vpop.f32.mrb[0].mxu0
      %v1114 = vadd.f32 0.0, %v1113
      %v1115 = vpop.f32.mrb[0].mxu0
      %1116 = vmatprep.mubr.bf16.mxu0 0
      %1117 = vmatmul.mubr.bf16.gmra.mrb[0].mxu0 %v964
      %v1118 = vpop.f32.mrb[0].mxu0
      %v1119 = vadd.f32 0.0, %v1118
      %v1120 = vpop.f32.mrb[0].mxu0
      %v1121 = vpop.f32.mrb[0].mxu0
      %v1122 = vadd.f32 0.0, %v1121
      %v1123 = vpop.f32.mrb[0].mxu0
      %1124 = vmatprep.mubr.bf16.mxu0 0
      %1125 = vmatmul.mubr.bf16.gmra.mrb[0].mxu0 %v967
      %v1126 = vpop.f32.mrb[0].mxu0
      %v1127 = vadd.f32 0.0, %v1126
      %v1128 = vpop.f32.mrb[0].mxu0
      %v1129 = vpop.f32.mrb[0].mxu0
      %v1130 = vadd.f32 0.0, %v1129
      %v1131 = vpop.f32.mrb[0].mxu0
      %1132 = vdwg.mxu0
      %v1133 = vadd.f32 %v745, %v1007
      %v1134 = vadd.f32 %v748, %v1010
      %v1135 = vadd.f32 %v753, %v1015
      %v1136 = vadd.f32 %v756, %v1018
      %v1137 = vadd.f32 %v761, %v1023
      %v1138 = vadd.f32 %v764, %v1026
      %v1139 = vadd.f32 %v769, %v1031
      %v1140 = vadd.f32 %v772, %v1034
      %v1141 = vadd.f32 %v777, %v1039
      %v1142 = vadd.f32 %v780, %v1042
      %v1143 = vadd.f32 %v785, %v1047
      %v1144 = vadd.f32 %v788, %v1050
      %v1145 = vadd.f32 %v793, %v1055
      %v1146 = vadd.f32 %v796, %v1058
      %v1147 = vadd.f32 %v801, %v1063
      %v1148 = vadd.f32 %v804, %v1066
      %v1149 = vadd.f32 %v809, %v1071
      %v1150 = vadd.f32 %v812, %v1074
      %v1151 = vadd.f32 %v817, %v1079
      %v1152 = vadd.f32 %v820, %v1082
      %v1153 = vadd.f32 %v825, %v1087
      %v1154 = vadd.f32 %v828, %v1090
      %v1155 = vadd.f32 %v833, %v1095
      %v1156 = vadd.f32 %v836, %v1098
      %v1157 = vadd.f32 %v841, %v1103
      %v1158 = vadd.f32 %v844, %v1106
      %v1159 = vadd.f32 %v849, %v1111
      %v1160 = vadd.f32 %v852, %v1114
      %v1161 = vadd.f32 %v857, %v1119
      %v1162 = vadd.f32 %v860, %v1122
      %v1163 = vadd.f32 %v865, %v1127
      %v1164 = vadd.f32 %v868, %v1130
      %v1165 = vld [vmem:[%s314] sm:$0xff]
      %v1166 = vld [vmem:[%s314 + $0x8] sm:$0xff]
      %v1167 = vld [vmem:[%s314 + $0x18] sm:$0xff]
      %v1168 = vld [vmem:[%s314 + $0x20] sm:$0xff]
      %v1169 = vld [vmem:[%s314 + $0x30] sm:$0xff]
      %v1170 = vld [vmem:[%s314 + $0x38] sm:$0xff]
      %v1171 = vld [vmem:[%s314 + $0x48] sm:$0xff]
      %v1172 = vld [vmem:[%s314 + $0x50] sm:$0xff]
      %v1173 = vld [vmem:[%s314 + $0x60] sm:$0xff]
      %v1174 = vld [vmem:[%s314 + $0x68] sm:$0xff]
      %v1175 = vld [vmem:[%s314 + $0x78] sm:$0xff]
      %v1176 = vld [vmem:[%s314 + $0x80] sm:$0xff]
      %v1177 = vld [vmem:[%s314 + $0x90] sm:$0xff]
      %v1178 = vld [vmem:[%s314 + $0x98] sm:$0xff]
      %v1179 = vld [vmem:[%s314 + $0xa8] sm:$0xff]
      %v1180 = vld [vmem:[%s314 + $0xb0] sm:$0xff]
      %v1181 = vld [vmem:[%s314 + $0xc0] sm:$0xff]
      %v1182 = vld [vmem:[%s314 + $0xc8] sm:$0xff]
      %v1183 = vld [vmem:[%s314 + $0xd8] sm:$0xff]
      %v1184 = vld [vmem:[%s314 + $0xe0] sm:$0xff]
      %v1185 = vld [vmem:[%s314 + $0xf0] sm:$0xff]
      %v1186 = vld [vmem:[%s314 + $0xf8] sm:$0xff]
      %v1187 = vld [vmem:[%s314 + $0x108] sm:$0xff]
      %v1188 = vld [vmem:[%s314 + $0x110] sm:$0xff]
      %v1189 = vld [vmem:[%s314 + $0x120] sm:$0xff]
      %v1190 = vld [vmem:[%s314 + $0x128] sm:$0xff]
      %v1191 = vld [vmem:[%s314 + $0x138] sm:$0xff]
      %v1192 = vld [vmem:[%s314 + $0x140] sm:$0xff]
      %v1193 = vld [vmem:[%s314 + $0x150] sm:$0xff]
      %v1194 = vld [vmem:[%s314 + $0x158] sm:$0xff]
      %v1195 = vld [vmem:[%s314 + $0x168] sm:$0xff]
      %v1196 = vld [vmem:[%s314 + $0x170] sm:$0xff]
      %v1197 = vpack.c.bf16 %v1166, %v1165
      %v1198 = vpack.c.bf16 %v1168, %v1167
      %v1199 = vpack.c.bf16 %v1170, %v1169
      %v1200 = vpack.c.bf16 %v1172, %v1171
      %v1201 = vpack.c.bf16 %v1174, %v1173
      %v1202 = vpack.c.bf16 %v1176, %v1175
      %v1203 = vpack.c.bf16 %v1178, %v1177
      %v1204 = vpack.c.bf16 %v1180, %v1179
      %v1205 = vpack.c.bf16 %v1182, %v1181
      %v1206 = vpack.c.bf16 %v1184, %v1183
      %v1207 = vpack.c.bf16 %v1186, %v1185
      %v1208 = vpack.c.bf16 %v1188, %v1187
      %v1209 = vpack.c.bf16 %v1190, %v1189
      %v1210 = vpack.c.bf16 %v1192, %v1191
      %v1211 = vpack.c.bf16 %v1194, %v1193
      %v1212 = vpack.c.bf16 %v1196, %v1195
      %s1213 = scalar_lea.vmem %s1, 6
      %v1214 = vld [vmem:[%s1213] sm:$0x3]
      %v1216 = vsel %vm172, %v1197, 0
      %v1219 = vsel %vm172, %v1198, 0
      %v1222 = vsel %vm172, %v1199, 0
      %v1225 = vsel %vm172, %v1200, 0
      %v1228 = vsel %vm172, %v1201, 0
      %v1231 = vsel %vm172, %v1202, 0
      %v1234 = vsel %vm172, %v1203, 0
      %v1237 = vsel %vm172, %v1204, 0
      %v1240 = vsel %vm172, %v1205, 0
      %v1243 = vsel %vm172, %v1206, 0
      %v1246 = vsel %vm172, %v1207, 0
      %v1249 = vsel %vm172, %v1208, 0
      %v1252 = vsel %vm172, %v1209, 0
      %v1255 = vsel %vm172, %v1210, 0
      %v1258 = vsel %vm172, %v1211, 0
      %v1261 = vsel %vm172, %v1212, 0
      %v1264 = vsel %vm494, %v1214, 0
      %1266 = vmatprep.subr.bf16.mxu0 0
      %1267 = vmatpush1.bf16.msra.mxu0 %v1264
      %1268 = vmatprep.subr.bf16.mxu0 0
      %1269 = vmatpush1.bf16.msra.mxu0 0
      %1270 = vmatprep.subr.bf16.mxu0 0
      %1271 = vmatpush1.bf16.msra.mxu0 0
      %1272 = vmatprep.subr.bf16.mxu0 0
      %1273 = vmatpush1.bf16.msra.mxu0 0
      %1274 = vmatprep.subr.bf16.mxu0 0
      %1275 = vmatpush1.bf16.msra.mxu0 0
      %1276 = vmatprep.subr.bf16.mxu0 0
      %1277 = vmatpush1.bf16.msra.mxu0 0
      %1278 = vmatprep.subr.bf16.mxu0 0
      %1279 = vmatpush1.bf16.msra.mxu0 0
      %1280 = vmatprep.subr.bf16.mxu0 0
      %1281 = vmatpush1.bf16.msra.mxu0 0
      %1282 = vmatprep.subr.bf16.mxu0 0
      %1283 = vmatpush1.bf16.msra.mxu0 0
      %1284 = vmatprep.subr.bf16.mxu0 0
      %1285 = vmatpush1.bf16.msra.mxu0 0
      %1286 = vmatprep.subr.bf16.mxu0 0
      %1287 = vmatpush1.bf16.msra.mxu0 0
      %1288 = vmatprep.subr.bf16.mxu0 0
      %1289 = vmatpush1.bf16.msra.mxu0 0
      %1290 = vmatprep.subr.bf16.mxu0 0
      %1291 = vmatpush1.bf16.msra.mxu0 0
      %1292 = vmatprep.subr.bf16.mxu0 0
      %1293 = vmatpush1.bf16.msra.mxu0 0
      %1294 = vmatprep.subr.bf16.mxu0 0
      %1295 = vmatpush1.bf16.msra.mxu0 0
      %1296 = vmatprep.subr.bf16.mxu0 0
      %1297 = vmatpush1.bf16.msra.mxu0 0
      %1298 = vmatprep.mubr.bf16.mxu0 0
      %1299 = vmatmul.mubr.bf16.gmra.mrb[0].mxu0 %v1216
      %v1300 = vpop.f32.mrb[0].mxu0
      %v1301 = vadd.f32 0.0, %v1300
      %v1302 = vpop.f32.mrb[0].mxu0
      %v1303 = vpop.f32.mrb[0].mxu0
      %v1304 = vadd.f32 0.0, %v1303
      %v1305 = vpop.f32.mrb[0].mxu0
      %1306 = vmatprep.mubr.bf16.mxu0 0
      %1307 = vmatmul.mubr.bf16.gmra.mrb[0].mxu0 %v1219
      %v1308 = vpop.f32.mrb[0].mxu0
      %v1309 = vadd.f32 0.0, %v1308
      %v1310 = vpop.f32.mrb[0].mxu0
      %v1311 = vpop.f32.mrb[0].mxu0
      %v1312 = vadd.f32 0.0, %v1311
      %v1313 = vpop.f32.mrb[0].mxu0
      %1314 = vmatprep.mubr.bf16.mxu0 0
      %1315 = vmatmul.mubr.bf16.gmra.mrb[0].mxu0 %v1222
      %v1316 = vpop.f32.mrb[0].mxu0
      %v1317 = vadd.f32 0.0, %v1316
      %v1318 = vpop.f32.mrb[0].mxu0
      %v1319 = vpop.f32.mrb[0].mxu0
      %v1320 = vadd.f32 0.0, %v1319
      %v1321 = vpop.f32.mrb[0].mxu0
      %1322 = vmatprep.mubr.bf16.mxu0 0
      %1323 = vmatmul.mubr.bf16.gmra.mrb[0].mxu0 %v1225
      %v1324 = vpop.f32.mrb[0].mxu0
      %v1325 = vadd.f32 0.0, %v1324
      %v1326 = vpop.f32.mrb[0].mxu0
      %v1327 = vpop.f32.mrb[0].mxu0
      %v1328 = vadd.f32 0.0, %v1327
      %v1329 = vpop.f32.mrb[0].mxu0
      %1330 = vmatprep.mubr.bf16.mxu0 0
      %1331 = vmatmul.mubr.bf16.gmra.mrb[0].mxu0 %v1228
      %v1332 = vpop.f32.mrb[0].mxu0
      %v1333 = vadd.f32 0.0, %v1332
      %v1334 = vpop.f32.mrb[0].mxu0
      %v1335 = vpop.f32.mrb[0].mxu0
      %v1336 = vadd.f32 0.0, %v1335
      %v1337 = vpop.f32.mrb[0].mxu0
      %1338 = vmatprep.mubr.bf16.mxu0 0
      %1339 = vmatmul.mubr.bf16.gmra.mrb[0].mxu0 %v1231
      %v1340 = vpop.f32.mrb[0].mxu0
      %v1341 = vadd.f32 0.0, %v1340
      %v1342 = vpop.f32.mrb[0].mxu0
      %v1343 = vpop.f32.mrb[0].mxu0
      %v1344 = vadd.f32 0.0, %v1343
      %v1345 = vpop.f32.mrb[0].mxu0
      %1346 = vmatprep.mubr.bf16.mxu0 0
      %1347 = vmatmul.mubr.bf16.gmra.mrb[0].mxu0 %v1234
      %v1348 = vpop.f32.mrb[0].mxu0
      %v1349 = vadd.f32 0.0, %v1348
      %v1350 = vpop.f32.mrb[0].mxu0
      %v1351 = vpop.f32.mrb[0].mxu0
      %v1352 = vadd.f32 0.0, %v1351
      %v1353 = vpop.f32.mrb[0].mxu0
      %1354 = vmatprep.mubr.bf16.mxu0 0
      %1355 = vmatmul.mubr.bf16.gmra.mrb[0].mxu0 %v1237
      %v1356 = vpop.f32.mrb[0].mxu0
      %v1357 = vadd.f32 0.0, %v1356
      %v1358 = vpop.f32.mrb[0].mxu0
      %v1359 = vpop.f32.mrb[0].mxu0
      %v1360 = vadd.f32 0.0, %v1359
      %v1361 = vpop.f32.mrb[0].mxu0
      %1362 = vmatprep.mubr.bf16.mxu0 0
      %1363 = vmatmul.mubr.bf16.gmra.mrb[0].mxu0 %v1240
      %v1364 = vpop.f32.mrb[0].mxu0
      %v1365 = vadd.f32 0.0, %v1364
      %v1366 = vpop.f32.mrb[0].mxu0
      %v1367 = vpop.f32.mrb[0].mxu0
      %v1368 = vadd.f32 0.0, %v1367
      %v1369 = vpop.f32.mrb[0].mxu0
      %1370 = vmatprep.mubr.bf16.mxu0 0
      %1371 = vmatmul.mubr.bf16.gmra.mrb[0].mxu0 %v1243
      %v1372 = vpop.f32.mrb[0].mxu0
      %v1373 = vadd.f32 0.0, %v1372
      %v1374 = vpop.f32.mrb[0].mxu0
      %v1375 = vpop.f32.mrb[0].mxu0
      %v1376 = vadd.f32 0.0, %v1375
      %v1377 = vpop.f32.mrb[0].mxu0
      %1378 = vmatprep.mubr.bf16.mxu0 0
      %1379 = vmatmul.mubr.bf16.gmra.mrb[0].mxu0 %v1246
      %v1380 = vpop.f32.mrb[0].mxu0
      %v1381 = vadd.f32 0.0, %v1380
      %v1382 = vpop.f32.mrb[0].mxu0
      %v1383 = vpop.f32.mrb[0].mxu0
      %v1384 = vadd.f32 0.0, %v1383
      %v1385 = vpop.f32.mrb[0].mxu0
      %1386 = vmatprep.mubr.bf16.mxu0 0
      %1387 = vmatmul.mubr.bf16.gmra.mrb[0].mxu0 %v1249
      %v1388 = vpop.f32.mrb[0].mxu0
      %v1389 = vadd.f32 0.0, %v1388
      %v1390 = vpop.f32.mrb[0].mxu0
      %v1391 = vpop.f32.mrb[0].mxu0
      %v1392 = vadd.f32 0.0, %v1391
      %v1393 = vpop.f32.mrb[0].mxu0
      %1394 = vmatprep.mubr.bf16.mxu0 0
      %1395 = vmatmul.mubr.bf16.gmra.mrb[0].mxu0 %v1252
      %v1396 = vpop.f32.mrb[0].mxu0
      %v1397 = vadd.f32 0.0, %v1396
      %v1398 = vpop.f32.mrb[0].mxu0
      %v1399 = vpop.f32.mrb[0].mxu0
      %v1400 = vadd.f32 0.0, %v1399
      %v1401 = vpop.f32.mrb[0].mxu0
      %1402 = vmatprep.mubr.bf16.mxu0 0
      %1403 = vmatmul.mubr.bf16.gmra.mrb[0].mxu0 %v1255
      %v1404 = vpop.f32.mrb[0].mxu0
      %v1405 = vadd.f32 0.0, %v1404
      %v1406 = vpop.f32.mrb[0].mxu0
      %v1407 = vpop.f32.mrb[0].mxu0
      %v1408 = vadd.f32 0.0, %v1407
      %v1409 = vpop.f32.mrb[0].mxu0
      %1410 = vmatprep.mubr.bf16.mxu0 0
      %1411 = vmatmul.mubr.bf16.gmra.mrb[0].mxu0 %v1258
      %v1412 = vpop.f32.mrb[0].mxu0
      %v1413 = vadd.f32 0.0, %v1412
      %v1414 = vpop.f32.mrb[0].mxu0
      %v1415 = vpop.f32.mrb[0].mxu0
      %v1416 = vadd.f32 0.0, %v1415
      %v1417 = vpop.f32.mrb[0].mxu0
      %1418 = vmatprep.mubr.bf16.mxu0 0
      %1419 = vmatmul.mubr.bf16.gmra.mrb[0].mxu0 %v1261
      %v1420 = vpop.f32.mrb[0].mxu0
      %v1421 = vadd.f32 0.0, %v1420
      %v1422 = vpop.f32.mrb[0].mxu0
      %v1423 = vpop.f32.mrb[0].mxu0
      %v1424 = vadd.f32 0.0, %v1423
      %v1425 = vpop.f32.mrb[0].mxu0
      %1426 = vdwg.mxu0
      %v1427 = vadd.f32 %v1133, %v1301
      %v1428 = vadd.f32 %v1134, %v1304
      %v1429 = vadd.f32 %v1135, %v1309
      %v1430 = vadd.f32 %v1136, %v1312
      %v1431 = vadd.f32 %v1137, %v1317
      %v1432 = vadd.f32 %v1138, %v1320
      %v1433 = vadd.f32 %v1139, %v1325
      %v1434 = vadd.f32 %v1140, %v1328
      %v1435 = vadd.f32 %v1141, %v1333
      %v1436 = vadd.f32 %v1142, %v1336
      %v1437 = vadd.f32 %v1143, %v1341
      %v1438 = vadd.f32 %v1144, %v1344
      %v1439 = vadd.f32 %v1145, %v1349
      %v1440 = vadd.f32 %v1146, %v1352
      %v1441 = vadd.f32 %v1147, %v1357
      %v1442 = vadd.f32 %v1148, %v1360
      %v1443 = vadd.f32 %v1149, %v1365
      %v1444 = vadd.f32 %v1150, %v1368
      %v1445 = vadd.f32 %v1151, %v1373
      %v1446 = vadd.f32 %v1152, %v1376
      %v1447 = vadd.f32 %v1153, %v1381
      %v1448 = vadd.f32 %v1154, %v1384
      %v1449 = vadd.f32 %v1155, %v1389
      %v1450 = vadd.f32 %v1156, %v1392
      %v1451 = vadd.f32 %v1157, %v1397
      %v1452 = vadd.f32 %v1158, %v1400
      %v1453 = vadd.f32 %v1159, %v1405
      %v1454 = vadd.f32 %v1160, %v1408
      %v1455 = vadd.f32 %v1161, %v1413
      %v1456 = vadd.f32 %v1162, %v1416
      %v1457 = vadd.f32 %v1163, %v1421
      %v1458 = vadd.f32 %v1164, %v1424
      %v1459 = vld [vmem:[%s314 + $0x1] sm:$0xff]
      %v1460 = vld [vmem:[%s314 + $0x9] sm:$0xff]
      %v1461 = vld [vmem:[%s314 + $0x19] sm:$0xff]
      %v1462 = vld [vmem:[%s314 + $0x21] sm:$0xff]
      %v1463 = vld [vmem:[%s314 + $0x31] sm:$0xff]
      %v1464 = vld [vmem:[%s314 + $0x39] sm:$0xff]
      %v1465 = vld [vmem:[%s314 + $0x49] sm:$0xff]
      %v1466 = vld [vmem:[%s314 + $0x51] sm:$0xff]
      %v1467 = vld [vmem:[%s314 + $0x61] sm:$0xff]
      %v1468 = vld [vmem:[%s314 + $0x69] sm:$0xff]
      %v1469 = vld [vmem:[%s314 + $0x79] sm:$0xff]
      %v1470 = vld [vmem:[%s314 + $0x81] sm:$0xff]
      %v1471 = vld [vmem:[%s314 + $0x91] sm:$0xff]
      %v1472 = vld [vmem:[%s314 + $0x99] sm:$0xff]
      %v1473 = vld [vmem:[%s314 + $0xa9] sm:$0xff]
      %v1474 = vld [vmem:[%s314 + $0xb1] sm:$0xff]
      %v1475 = vld [vmem:[%s314 + $0xc1] sm:$0xff]
      %v1476 = vld [vmem:[%s314 + $0xc9] sm:$0xff]
      %v1477 = vld [vmem:[%s314 + $0xd9] sm:$0xff]
      %v1478 = vld [vmem:[%s314 + $0xe1] sm:$0xff]
      %v1479 = vld [vmem:[%s314 + $0xf1] sm:$0xff]
      %v1480 = vld [vmem:[%s314 + $0xf9] sm:$0xff]
      %v1481 = vld [vmem:[%s314 + $0x109] sm:$0xff]
      %v1482 = vld [vmem:[%s314 + $0x111] sm:$0xff]
      %v1483 = vld [vmem:[%s314 + $0x121] sm:$0xff]
      %v1484 = vld [vmem:[%s314 + $0x129] sm:$0xff]
      %v1485 = vld [vmem:[%s314 + $0x139] sm:$0xff]
      %v1486 = vld [vmem:[%s314 + $0x141] sm:$0xff]
      %v1487 = vld [vmem:[%s314 + $0x151] sm:$0xff]
      %v1488 = vld [vmem:[%s314 + $0x159] sm:$0xff]
      %v1489 = vld [vmem:[%s314 + $0x169] sm:$0xff]
      %v1490 = vld [vmem:[%s314 + $0x171] sm:$0xff]
      %v1491 = vpack.c.bf16 %v1460, %v1459
      %v1492 = vpack.c.bf16 %v1462, %v1461
      %v1493 = vpack.c.bf16 %v1464, %v1463
      %v1494 = vpack.c.bf16 %v1466, %v1465
      %v1495 = vpack.c.bf16 %v1468, %v1467
      %v1496 = vpack.c.bf16 %v1470, %v1469
      %v1497 = vpack.c.bf16 %v1472, %v1471
      %v1498 = vpack.c.bf16 %v1474, %v1473
      %v1499 = vpack.c.bf16 %v1476, %v1475
      %v1500 = vpack.c.bf16 %v1478, %v1477
      %v1501 = vpack.c.bf16 %v1480, %v1479
      %v1502 = vpack.c.bf16 %v1482, %v1481
      %v1503 = vpack.c.bf16 %v1484, %v1483
      %v1504 = vpack.c.bf16 %v1486, %v1485
      %v1505 = vpack.c.bf16 %v1488, %v1487
      %v1506 = vpack.c.bf16 %v1490, %v1489
      %s1507 = scalar_lea.vmem %s1, 8
      %v1508 = vld [vmem:[%s1507] sm:$0x3]
      %v1510 = vsel %vm172, %v1491, 0
      %v1513 = vsel %vm172, %v1492, 0
      %v1516 = vsel %vm172, %v1493, 0
      %v1519 = vsel %vm172, %v1494, 0
      %v1522 = vsel %vm172, %v1495, 0
      %v1525 = vsel %vm172, %v1496, 0
      %v1528 = vsel %vm172, %v1497, 0
      %v1531 = vsel %vm172, %v1498, 0
      %v1534 = vsel %vm172, %v1499, 0
      %v1537 = vsel %vm172, %v1500, 0
      %v1540 = vsel %vm172, %v1501, 0
      %v1543 = vsel %vm172, %v1502, 0
      %v1546 = vsel %vm172, %v1503, 0
      %v1549 = vsel %vm172, %v1504, 0
      %v1552 = vsel %vm172, %v1505, 0
      %v1555 = vsel %vm172, %v1506, 0
      %v1558 = vsel %vm494, %v1508, 0
      %1560 = vmatprep.subr.bf16.mxu0 0
      %1561 = vmatpush1.bf16.msra.mxu0 %v1558
      %1562 = vmatprep.subr.bf16.mxu0 0
      %1563 = vmatpush1.bf16.msra.mxu0 0
      %1564 = vmatprep.subr.bf16.mxu0 0
      %1565 = vmatpush1.bf16.msra.mxu0 0
      %1566 = vmatprep.subr.bf16.mxu0 0
      %1567 = vmatpush1.bf16.msra.mxu0 0
      %1568 = vmatprep.subr.bf16.mxu0 0
      %1569 = vmatpush1.bf16.msra.mxu0 0
      %1570 = vmatprep.subr.bf16.mxu0 0
      %1571 = vmatpush1.bf16.msra.mxu0 0
      %1572 = vmatprep.subr.bf16.mxu0 0
      %1573 = vmatpush1.bf16.msra.mxu0 0
      %1574 = vmatprep.subr.bf16.mxu0 0
      %1575 = vmatpush1.bf16.msra.mxu0 0
      %1576 = vmatprep.subr.bf16.mxu0 0
      %1577 = vmatpush1.bf16.msra.mxu0 0
      %1578 = vmatprep.subr.bf16.mxu0 0
      %1579 = vmatpush1.bf16.msra.mxu0 0
      %1580 = vmatprep.subr.bf16.mxu0 0
      %1581 = vmatpush1.bf16.msra.mxu0 0
      %1582 = vmatprep.subr.bf16.mxu0 0
      %1583 = vmatpush1.bf16.msra.mxu0 0
      %1584 = vmatprep.subr.bf16.mxu0 0
      %1585 = vmatpush1.bf16.msra.mxu0 0
      %1586 = vmatprep.subr.bf16.mxu0 0
      %1587 = vmatpush1.bf16.msra.mxu0 0
      %1588 = vmatprep.subr.bf16.mxu0 0
      %1589 = vmatpush1.bf16.msra.mxu0 0
      %1590 = vmatprep.subr.bf16.mxu0 0
      %1591 = vmatpush1.bf16.msra.mxu0 0
      %1592 = vmatprep.mubr.bf16.mxu0 0
      %1593 = vmatmul.mubr.bf16.gmra.mrb[0].mxu0 %v1510
      %v1594 = vpop.f32.mrb[0].mxu0
      %v1595 = vadd.f32 0.0, %v1594
      %v1596 = vpop.f32.mrb[0].mxu0
      %v1597 = vpop.f32.mrb[0].mxu0
      %v1598 = vadd.f32 0.0, %v1597
      %v1599 = vpop.f32.mrb[0].mxu0
      %1600 = vmatprep.mubr.bf16.mxu0 0
      %1601 = vmatmul.mubr.bf16.gmra.mrb[0].mxu0 %v1513
      %v1602 = vpop.f32.mrb[0].mxu0
      %v1603 = vadd.f32 0.0, %v1602
      %v1604 = vpop.f32.mrb[0].mxu0
      %v1605 = vpop.f32.mrb[0].mxu0
      %v1606 = vadd.f32 0.0, %v1605
      %v1607 = vpop.f32.mrb[0].mxu0
      %1608 = vmatprep.mubr.bf16.mxu0 0
      %1609 = vmatmul.mubr.bf16.gmra.mrb[0].mxu0 %v1516
      %v1610 = vpop.f32.mrb[0].mxu0
      %v1611 = vadd.f32 0.0, %v1610
      %v1612 = vpop.f32.mrb[0].mxu0
      %v1613 = vpop.f32.mrb[0].mxu0
      %v1614 = vadd.f32 0.0, %v1613
      %v1615 = vpop.f32.mrb[0].mxu0
      %1616 = vmatprep.mubr.bf16.mxu0 0
      %1617 = vmatmul.mubr.bf16.gmra.mrb[0].mxu0 %v1519
      %v1618 = vpop.f32.mrb[0].mxu0
      %v1619 = vadd.f32 0.0, %v1618
      %v1620 = vpop.f32.mrb[0].mxu0
      %v1621 = vpop.f32.mrb[0].mxu0
      %v1622 = vadd.f32 0.0, %v1621
      %v1623 = vpop.f32.mrb[0].mxu0
      %1624 = vmatprep.mubr.bf16.mxu0 0
      %1625 = vmatmul.mubr.bf16.gmra.mrb[0].mxu0 %v1522
      %v1626 = vpop.f32.mrb[0].mxu0
      %v1627 = vadd.f32 0.0, %v1626
      %v1628 = vpop.f32.mrb[0].mxu0
      %v1629 = vpop.f32.mrb[0].mxu0
      %v1630 = vadd.f32 0.0, %v1629
      %v1631 = vpop.f32.mrb[0].mxu0
      %1632 = vmatprep.mubr.bf16.mxu0 0
      %1633 = vmatmul.mubr.bf16.gmra.mrb[0].mxu0 %v1525
      %v1634 = vpop.f32.mrb[0].mxu0
      %v1635 = vadd.f32 0.0, %v1634
      %v1636 = vpop.f32.mrb[0].mxu0
      %v1637 = vpop.f32.mrb[0].mxu0
      %v1638 = vadd.f32 0.0, %v1637
      %v1639 = vpop.f32.mrb[0].mxu0
      %1640 = vmatprep.mubr.bf16.mxu0 0
      %1641 = vmatmul.mubr.bf16.gmra.mrb[0].mxu0 %v1528
      %v1642 = vpop.f32.mrb[0].mxu0
      %v1643 = vadd.f32 0.0, %v1642
      %v1644 = vpop.f32.mrb[0].mxu0
      %v1645 = vpop.f32.mrb[0].mxu0
      %v1646 = vadd.f32 0.0, %v1645
      %v1647 = vpop.f32.mrb[0].mxu0
      %1648 = vmatprep.mubr.bf16.mxu0 0
      %1649 = vmatmul.mubr.bf16.gmra.mrb[0].mxu0 %v1531
      %v1650 = vpop.f32.mrb[0].mxu0
      %v1651 = vadd.f32 0.0, %v1650
      %v1652 = vpop.f32.mrb[0].mxu0
      %v1653 = vpop.f32.mrb[0].mxu0
      %v1654 = vadd.f32 0.0, %v1653
      %v1655 = vpop.f32.mrb[0].mxu0
      %1656 = vmatprep.mubr.bf16.mxu0 0
      %1657 = vmatmul.mubr.bf16.gmra.mrb[0].mxu0 %v1534
      %v1658 = vpop.f32.mrb[0].mxu0
      %v1659 = vadd.f32 0.0, %v1658
      %v1660 = vpop.f32.mrb[0].mxu0
      %v1661 = vpop.f32.mrb[0].mxu0
      %v1662 = vadd.f32 0.0, %v1661
      %v1663 = vpop.f32.mrb[0].mxu0
      %1664 = vmatprep.mubr.bf16.mxu0 0
      %1665 = vmatmul.mubr.bf16.gmra.mrb[0].mxu0 %v1537
      %v1666 = vpop.f32.mrb[0].mxu0
      %v1667 = vadd.f32 0.0, %v1666
      %v1668 = vpop.f32.mrb[0].mxu0
      %v1669 = vpop.f32.mrb[0].mxu0
      %v1670 = vadd.f32 0.0, %v1669
      %v1671 = vpop.f32.mrb[0].mxu0
      %1672 = vmatprep.mubr.bf16.mxu0 0
      %1673 = vmatmul.mubr.bf16.gmra.mrb[0].mxu0 %v1540
      %v1674 = vpop.f32.mrb[0].mxu0
      %v1675 = vadd.f32 0.0, %v1674
      %v1676 = vpop.f32.mrb[0].mxu0
      %v1677 = vpop.f32.mrb[0].mxu0
      %v1678 = vadd.f32 0.0, %v1677
      %v1679 = vpop.f32.mrb[0].mxu0
      %1680 = vmatprep.mubr.bf16.mxu0 0
      %1681 = vmatmul.mubr.bf16.gmra.mrb[0].mxu0 %v1543
      %v1682 = vpop.f32.mrb[0].mxu0
      %v1683 = vadd.f32 0.0, %v1682
      %v1684 = vpop.f32.mrb[0].mxu0
      %v1685 = vpop.f32.mrb[0].mxu0
      %v1686 = vadd.f32 0.0, %v1685
      %v1687 = vpop.f32.mrb[0].mxu0
      %1688 = vmatprep.mubr.bf16.mxu0 0
      %1689 = vmatmul.mubr.bf16.gmra.mrb[0].mxu0 %v1546
      %v1690 = vpop.f32.mrb[0].mxu0
      %v1691 = vadd.f32 0.0, %v1690
      %v1692 = vpop.f32.mrb[0].mxu0
      %v1693 = vpop.f32.mrb[0].mxu0
      %v1694 = vadd.f32 0.0, %v1693
      %v1695 = vpop.f32.mrb[0].mxu0
      %1696 = vmatprep.mubr.bf16.mxu0 0
      %1697 = vmatmul.mubr.bf16.gmra.mrb[0].mxu0 %v1549
      %v1698 = vpop.f32.mrb[0].mxu0
      %v1699 = vadd.f32 0.0, %v1698
      %v1700 = vpop.f32.mrb[0].mxu0
      %v1701 = vpop.f32.mrb[0].mxu0
      %v1702 = vadd.f32 0.0, %v1701
      %v1703 = vpop.f32.mrb[0].mxu0
      %1704 = vmatprep.mubr.bf16.mxu0 0
      %1705 = vmatmul.mubr.bf16.gmra.mrb[0].mxu0 %v1552
      %v1706 = vpop.f32.mrb[0].mxu0
      %v1707 = vadd.f32 0.0, %v1706
      %v1708 = vpop.f32.mrb[0].mxu0
      %v1709 = vpop.f32.mrb[0].mxu0
      %v1710 = vadd.f32 0.0, %v1709
      %v1711 = vpop.f32.mrb[0].mxu0
      %1712 = vmatprep.mubr.bf16.mxu0 0
      %1713 = vmatmul.mubr.bf16.gmra.mrb[0].mxu0 %v1555
      %v1714 = vpop.f32.mrb[0].mxu0
      %v1715 = vadd.f32 0.0, %v1714
      %v1716 = vpop.f32.mrb[0].mxu0
      %v1717 = vpop.f32.mrb[0].mxu0
      %v1718 = vadd.f32 0.0, %v1717
      %v1719 = vpop.f32.mrb[0].mxu0
      %1720 = vdwg.mxu0
      %v1721 = vadd.f32 %v1427, %v1595
      %v1722 = vadd.f32 %v1428, %v1598
      %v1723 = vadd.f32 %v1429, %v1603
      %v1724 = vadd.f32 %v1430, %v1606
      %v1725 = vadd.f32 %v1431, %v1611
      %v1726 = vadd.f32 %v1432, %v1614
      %v1727 = vadd.f32 %v1433, %v1619
      %v1728 = vadd.f32 %v1434, %v1622
      %v1729 = vadd.f32 %v1435, %v1627
      %v1730 = vadd.f32 %v1436, %v1630
      %v1731 = vadd.f32 %v1437, %v1635
      %v1732 = vadd.f32 %v1438, %v1638
      %v1733 = vadd.f32 %v1439, %v1643
      %v1734 = vadd.f32 %v1440, %v1646
      %v1735 = vadd.f32 %v1441, %v1651
      %v1736 = vadd.f32 %v1442, %v1654
      %v1737 = vadd.f32 %v1443, %v1659
      %v1738 = vadd.f32 %v1444, %v1662
      %v1739 = vadd.f32 %v1445, %v1667
      %v1740 = vadd.f32 %v1446, %v1670
      %v1741 = vadd.f32 %v1447, %v1675
      %v1742 = vadd.f32 %v1448, %v1678
      %v1743 = vadd.f32 %v1449, %v1683
      %v1744 = vadd.f32 %v1450, %v1686
      %v1745 = vadd.f32 %v1451, %v1691
      %v1746 = vadd.f32 %v1452, %v1694
      %v1747 = vadd.f32 %v1453, %v1699
      %v1748 = vadd.f32 %v1454, %v1702
      %v1749 = vadd.f32 %v1455, %v1707
      %v1750 = vadd.f32 %v1456, %v1710
      %v1751 = vadd.f32 %v1457, %v1715
      %v1752 = vadd.f32 %v1458, %v1718
      %v1753 = vld [vmem:[%s314 + $0x2] sm:$0xff]
      %v1754 = vld [vmem:[%s314 + $0xa] sm:$0xff]
      %v1755 = vld [vmem:[%s314 + $0x1a] sm:$0xff]
      %v1756 = vld [vmem:[%s314 + $0x22] sm:$0xff]
      %v1757 = vld [vmem:[%s314 + $0x32] sm:$0xff]
      %v1758 = vld [vmem:[%s314 + $0x3a] sm:$0xff]
      %v1759 = vld [vmem:[%s314 + $0x4a] sm:$0xff]
      %v1760 = vld [vmem:[%s314 + $0x52] sm:$0xff]
      %v1761 = vld [vmem:[%s314 + $0x62] sm:$0xff]
      %v1762 = vld [vmem:[%s314 + $0x6a] sm:$0xff]
      %v1763 = vld [vmem:[%s314 + $0x7a] sm:$0xff]
      %v1764 = vld [vmem:[%s314 + $0x82] sm:$0xff]
      %v1765 = vld [vmem:[%s314 + $0x92] sm:$0xff]
      %v1766 = vld [vmem:[%s314 + $0x9a] sm:$0xff]
      %v1767 = vld [vmem:[%s314 + $0xaa] sm:$0xff]
      %v1768 = vld [vmem:[%s314 + $0xb2] sm:$0xff]
      %v1769 = vld [vmem:[%s314 + $0xc2] sm:$0xff]
      %v1770 = vld [vmem:[%s314 + $0xca] sm:$0xff]
      %v1771 = vld [vmem:[%s314 + $0xda] sm:$0xff]
      %v1772 = vld [vmem:[%s314 + $0xe2] sm:$0xff]
      %v1773 = vld [vmem:[%s314 + $0xf2] sm:$0xff]
      %v1774 = vld [vmem:[%s314 + $0xfa] sm:$0xff]
      %v1775 = vld [vmem:[%s314 + $0x10a] sm:$0xff]
      %v1776 = vld [vmem:[%s314 + $0x112] sm:$0xff]
      %v1777 = vld [vmem:[%s314 + $0x122] sm:$0xff]
      %v1778 = vld [vmem:[%s314 + $0x12a] sm:$0xff]
      %v1779 = vld [vmem:[%s314 + $0x13a] sm:$0xff]
      %v1780 = vld [vmem:[%s314 + $0x142] sm:$0xff]
      %v1781 = vld [vmem:[%s314 + $0x152] sm:$0xff]
      %v1782 = vld [vmem:[%s314 + $0x15a] sm:$0xff]
      %v1783 = vld [vmem:[%s314 + $0x16a] sm:$0xff]
      %v1784 = vld [vmem:[%s314 + $0x172] sm:$0xff]
      %v1785 = vpack.c.bf16 %v1754, %v1753
      %v1786 = vpack.c.bf16 %v1756, %v1755
      %v1787 = vpack.c.bf16 %v1758, %v1757
      %v1788 = vpack.c.bf16 %v1760, %v1759
      %v1789 = vpack.c.bf16 %v1762, %v1761
      %v1790 = vpack.c.bf16 %v1764, %v1763
      %v1791 = vpack.c.bf16 %v1766, %v1765
      %v1792 = vpack.c.bf16 %v1768, %v1767
      %v1793 = vpack.c.bf16 %v1770, %v1769
      %v1794 = vpack.c.bf16 %v1772, %v1771
      %v1795 = vpack.c.bf16 %v1774, %v1773
      %v1796 = vpack.c.bf16 %v1776, %v1775
      %v1797 = vpack.c.bf16 %v1778, %v1777
      %v1798 = vpack.c.bf16 %v1780, %v1779
      %v1799 = vpack.c.bf16 %v1782, %v1781
      %v1800 = vpack.c.bf16 %v1784, %v1783
      %s1801 = scalar_lea.vmem %s1, 10
      %v1802 = vld [vmem:[%s1801] sm:$0x3]
      %v1804 = vsel %vm172, %v1785, 0
      %v1807 = vsel %vm172, %v1786, 0
      %v1810 = vsel %vm172, %v1787, 0
      %v1813 = vsel %vm172, %v1788, 0
      %v1816 = vsel %vm172, %v1789, 0
      %v1819 = vsel %vm172, %v1790, 0
      %v1822 = vsel %vm172, %v1791, 0
      %v1825 = vsel %vm172, %v1792, 0
      %v1828 = vsel %vm172, %v1793, 0
      %v1831 = vsel %vm172, %v1794, 0
      %v1834 = vsel %vm172, %v1795, 0
      %v1837 = vsel %vm172, %v1796, 0
      %v1840 = vsel %vm172, %v1797, 0
      %v1843 = vsel %vm172, %v1798, 0
      %v1846 = vsel %vm172, %v1799, 0
      %v1849 = vsel %vm172, %v1800, 0
      %v1852 = vsel %vm494, %v1802, 0
      %1854 = vmatprep.subr.bf16.mxu0 0
      %1855 = vmatpush1.bf16.msra.mxu0 %v1852
      %1856 = vmatprep.subr.bf16.mxu0 0
      %1857 = vmatpush1.bf16.msra.mxu0 0
      %1858 = vmatprep.subr.bf16.mxu0 0
      %1859 = vmatpush1.bf16.msra.mxu0 0
      %1860 = vmatprep.subr.bf16.mxu0 0
      %1861 = vmatpush1.bf16.msra.mxu0 0
      %1862 = vmatprep.subr.bf16.mxu0 0
      %1863 = vmatpush1.bf16.msra.mxu0 0
      %1864 = vmatprep.subr.bf16.mxu0 0
      %1865 = vmatpush1.bf16.msra.mxu0 0
      %1866 = vmatprep.subr.bf16.mxu0 0
      %1867 = vmatpush1.bf16.msra.mxu0 0
      %1868 = vmatprep.subr.bf16.mxu0 0
      %1869 = vmatpush1.bf16.msra.mxu0 0
      %1870 = vmatprep.subr.bf16.mxu0 0
      %1871 = vmatpush1.bf16.msra.mxu0 0
      %1872 = vmatprep.subr.bf16.mxu0 0
      %1873 = vmatpush1.bf16.msra.mxu0 0
      %1874 = vmatprep.subr.bf16.mxu0 0
      %1875 = vmatpush1.bf16.msra.mxu0 0
      %1876 = vmatprep.subr.bf16.mxu0 0
      %1877 = vmatpush1.bf16.msra.mxu0 0
      %1878 = vmatprep.subr.bf16.mxu0 0
      %1879 = vmatpush1.bf16.msra.mxu0 0
      %1880 = vmatprep.subr.bf16.mxu0 0
      %1881 = vmatpush1.bf16.msra.mxu0 0
      %1882 = vmatprep.subr.bf16.mxu0 0
      %1883 = vmatpush1.bf16.msra.mxu0 0
      %1884 = vmatprep.subr.bf16.mxu0 0
      %1885 = vmatpush1.bf16.msra.mxu0 0
      %1886 = vmatprep.mubr.bf16.mxu0 0
      %1887 = vmatmul.mubr.bf16.gmra.mrb[0].mxu0 %v1804
      %v1888 = vpop.f32.mrb[0].mxu0
      %v1889 = vadd.f32 0.0, %v1888
      %v1890 = vpop.f32.mrb[0].mxu0
      %v1891 = vpop.f32.mrb[0].mxu0
      %v1892 = vadd.f32 0.0, %v1891
      %v1893 = vpop.f32.mrb[0].mxu0
      %1894 = vmatprep.mubr.bf16.mxu0 0
      %1895 = vmatmul.mubr.bf16.gmra.mrb[0].mxu0 %v1807
      %v1896 = vpop.f32.mrb[0].mxu0
      %v1897 = vadd.f32 0.0, %v1896
      %v1898 = vpop.f32.mrb[0].mxu0
      %v1899 = vpop.f32.mrb[0].mxu0
      %v1900 = vadd.f32 0.0, %v1899
      %v1901 = vpop.f32.mrb[0].mxu0
      %1902 = vmatprep.mubr.bf16.mxu0 0
      %1903 = vmatmul.mubr.bf16.gmra.mrb[0].mxu0 %v1810
      %v1904 = vpop.f32.mrb[0].mxu0
      %v1905 = vadd.f32 0.0, %v1904
      %v1906 = vpop.f32.mrb[0].mxu0
      %v1907 = vpop.f32.mrb[0].mxu0
      %v1908 = vadd.f32 0.0, %v1907
      %v1909 = vpop.f32.mrb[0].mxu0
      %1910 = vmatprep.mubr.bf16.mxu0 0
      %1911 = vmatmul.mubr.bf16.gmra.mrb[0].mxu0 %v1813
      %v1912 = vpop.f32.mrb[0].mxu0
      %v1913 = vadd.f32 0.0, %v1912
      %v1914 = vpop.f32.mrb[0].mxu0
      %v1915 = vpop.f32.mrb[0].mxu0
      %v1916 = vadd.f32 0.0, %v1915
      %v1917 = vpop.f32.mrb[0].mxu0
      %1918 = vmatprep.mubr.bf16.mxu0 0
      %1919 = vmatmul.mubr.bf16.gmra.mrb[0].mxu0 %v1816
      %v1920 = vpop.f32.mrb[0].mxu0
      %v1921 = vadd.f32 0.0, %v1920
      %v1922 = vpop.f32.mrb[0].mxu0
      %v1923 = vpop.f32.mrb[0].mxu0
      %v1924 = vadd.f32 0.0, %v1923
      %v1925 = vpop.f32.mrb[0].mxu0
      %1926 = vmatprep.mubr.bf16.mxu0 0
      %1927 = vmatmul.mubr.bf16.gmra.mrb[0].mxu0 %v1819
      %v1928 = vpop.f32.mrb[0].mxu0
      %v1929 = vadd.f32 0.0, %v1928
      %v1930 = vpop.f32.mrb[0].mxu0
      %v1931 = vpop.f32.mrb[0].mxu0
      %v1932 = vadd.f32 0.0, %v1931
      %v1933 = vpop.f32.mrb[0].mxu0
      %1934 = vmatprep.mubr.bf16.mxu0 0
      %1935 = vmatmul.mubr.bf16.gmra.mrb[0].mxu0 %v1822
      %v1936 = vpop.f32.mrb[0].mxu0
      %v1937 = vadd.f32 0.0, %v1936
      %v1938 = vpop.f32.mrb[0].mxu0
      %v1939 = vpop.f32.mrb[0].mxu0
      %v1940 = vadd.f32 0.0, %v1939
      %v1941 = vpop.f32.mrb[0].mxu0
      %1942 = vmatprep.mubr.bf16.mxu0 0
      %1943 = vmatmul.mubr.bf16.gmra.mrb[0].mxu0 %v1825
      %v1944 = vpop.f32.mrb[0].mxu0
      %v1945 = vadd.f32 0.0, %v1944
      %v1946 = vpop.f32.mrb[0].mxu0
      %v1947 = vpop.f32.mrb[0].mxu0
      %v1948 = vadd.f32 0.0, %v1947
      %v1949 = vpop.f32.mrb[0].mxu0
      %1950 = vmatprep.mubr.bf16.mxu0 0
      %1951 = vmatmul.mubr.bf16.gmra.mrb[0].mxu0 %v1828
      %v1952 = vpop.f32.mrb[0].mxu0
      %v1953 = vadd.f32 0.0, %v1952
      %v1954 = vpop.f32.mrb[0].mxu0
      %v1955 = vpop.f32.mrb[0].mxu0
      %v1956 = vadd.f32 0.0, %v1955
      %v1957 = vpop.f32.mrb[0].mxu0
      %1958 = vmatprep.mubr.bf16.mxu0 0
      %1959 = vmatmul.mubr.bf16.gmra.mrb[0].mxu0 %v1831
      %v1960 = vpop.f32.mrb[0].mxu0
      %v1961 = vadd.f32 0.0, %v1960
      %v1962 = vpop.f32.mrb[0].mxu0
      %v1963 = vpop.f32.mrb[0].mxu0
      %v1964 = vadd.f32 0.0, %v1963
      %v1965 = vpop.f32.mrb[0].mxu0
      %1966 = vmatprep.mubr.bf16.mxu0 0
      %1967 = vmatmul.mubr.bf16.gmra.mrb[0].mxu0 %v1834
      %v1968 = vpop.f32.mrb[0].mxu0
      %v1969 = vadd.f32 0.0, %v1968
      %v1970 = vpop.f32.mrb[0].mxu0
      %v1971 = vpop.f32.mrb[0].mxu0
      %v1972 = vadd.f32 0.0, %v1971
      %v1973 = vpop.f32.mrb[0].mxu0
      %1974 = vmatprep.mubr.bf16.mxu0 0
      %1975 = vmatmul.mubr.bf16.gmra.mrb[0].mxu0 %v1837
      %v1976 = vpop.f32.mrb[0].mxu0
      %v1977 = vadd.f32 0.0, %v1976
      %v1978 = vpop.f32.mrb[0].mxu0
      %v1979 = vpop.f32.mrb[0].mxu0
      %v1980 = vadd.f32 0.0, %v1979
      %v1981 = vpop.f32.mrb[0].mxu0
      %1982 = vmatprep.mubr.bf16.mxu0 0
      %1983 = vmatmul.mubr.bf16.gmra.mrb[0].mxu0 %v1840
      %v1984 = vpop.f32.mrb[0].mxu0
      %v1985 = vadd.f32 0.0, %v1984
      %v1986 = vpop.f32.mrb[0].mxu0
      %v1987 = vpop.f32.mrb[0].mxu0
      %v1988 = vadd.f32 0.0, %v1987
      %v1989 = vpop.f32.mrb[0].mxu0
      %1990 = vmatprep.mubr.bf16.mxu0 0
      %1991 = vmatmul.mubr.bf16.gmra.mrb[0].mxu0 %v1843
      %v1992 = vpop.f32.mrb[0].mxu0
      %v1993 = vadd.f32 0.0, %v1992
      %v1994 = vpop.f32.mrb[0].mxu0
      %v1995 = vpop.f32.mrb[0].mxu0
      %v1996 = vadd.f32 0.0, %v1995
      %v1997 = vpop.f32.mrb[0].mxu0
      %1998 = vmatprep.mubr.bf16.mxu0 0
      %1999 = vmatmul.mubr.bf16.gmra.mrb[0].mxu0 %v1846
      %v2000 = vpop.f32.mrb[0].mxu0
      %v2001 = vadd.f32 0.0, %v2000
      %v2002 = vpop.f32.mrb[0].mxu0
      %v2003 = vpop.f32.mrb[0].mxu0
      %v2004 = vadd.f32 0.0, %v2003
      %v2005 = vpop.f32.mrb[0].mxu0
      %2006 = vmatprep.mubr.bf16.mxu0 0
      %2007 = vmatmul.mubr.bf16.gmra.mrb[0].mxu0 %v1849
      %v2008 = vpop.f32.mrb[0].mxu0
      %v2009 = vadd.f32 0.0, %v2008
      %v2010 = vpop.f32.mrb[0].mxu0
      %v2011 = vpop.f32.mrb[0].mxu0
      %v2012 = vadd.f32 0.0, %v2011
      %v2013 = vpop.f32.mrb[0].mxu0
      %2014 = vdwg.mxu0
      %v2015 = vadd.f32 %v1721, %v1889
      %v2016 = vadd.f32 %v1722, %v1892
      %v2017 = vadd.f32 %v1723, %v1897
      %v2018 = vadd.f32 %v1724, %v1900
      %v2019 = vadd.f32 %v1725, %v1905
      %v2020 = vadd.f32 %v1726, %v1908
      %v2021 = vadd.f32 %v1727, %v1913
      %v2022 = vadd.f32 %v1728, %v1916
      %v2023 = vadd.f32 %v1729, %v1921
      %v2024 = vadd.f32 %v1730, %v1924
      %v2025 = vadd.f32 %v1731, %v1929
      %v2026 = vadd.f32 %v1732, %v1932
      %v2027 = vadd.f32 %v1733, %v1937
      %v2028 = vadd.f32 %v1734, %v1940
      %v2029 = vadd.f32 %v1735, %v1945
      %v2030 = vadd.f32 %v1736, %v1948
      %v2031 = vadd.f32 %v1737, %v1953
      %v2032 = vadd.f32 %v1738, %v1956
      %v2033 = vadd.f32 %v1739, %v1961
      %v2034 = vadd.f32 %v1740, %v1964
      %v2035 = vadd.f32 %v1741, %v1969
      %v2036 = vadd.f32 %v1742, %v1972
      %v2037 = vadd.f32 %v1743, %v1977
      %v2038 = vadd.f32 %v1744, %v1980
      %v2039 = vadd.f32 %v1745, %v1985
      %v2040 = vadd.f32 %v1746, %v1988
      %v2041 = vadd.f32 %v1747, %v1993
      %v2042 = vadd.f32 %v1748, %v1996
      %v2043 = vadd.f32 %v1749, %v2001
      %v2044 = vadd.f32 %v1750, %v2004
      %v2045 = vadd.f32 %v1751, %v2009
      %v2046 = vadd.f32 %v1752, %v2012
      %s2047 = scalar_lea.vmem [#allocation2], 48
      %v2048 = vld [vmem:[%s2047] sm:$0xff]
      %v2049 = vld [vmem:[%s2047 + $0x8] sm:$0xff]
      %v2050 = vld [vmem:[%s2047 + $0x18] sm:$0xff]
      %v2051 = vld [vmem:[%s2047 + $0x20] sm:$0xff]
      %v2052 = vld [vmem:[%s2047 + $0x30] sm:$0xff]
      %v2053 = vld [vmem:[%s2047 + $0x38] sm:$0xff]
      %v2054 = vld [vmem:[%s2047 + $0x48] sm:$0xff]
      %v2055 = vld [vmem:[%s2047 + $0x50] sm:$0xff]
      %v2056 = vld [vmem:[%s2047 + $0x60] sm:$0xff]
      %v2057 = vld [vmem:[%s2047 + $0x68] sm:$0xff]
      %v2058 = vld [vmem:[%s2047 + $0x78] sm:$0xff]
      %v2059 = vld [vmem:[%s2047 + $0x80] sm:$0xff]
      %v2060 = vld [vmem:[%s2047 + $0x90] sm:$0xff]
      %v2061 = vld [vmem:[%s2047 + $0x98] sm:$0xff]
      %v2062 = vld [vmem:[%s2047 + $0xa8] sm:$0xff]
      %v2063 = vld [vmem:[%s2047 + $0xb0] sm:$0xff]
      %v2064 = vld [vmem:[%s2047 + $0xc0] sm:$0xff]
      %v2065 = vld [vmem:[%s2047 + $0xc8] sm:$0xff]
      %v2066 = vld [vmem:[%s2047 + $0xd8] sm:$0xff]
      %v2067 = vld [vmem:[%s2047 + $0xe0] sm:$0xff]
      %v2068 = vld [vmem:[%s2047 + $0xf0] sm:$0xff]
      %v2069 = vld [vmem:[%s2047 + $0xf8] sm:$0xff]
      %v2070 = vld [vmem:[%s2047 + $0x108] sm:$0xff]
      %v2071 = vld [vmem:[%s2047 + $0x110] sm:$0xff]
      %v2072 = vld [vmem:[%s2047 + $0x120] sm:$0xff]
      %v2073 = vld [vmem:[%s2047 + $0x128] sm:$0xff]
      %v2074 = vld [vmem:[%s2047 + $0x138] sm:$0xff]
      %v2075 = vld [vmem:[%s2047 + $0x140] sm:$0xff]
      %v2076 = vld [vmem:[%s2047 + $0x150] sm:$0xff]
      %v2077 = vld [vmem:[%s2047 + $0x158] sm:$0xff]
      %v2078 = vld [vmem:[%s2047 + $0x168] sm:$0xff]
      %v2079 = vld [vmem:[%s2047 + $0x170] sm:$0xff]
      %v2080 = vpack.c.bf16 %v2049, %v2048
      %v2081 = vpack.c.bf16 %v2051, %v2050
      %v2082 = vpack.c.bf16 %v2053, %v2052
      %v2083 = vpack.c.bf16 %v2055, %v2054
      %v2084 = vpack.c.bf16 %v2057, %v2056
      %v2085 = vpack.c.bf16 %v2059, %v2058
      %v2086 = vpack.c.bf16 %v2061, %v2060
      %v2087 = vpack.c.bf16 %v2063, %v2062
      %v2088 = vpack.c.bf16 %v2065, %v2064
      %v2089 = vpack.c.bf16 %v2067, %v2066
      %v2090 = vpack.c.bf16 %v2069, %v2068
      %v2091 = vpack.c.bf16 %v2071, %v2070
      %v2092 = vpack.c.bf16 %v2073, %v2072
      %v2093 = vpack.c.bf16 %v2075, %v2074
      %v2094 = vpack.c.bf16 %v2077, %v2076
      %v2095 = vpack.c.bf16 %v2079, %v2078
      %s2096 = scalar_lea.vmem %s1, 12
      %v2097 = vld [vmem:[%s2096] sm:$0x3]
      %v2099 = vsel %vm172, %v2080, 0
      %v2102 = vsel %vm172, %v2081, 0
      %v2105 = vsel %vm172, %v2082, 0
      %v2108 = vsel %vm172, %v2083, 0
      %v2111 = vsel %vm172, %v2084, 0
      %v2114 = vsel %vm172, %v2085, 0
      %v2117 = vsel %vm172, %v2086, 0
      %v2120 = vsel %vm172, %v2087, 0
      %v2123 = vsel %vm172, %v2088, 0
      %v2126 = vsel %vm172, %v2089, 0
      %v2129 = vsel %vm172, %v2090, 0
      %v2132 = vsel %vm172, %v2091, 0
      %v2135 = vsel %vm172, %v2092, 0
      %v2138 = vsel %vm172, %v2093, 0
      %v2141 = vsel %vm172, %v2094, 0
      %v2144 = vsel %vm172, %v2095, 0
      %v2147 = vsel %vm494, %v2097, 0
      %2149 = vmatprep.subr.bf16.mxu0 0
      %2150 = vmatpush1.bf16.msra.mxu0 %v2147
      %2151 = vmatprep.subr.bf16.mxu0 0
      %2152 = vmatpush1.bf16.msra.mxu0 0
      %2153 = vmatprep.subr.bf16.mxu0 0
      %2154 = vmatpush1.bf16.msra.mxu0 0
      %2155 = vmatprep.subr.bf16.mxu0 0
      %2156 = vmatpush1.bf16.msra.mxu0 0
      %2157 = vmatprep.subr.bf16.mxu0 0
      %2158 = vmatpush1.bf16.msra.mxu0 0
      %2159 = vmatprep.subr.bf16.mxu0 0
      %2160 = vmatpush1.bf16.msra.mxu0 0
      %2161 = vmatprep.subr.bf16.mxu0 0
      %2162 = vmatpush1.bf16.msra.mxu0 0
      %2163 = vmatprep.subr.bf16.mxu0 0
      %2164 = vmatpush1.bf16.msra.mxu0 0
      %2165 = vmatprep.subr.bf16.mxu0 0
      %2166 = vmatpush1.bf16.msra.mxu0 0
      %2167 = vmatprep.subr.bf16.mxu0 0
      %2168 = vmatpush1.bf16.msra.mxu0 0
      %2169 = vmatprep.subr.bf16.mxu0 0
      %2170 = vmatpush1.bf16.msra.mxu0 0
      %2171 = vmatprep.subr.bf16.mxu0 0
      %2172 = vmatpush1.bf16.msra.mxu0 0
      %2173 = vmatprep.subr.bf16.mxu0 0
      %2174 = vmatpush1.bf16.msra.mxu0 0
      %2175 = vmatprep.subr.bf16.mxu0 0
      %2176 = vmatpush1.bf16.msra.mxu0 0
      %2177 = vmatprep.subr.bf16.mxu0 0
      %2178 = vmatpush1.bf16.msra.mxu0 0
      %2179 = vmatprep.subr.bf16.mxu0 0
      %2180 = vmatpush1.bf16.msra.mxu0 0
      %2181 = vmatprep.mubr.bf16.mxu0 0
      %2182 = vmatmul.mubr.bf16.gmra.mrb[0].mxu0 %v2099
      %v2183 = vpop.f32.mrb[0].mxu0
      %v2184 = vadd.f32 0.0, %v2183
      %v2185 = vpop.f32.mrb[0].mxu0
      %v2186 = vpop.f32.mrb[0].mxu0
      %v2187 = vadd.f32 0.0, %v2186
      %v2188 = vpop.f32.mrb[0].mxu0
      %2189 = vmatprep.mubr.bf16.mxu0 0
      %2190 = vmatmul.mubr.bf16.gmra.mrb[0].mxu0 %v2102
      %v2191 = vpop.f32.mrb[0].mxu0
      %v2192 = vadd.f32 0.0, %v2191
      %v2193 = vpop.f32.mrb[0].mxu0
      %v2194 = vpop.f32.mrb[0].mxu0
      %v2195 = vadd.f32 0.0, %v2194
      %v2196 = vpop.f32.mrb[0].mxu0
      %2197 = vmatprep.mubr.bf16.mxu0 0
      %2198 = vmatmul.mubr.bf16.gmra.mrb[0].mxu0 %v2105
      %v2199 = vpop.f32.mrb[0].mxu0
      %v2200 = vadd.f32 0.0, %v2199
      %v2201 = vpop.f32.mrb[0].mxu0
      %v2202 = vpop.f32.mrb[0].mxu0
      %v2203 = vadd.f32 0.0, %v2202
      %v2204 = vpop.f32.mrb[0].mxu0
      %2205 = vmatprep.mubr.bf16.mxu0 0
      %2206 = vmatmul.mubr.bf16.gmra.mrb[0].mxu0 %v2108
      %v2207 = vpop.f32.mrb[0].mxu0
      %v2208 = vadd.f32 0.0, %v2207
      %v2209 = vpop.f32.mrb[0].mxu0
      %v2210 = vpop.f32.mrb[0].mxu0
      %v2211 = vadd.f32 0.0, %v2210
      %v2212 = vpop.f32.mrb[0].mxu0
      %2213 = vmatprep.mubr.bf16.mxu0 0
      %2214 = vmatmul.mubr.bf16.gmra.mrb[0].mxu0 %v2111
      %v2215 = vpop.f32.mrb[0].mxu0
      %v2216 = vadd.f32 0.0, %v2215
      %v2217 = vpop.f32.mrb[0].mxu0
      %v2218 = vpop.f32.mrb[0].mxu0
      %v2219 = vadd.f32 0.0, %v2218
      %v2220 = vpop.f32.mrb[0].mxu0
      %2221 = vmatprep.mubr.bf16.mxu0 0
      %2222 = vmatmul.mubr.bf16.gmra.mrb[0].mxu0 %v2114
      %v2223 = vpop.f32.mrb[0].mxu0
      %v2224 = vadd.f32 0.0, %v2223
      %v2225 = vpop.f32.mrb[0].mxu0
      %v2226 = vpop.f32.mrb[0].mxu0
      %v2227 = vadd.f32 0.0, %v2226
      %v2228 = vpop.f32.mrb[0].mxu0
      %2229 = vmatprep.mubr.bf16.mxu0 0
      %2230 = vmatmul.mubr.bf16.gmra.mrb[0].mxu0 %v2117
      %v2231 = vpop.f32.mrb[0].mxu0
      %v2232 = vadd.f32 0.0, %v2231
      %v2233 = vpop.f32.mrb[0].mxu0
      %v2234 = vpop.f32.mrb[0].mxu0
      %v2235 = vadd.f32 0.0, %v2234
      %v2236 = vpop.f32.mrb[0].mxu0
      %2237 = vmatprep.mubr.bf16.mxu0 0
      %2238 = vmatmul.mubr.bf16.gmra.mrb[0].mxu0 %v2120
      %v2239 = vpop.f32.mrb[0].mxu0
      %v2240 = vadd.f32 0.0, %v2239
      %v2241 = vpop.f32.mrb[0].mxu0
      %v2242 = vpop.f32.mrb[0].mxu0
      %v2243 = vadd.f32 0.0, %v2242
      %v2244 = vpop.f32.mrb[0].mxu0
      %2245 = vmatprep.mubr.bf16.mxu0 0
      %2246 = vmatmul.mubr.bf16.gmra.mrb[0].mxu0 %v2123
      %v2247 = vpop.f32.mrb[0].mxu0
      %v2248 = vadd.f32 0.0, %v2247
      %v2249 = vpop.f32.mrb[0].mxu0
      %v2250 = vpop.f32.mrb[0].mxu0
      %v2251 = vadd.f32 0.0, %v2250
      %v2252 = vpop.f32.mrb[0].mxu0
      %2253 = vmatprep.mubr.bf16.mxu0 0
      %2254 = vmatmul.mubr.bf16.gmra.mrb[0].mxu0 %v2126
      %v2255 = vpop.f32.mrb[0].mxu0
      %v2256 = vadd.f32 0.0, %v2255
      %v2257 = vpop.f32.mrb[0].mxu0
      %v2258 = vpop.f32.mrb[0].mxu0
      %v2259 = vadd.f32 0.0, %v2258
      %v2260 = vpop.f32.mrb[0].mxu0
      %2261 = vmatprep.mubr.bf16.mxu0 0
      %2262 = vmatmul.mubr.bf16.gmra.mrb[0].mxu0 %v2129
      %v2263 = vpop.f32.mrb[0].mxu0
      %v2264 = vadd.f32 0.0, %v2263
      %v2265 = vpop.f32.mrb[0].mxu0
      %v2266 = vpop.f32.mrb[0].mxu0
      %v2267 = vadd.f32 0.0, %v2266
      %v2268 = vpop.f32.mrb[0].mxu0
      %2269 = vmatprep.mubr.bf16.mxu0 0
      %2270 = vmatmul.mubr.bf16.gmra.mrb[0].mxu0 %v2132
      %v2271 = vpop.f32.mrb[0].mxu0
      %v2272 = vadd.f32 0.0, %v2271
      %v2273 = vpop.f32.mrb[0].mxu0
      %v2274 = vpop.f32.mrb[0].mxu0
      %v2275 = vadd.f32 0.0, %v2274
      %v2276 = vpop.f32.mrb[0].mxu0
      %2277 = vmatprep.mubr.bf16.mxu0 0
      %2278 = vmatmul.mubr.bf16.gmra.mrb[0].mxu0 %v2135
      %v2279 = vpop.f32.mrb[0].mxu0
      %v2280 = vadd.f32 0.0, %v2279
      %v2281 = vpop.f32.mrb[0].mxu0
      %v2282 = vpop.f32.mrb[0].mxu0
      %v2283 = vadd.f32 0.0, %v2282
      %v2284 = vpop.f32.mrb[0].mxu0
      %2285 = vmatprep.mubr.bf16.mxu0 0
      %2286 = vmatmul.mubr.bf16.gmra.mrb[0].mxu0 %v2138
      %v2287 = vpop.f32.mrb[0].mxu0
      %v2288 = vadd.f32 0.0, %v2287
      %v2289 = vpop.f32.mrb[0].mxu0
      %v2290 = vpop.f32.mrb[0].mxu0
      %v2291 = vadd.f32 0.0, %v2290
      %v2292 = vpop.f32.mrb[0].mxu0
      %2293 = vmatprep.mubr.bf16.mxu0 0
      %2294 = vmatmul.mubr.bf16.gmra.mrb[0].mxu0 %v2141
      %v2295 = vpop.f32.mrb[0].mxu0
      %v2296 = vadd.f32 0.0, %v2295
      %v2297 = vpop.f32.mrb[0].mxu0
      %v2298 = vpop.f32.mrb[0].mxu0
      %v2299 = vadd.f32 0.0, %v2298
      %v2300 = vpop.f32.mrb[0].mxu0
      %2301 = vmatprep.mubr.bf16.mxu0 0
      %2302 = vmatmul.mubr.bf16.gmra.mrb[0].mxu0 %v2144
      %v2303 = vpop.f32.mrb[0].mxu0
      %v2304 = vadd.f32 0.0, %v2303
      %v2305 = vpop.f32.mrb[0].mxu0
      %v2306 = vpop.f32.mrb[0].mxu0
      %v2307 = vadd.f32 0.0, %v2306
      %v2308 = vpop.f32.mrb[0].mxu0
      %2309 = vdwg.mxu0
      %v2310 = vadd.f32 %v2015, %v2184
      %v2311 = vadd.f32 %v2016, %v2187
      %v2312 = vadd.f32 %v2017, %v2192
      %v2313 = vadd.f32 %v2018, %v2195
      %v2314 = vadd.f32 %v2019, %v2200
      %v2315 = vadd.f32 %v2020, %v2203
      %v2316 = vadd.f32 %v2021, %v2208
      %v2317 = vadd.f32 %v2022, %v2211
      %v2318 = vadd.f32 %v2023, %v2216
      %v2319 = vadd.f32 %v2024, %v2219
      %v2320 = vadd.f32 %v2025, %v2224
      %v2321 = vadd.f32 %v2026, %v2227
      %v2322 = vadd.f32 %v2027, %v2232
      %v2323 = vadd.f32 %v2028, %v2235
      %v2324 = vadd.f32 %v2029, %v2240
      %v2325 = vadd.f32 %v2030, %v2243
      %v2326 = vadd.f32 %v2031, %v2248
      %v2327 = vadd.f32 %v2032, %v2251
      %v2328 = vadd.f32 %v2033, %v2256
      %v2329 = vadd.f32 %v2034, %v2259
      %v2330 = vadd.f32 %v2035, %v2264
      %v2331 = vadd.f32 %v2036, %v2267
      %v2332 = vadd.f32 %v2037, %v2272
      %v2333 = vadd.f32 %v2038, %v2275
      %v2334 = vadd.f32 %v2039, %v2280
      %v2335 = vadd.f32 %v2040, %v2283
      %v2336 = vadd.f32 %v2041, %v2288
      %v2337 = vadd.f32 %v2042, %v2291
      %v2338 = vadd.f32 %v2043, %v2296
      %v2339 = vadd.f32 %v2044, %v2299
      %v2340 = vadd.f32 %v2045, %v2304
      %v2341 = vadd.f32 %v2046, %v2307
      %v2342 = vld [vmem:[%s2047 + $0x1] sm:$0xff]
      %v2343 = vld [vmem:[%s2047 + $0x9] sm:$0xff]
      %v2344 = vld [vmem:[%s2047 + $0x19] sm:$0xff]
      %v2345 = vld [vmem:[%s2047 + $0x21] sm:$0xff]
      %v2346 = vld [vmem:[%s2047 + $0x31] sm:$0xff]
      %v2347 = vld [vmem:[%s2047 + $0x39] sm:$0xff]
      %v2348 = vld [vmem:[%s2047 + $0x49] sm:$0xff]
      %v2349 = vld [vmem:[%s2047 + $0x51] sm:$0xff]
      %v2350 = vld [vmem:[%s2047 + $0x61] sm:$0xff]
      %v2351 = vld [vmem:[%s2047 + $0x69] sm:$0xff]
      %v2352 = vld [vmem:[%s2047 + $0x79] sm:$0xff]
      %v2353 = vld [vmem:[%s2047 + $0x81] sm:$0xff]
      %v2354 = vld [vmem:[%s2047 + $0x91] sm:$0xff]
      %v2355 = vld [vmem:[%s2047 + $0x99] sm:$0xff]
      %v2356 = vld [vmem:[%s2047 + $0xa9] sm:$0xff]
      %v2357 = vld [vmem:[%s2047 + $0xb1] sm:$0xff]
      %v2358 = vld [vmem:[%s2047 + $0xc1] sm:$0xff]
      %v2359 = vld [vmem:[%s2047 + $0xc9] sm:$0xff]
      %v2360 = vld [vmem:[%s2047 + $0xd9] sm:$0xff]
      %v2361 = vld [vmem:[%s2047 + $0xe1] sm:$0xff]
      %v2362 = vld [vmem:[%s2047 + $0xf1] sm:$0xff]
      %v2363 = vld [vmem:[%s2047 + $0xf9] sm:$0xff]
      %v2364 = vld [vmem:[%s2047 + $0x109] sm:$0xff]
      %v2365 = vld [vmem:[%s2047 + $0x111] sm:$0xff]
      %v2366 = vld [vmem:[%s2047 + $0x121] sm:$0xff]
      %v2367 = vld [vmem:[%s2047 + $0x129] sm:$0xff]
      %v2368 = vld [vmem:[%s2047 + $0x139] sm:$0xff]
      %v2369 = vld [vmem:[%s2047 + $0x141] sm:$0xff]
      %v2370 = vld [vmem:[%s2047 + $0x151] sm:$0xff]
      %v2371 = vld [vmem:[%s2047 + $0x159] sm:$0xff]
      %v2372 = vld [vmem:[%s2047 + $0x169] sm:$0xff]
      %v2373 = vld [vmem:[%s2047 + $0x171] sm:$0xff]
      %v2374 = vpack.c.bf16 %v2343, %v2342
      %v2375 = vpack.c.bf16 %v2345, %v2344
      %v2376 = vpack.c.bf16 %v2347, %v2346
      %v2377 = vpack.c.bf16 %v2349, %v2348
      %v2378 = vpack.c.bf16 %v2351, %v2350
      %v2379 = vpack.c.bf16 %v2353, %v2352
      %v2380 = vpack.c.bf16 %v2355, %v2354
      %v2381 = vpack.c.bf16 %v2357, %v2356
      %v2382 = vpack.c.bf16 %v2359, %v2358
      %v2383 = vpack.c.bf16 %v2361, %v2360
      %v2384 = vpack.c.bf16 %v2363, %v2362
      %v2385 = vpack.c.bf16 %v2365, %v2364
      %v2386 = vpack.c.bf16 %v2367, %v2366
      %v2387 = vpack.c.bf16 %v2369, %v2368
      %v2388 = vpack.c.bf16 %v2371, %v2370
      %v2389 = vpack.c.bf16 %v2373, %v2372
      %s2390 = scalar_lea.vmem %s1, 14
      %v2391 = vld [vmem:[%s2390] sm:$0x3]
      %v2393 = vsel %vm172, %v2374, 0
      %v2396 = vsel %vm172, %v2375, 0
      %v2399 = vsel %vm172, %v2376, 0
      %v2402 = vsel %vm172, %v2377, 0
      %v2405 = vsel %vm172, %v2378, 0
      %v2408 = vsel %vm172, %v2379, 0
      %v2411 = vsel %vm172, %v2380, 0
      %v2414 = vsel %vm172, %v2381, 0
      %v2417 = vsel %vm172, %v2382, 0
      %v2420 = vsel %vm172, %v2383, 0
      %v2423 = vsel %vm172, %v2384, 0
      %v2426 = vsel %vm172, %v2385, 0
      %v2429 = vsel %vm172, %v2386, 0
      %v2432 = vsel %vm172, %v2387, 0
      %v2435 = vsel %vm172, %v2388, 0
      %v2438 = vsel %vm172, %v2389, 0
      %v2441 = vsel %vm494, %v2391, 0
      %2443 = vmatprep.subr.bf16.mxu0 0
      %2444 = vmatpush1.bf16.msra.mxu0 %v2441
      %2445 = vmatprep.subr.bf16.mxu0 0
      %2446 = vmatpush1.bf16.msra.mxu0 0
      %2447 = vmatprep.subr.bf16.mxu0 0
      %2448 = vmatpush1.bf16.msra.mxu0 0
      %2449 = vmatprep.subr.bf16.mxu0 0
      %2450 = vmatpush1.bf16.msra.mxu0 0
      %2451 = vmatprep.subr.bf16.mxu0 0
      %2452 = vmatpush1.bf16.msra.mxu0 0
      %2453 = vmatprep.subr.bf16.mxu0 0
      %2454 = vmatpush1.bf16.msra.mxu0 0
      %2455 = vmatprep.subr.bf16.mxu0 0
      %2456 = vmatpush1.bf16.msra.mxu0 0
      %2457 = vmatprep.subr.bf16.mxu0 0
      %2458 = vmatpush1.bf16.msra.mxu0 0
      %2459 = vmatprep.subr.bf16.mxu0 0
      %2460 = vmatpush1.bf16.msra.mxu0 0
      %2461 = vmatprep.subr.bf16.mxu0 0
      %2462 = vmatpush1.bf16.msra.mxu0 0
      %2463 = vmatprep.subr.bf16.mxu0 0
      %2464 = vmatpush1.bf16.msra.mxu0 0
      %2465 = vmatprep.subr.bf16.mxu0 0
      %2466 = vmatpush1.bf16.msra.mxu0 0
      %2467 = vmatprep.subr.bf16.mxu0 0
      %2468 = vmatpush1.bf16.msra.mxu0 0
      %2469 = vmatprep.subr.bf16.mxu0 0
      %2470 = vmatpush1.bf16.msra.mxu0 0
      %2471 = vmatprep.subr.bf16.mxu0 0
      %2472 = vmatpush1.bf16.msra.mxu0 0
      %2473 = vmatprep.subr.bf16.mxu0 0
      %2474 = vmatpush1.bf16.msra.mxu0 0
      %2475 = vmatprep.mubr.bf16.mxu0 0
      %2476 = vmatmul.mubr.bf16.gmra.mrb[0].mxu0 %v2393
      %v2477 = vpop.f32.mrb[0].mxu0
      %v2478 = vadd.f32 0.0, %v2477
      %v2479 = vpop.f32.mrb[0].mxu0
      %v2480 = vpop.f32.mrb[0].mxu0
      %v2481 = vadd.f32 0.0, %v2480
      %v2482 = vpop.f32.mrb[0].mxu0
      %2483 = vmatprep.mubr.bf16.mxu0 0
      %2484 = vmatmul.mubr.bf16.gmra.mrb[0].mxu0 %v2396
      %v2485 = vpop.f32.mrb[0].mxu0
      %v2486 = vadd.f32 0.0, %v2485
      %v2487 = vpop.f32.mrb[0].mxu0
      %v2488 = vpop.f32.mrb[0].mxu0
      %v2489 = vadd.f32 0.0, %v2488
      %v2490 = vpop.f32.mrb[0].mxu0
      %2491 = vmatprep.mubr.bf16.mxu0 0
      %2492 = vmatmul.mubr.bf16.gmra.mrb[0].mxu0 %v2399
      %v2493 = vpop.f32.mrb[0].mxu0
      %v2494 = vadd.f32 0.0, %v2493
      %v2495 = vpop.f32.mrb[0].mxu0
      %v2496 = vpop.f32.mrb[0].mxu0
      %v2497 = vadd.f32 0.0, %v2496
      %v2498 = vpop.f32.mrb[0].mxu0
      %2499 = vmatprep.mubr.bf16.mxu0 0
      %2500 = vmatmul.mubr.bf16.gmra.mrb[0].mxu0 %v2402
      %v2501 = vpop.f32.mrb[0].mxu0
      %v2502 = vadd.f32 0.0, %v2501
      %v2503 = vpop.f32.mrb[0].mxu0
      %v2504 = vpop.f32.mrb[0].mxu0
      %v2505 = vadd.f32 0.0, %v2504
      %v2506 = vpop.f32.mrb[0].mxu0
      %2507 = vmatprep.mubr.bf16.mxu0 0
      %2508 = vmatmul.mubr.bf16.gmra.mrb[0].mxu0 %v2405
      %v2509 = vpop.f32.mrb[0].mxu0
      %v2510 = vadd.f32 0.0, %v2509
      %v2511 = vpop.f32.mrb[0].mxu0
      %v2512 = vpop.f32.mrb[0].mxu0
      %v2513 = vadd.f32 0.0, %v2512
      %v2514 = vpop.f32.mrb[0].mxu0
      %2515 = vmatprep.mubr.bf16.mxu0 0
      %2516 = vmatmul.mubr.bf16.gmra.mrb[0].mxu0 %v2408
      %v2517 = vpop.f32.mrb[0].mxu0
      %v2518 = vadd.f32 0.0, %v2517
      %v2519 = vpop.f32.mrb[0].mxu0
      %v2520 = vpop.f32.mrb[0].mxu0
      %v2521 = vadd.f32 0.0, %v2520
      %v2522 = vpop.f32.mrb[0].mxu0
      %2523 = vmatprep.mubr.bf16.mxu0 0
      %2524 = vmatmul.mubr.bf16.gmra.mrb[0].mxu0 %v2411
      %v2525 = vpop.f32.mrb[0].mxu0
      %v2526 = vadd.f32 0.0, %v2525
      %v2527 = vpop.f32.mrb[0].mxu0
      %v2528 = vpop.f32.mrb[0].mxu0
      %v2529 = vadd.f32 0.0, %v2528
      %v2530 = vpop.f32.mrb[0].mxu0
      %2531 = vmatprep.mubr.bf16.mxu0 0
      %2532 = vmatmul.mubr.bf16.gmra.mrb[0].mxu0 %v2414
      %v2533 = vpop.f32.mrb[0].mxu0
      %v2534 = vadd.f32 0.0, %v2533
      %v2535 = vpop.f32.mrb[0].mxu0
      %v2536 = vpop.f32.mrb[0].mxu0
      %v2537 = vadd.f32 0.0, %v2536
      %v2538 = vpop.f32.mrb[0].mxu0
      %2539 = vmatprep.mubr.bf16.mxu0 0
      %2540 = vmatmul.mubr.bf16.gmra.mrb[0].mxu0 %v2417
      %v2541 = vpop.f32.mrb[0].mxu0
      %v2542 = vadd.f32 0.0, %v2541
      %v2543 = vpop.f32.mrb[0].mxu0
      %v2544 = vpop.f32.mrb[0].mxu0
      %v2545 = vadd.f32 0.0, %v2544
      %v2546 = vpop.f32.mrb[0].mxu0
      %2547 = vmatprep.mubr.bf16.mxu0 0
      %2548 = vmatmul.mubr.bf16.gmra.mrb[0].mxu0 %v2420
      %v2549 = vpop.f32.mrb[0].mxu0
      %v2550 = vadd.f32 0.0, %v2549
      %v2551 = vpop.f32.mrb[0].mxu0
      %v2552 = vpop.f32.mrb[0].mxu0
      %v2553 = vadd.f32 0.0, %v2552
      %v2554 = vpop.f32.mrb[0].mxu0
      %2555 = vmatprep.mubr.bf16.mxu0 0
      %2556 = vmatmul.mubr.bf16.gmra.mrb[0].mxu0 %v2423
      %v2557 = vpop.f32.mrb[0].mxu0
      %v2558 = vadd.f32 0.0, %v2557
      %v2559 = vpop.f32.mrb[0].mxu0
      %v2560 = vpop.f32.mrb[0].mxu0
      %v2561 = vadd.f32 0.0, %v2560
      %v2562 = vpop.f32.mrb[0].mxu0
      %2563 = vmatprep.mubr.bf16.mxu0 0
      %2564 = vmatmul.mubr.bf16.gmra.mrb[0].mxu0 %v2426
      %v2565 = vpop.f32.mrb[0].mxu0
      %v2566 = vadd.f32 0.0, %v2565
      %v2567 = vpop.f32.mrb[0].mxu0
      %v2568 = vpop.f32.mrb[0].mxu0
      %v2569 = vadd.f32 0.0, %v2568
      %v2570 = vpop.f32.mrb[0].mxu0
      %2571 = vmatprep.mubr.bf16.mxu0 0
      %2572 = vmatmul.mubr.bf16.gmra.mrb[0].mxu0 %v2429
      %v2573 = vpop.f32.mrb[0].mxu0
      %v2574 = vadd.f32 0.0, %v2573
      %v2575 = vpop.f32.mrb[0].mxu0
      %v2576 = vpop.f32.mrb[0].mxu0
      %v2577 = vadd.f32 0.0, %v2576
      %v2578 = vpop.f32.mrb[0].mxu0
      %2579 = vmatprep.mubr.bf16.mxu0 0
      %2580 = vmatmul.mubr.bf16.gmra.mrb[0].mxu0 %v2432
      %v2581 = vpop.f32.mrb[0].mxu0
      %v2582 = vadd.f32 0.0, %v2581
      %v2583 = vpop.f32.mrb[0].mxu0
      %v2584 = vpop.f32.mrb[0].mxu0
      %v2585 = vadd.f32 0.0, %v2584
      %v2586 = vpop.f32.mrb[0].mxu0
      %2587 = vmatprep.mubr.bf16.mxu0 0
      %2588 = vmatmul.mubr.bf16.gmra.mrb[0].mxu0 %v2435
      %v2589 = vpop.f32.mrb[0].mxu0
      %v2590 = vadd.f32 0.0, %v2589
      %v2591 = vpop.f32.mrb[0].mxu0
      %v2592 = vpop.f32.mrb[0].mxu0
      %v2593 = vadd.f32 0.0, %v2592
      %v2594 = vpop.f32.mrb[0].mxu0
      %2595 = vmatprep.mubr.bf16.mxu0 0
      %2596 = vmatmul.mubr.bf16.gmra.mrb[0].mxu0 %v2438
      %v2597 = vpop.f32.mrb[0].mxu0
      %v2598 = vadd.f32 0.0, %v2597
      %v2599 = vpop.f32.mrb[0].mxu0
      %v2600 = vpop.f32.mrb[0].mxu0
      %v2601 = vadd.f32 0.0, %v2600
      %v2602 = vpop.f32.mrb[0].mxu0
      %2603 = vdwg.mxu0
      %v2604 = vadd.f32 %v2310, %v2478
      %v2605 = vadd.f32 %v2311, %v2481
      %v2606 = vadd.f32 %v2312, %v2486
      %v2607 = vadd.f32 %v2313, %v2489
      %v2608 = vadd.f32 %v2314, %v2494
      %v2609 = vadd.f32 %v2315, %v2497
      %v2610 = vadd.f32 %v2316, %v2502
      %v2611 = vadd.f32 %v2317, %v2505
      %v2612 = vadd.f32 %v2318, %v2510
      %v2613 = vadd.f32 %v2319, %v2513
      %v2614 = vadd.f32 %v2320, %v2518
      %v2615 = vadd.f32 %v2321, %v2521
      %v2616 = vadd.f32 %v2322, %v2526
      %v2617 = vadd.f32 %v2323, %v2529
      %v2618 = vadd.f32 %v2324, %v2534
      %v2619 = vadd.f32 %v2325, %v2537
      %v2620 = vadd.f32 %v2326, %v2542
      %v2621 = vadd.f32 %v2327, %v2545
      %v2622 = vadd.f32 %v2328, %v2550
      %v2623 = vadd.f32 %v2329, %v2553
      %v2624 = vadd.f32 %v2330, %v2558
      %v2625 = vadd.f32 %v2331, %v2561
      %v2626 = vadd.f32 %v2332, %v2566
      %v2627 = vadd.f32 %v2333, %v2569
      %v2628 = vadd.f32 %v2334, %v2574
      %v2629 = vadd.f32 %v2335, %v2577
      %v2630 = vadd.f32 %v2336, %v2582
      %v2631 = vadd.f32 %v2337, %v2585
      %v2632 = vadd.f32 %v2338, %v2590
      %v2633 = vadd.f32 %v2339, %v2593
      %v2634 = vadd.f32 %v2340, %v2598
      %v2635 = vadd.f32 %v2341, %v2601
      %v2636 = vld [vmem:[%s2047 + $0x2] sm:$0xff]
      %v2637 = vld [vmem:[%s2047 + $0xa] sm:$0xff]
      %v2638 = vld [vmem:[%s2047 + $0x1a] sm:$0xff]
      %v2639 = vld [vmem:[%s2047 + $0x22] sm:$0xff]
      %v2640 = vld [vmem:[%s2047 + $0x32] sm:$0xff]
      %v2641 = vld [vmem:[%s2047 + $0x3a] sm:$0xff]
      %v2642 = vld [vmem:[%s2047 + $0x4a] sm:$0xff]
      %v2643 = vld [vmem:[%s2047 + $0x52] sm:$0xff]
      %v2644 = vld [vmem:[%s2047 + $0x62] sm:$0xff]
      %v2645 = vld [vmem:[%s2047 + $0x6a] sm:$0xff]
      %v2646 = vld [vmem:[%s2047 + $0x7a] sm:$0xff]
      %v2647 = vld [vmem:[%s2047 + $0x82] sm:$0xff]
      %v2648 = vld [vmem:[%s2047 + $0x92] sm:$0xff]
      %v2649 = vld [vmem:[%s2047 + $0x9a] sm:$0xff]
      %v2650 = vld [vmem:[%s2047 + $0xaa] sm:$0xff]
      %v2651 = vld [vmem:[%s2047 + $0xb2] sm:$0xff]
      %v2652 = vld [vmem:[%s2047 + $0xc2] sm:$0xff]
      %v2653 = vld [vmem:[%s2047 + $0xca] sm:$0xff]
      %v2654 = vld [vmem:[%s2047 + $0xda] sm:$0xff]
      %v2655 = vld [vmem:[%s2047 + $0xe2] sm:$0xff]
      %v2656 = vld [vmem:[%s2047 + $0xf2] sm:$0xff]
      %v2657 = vld [vmem:[%s2047 + $0xfa] sm:$0xff]
      %v2658 = vld [vmem:[%s2047 + $0x10a] sm:$0xff]
      %v2659 = vld [vmem:[%s2047 + $0x112] sm:$0xff]
      %v2660 = vld [vmem:[%s2047 + $0x122] sm:$0xff]
      %v2661 = vld [vmem:[%s2047 + $0x12a] sm:$0xff]
      %v2662 = vld [vmem:[%s2047 + $0x13a] sm:$0xff]
      %v2663 = vld [vmem:[%s2047 + $0x142] sm:$0xff]
      %v2664 = vld [vmem:[%s2047 + $0x152] sm:$0xff]
      %v2665 = vld [vmem:[%s2047 + $0x15a] sm:$0xff]
      %v2666 = vld [vmem:[%s2047 + $0x16a] sm:$0xff]
      %v2667 = vld [vmem:[%s2047 + $0x172] sm:$0xff]
      %v2668 = vpack.c.bf16 %v2637, %v2636
      %v2669 = vpack.c.bf16 %v2639, %v2638
      %v2670 = vpack.c.bf16 %v2641, %v2640
      %v2671 = vpack.c.bf16 %v2643, %v2642
      %v2672 = vpack.c.bf16 %v2645, %v2644
      %v2673 = vpack.c.bf16 %v2647, %v2646
      %v2674 = vpack.c.bf16 %v2649, %v2648
      %v2675 = vpack.c.bf16 %v2651, %v2650
      %v2676 = vpack.c.bf16 %v2653, %v2652
      %v2677 = vpack.c.bf16 %v2655, %v2654
      %v2678 = vpack.c.bf16 %v2657, %v2656
      %v2679 = vpack.c.bf16 %v2659, %v2658
      %v2680 = vpack.c.bf16 %v2661, %v2660
      %v2681 = vpack.c.bf16 %v2663, %v2662
      %v2682 = vpack.c.bf16 %v2665, %v2664
      %v2683 = vpack.c.bf16 %v2667, %v2666
      %s2684 = scalar_lea.vmem %s1, 16
      %v2685 = vld [vmem:[%s2684] sm:$0x3]
      %v2687 = vsel %vm172, %v2668, 0
      %v2690 = vsel %vm172, %v2669, 0
      %v2693 = vsel %vm172, %v2670, 0
      %v2696 = vsel %vm172, %v2671, 0
      %v2699 = vsel %vm172, %v2672, 0
      %v2702 = vsel %vm172, %v2673, 0
      %v2705 = vsel %vm172, %v2674, 0
      %v2708 = vsel %vm172, %v2675, 0
      %v2711 = vsel %vm172, %v2676, 0
      %v2714 = vsel %vm172, %v2677, 0
      %v2717 = vsel %vm172, %v2678, 0
      %v2720 = vsel %vm172, %v2679, 0
      %v2723 = vsel %vm172, %v2680, 0
      %v2726 = vsel %vm172, %v2681, 0
      %v2729 = vsel %vm172, %v2682, 0
      %v2732 = vsel %vm172, %v2683, 0
      %v2735 = vsel %vm494, %v2685, 0
      %2737 = vmatprep.subr.bf16.mxu0 0
      %2738 = vmatpush1.bf16.msra.mxu0 %v2735
      %2739 = vmatprep.subr.bf16.mxu0 0
      %2740 = vmatpush1.bf16.msra.mxu0 0
      %2741 = vmatprep.subr.bf16.mxu0 0
      %2742 = vmatpush1.bf16.msra.mxu0 0
      %2743 = vmatprep.subr.bf16.mxu0 0
      %2744 = vmatpush1.bf16.msra.mxu0 0
      %2745 = vmatprep.subr.bf16.mxu0 0
      %2746 = vmatpush1.bf16.msra.mxu0 0
      %2747 = vmatprep.subr.bf16.mxu0 0
      %2748 = vmatpush1.bf16.msra.mxu0 0
      %2749 = vmatprep.subr.bf16.mxu0 0
      %2750 = vmatpush1.bf16.msra.mxu0 0
      %2751 = vmatprep.subr.bf16.mxu0 0
      %2752 = vmatpush1.bf16.msra.mxu0 0
      %2753 = vmatprep.subr.bf16.mxu0 0
      %2754 = vmatpush1.bf16.msra.mxu0 0
      %2755 = vmatprep.subr.bf16.mxu0 0
      %2756 = vmatpush1.bf16.msra.mxu0 0
      %2757 = vmatprep.subr.bf16.mxu0 0
      %2758 = vmatpush1.bf16.msra.mxu0 0
      %2759 = vmatprep.subr.bf16.mxu0 0
      %2760 = vmatpush1.bf16.msra.mxu0 0
      %2761 = vmatprep.subr.bf16.mxu0 0
      %2762 = vmatpush1.bf16.msra.mxu0 0
      %2763 = vmatprep.subr.bf16.mxu0 0
      %2764 = vmatpush1.bf16.msra.mxu0 0
      %2765 = vmatprep.subr.bf16.mxu0 0
      %2766 = vmatpush1.bf16.msra.mxu0 0
      %2767 = vmatprep.subr.bf16.mxu0 0
      %2768 = vmatpush1.bf16.msra.mxu0 0
      %2769 = vmatprep.mubr.bf16.mxu0 0
      %2770 = vmatmul.mubr.bf16.gmra.mrb[0].mxu0 %v2687
      %v2771 = vpop.f32.mrb[0].mxu0
      %v2772 = vadd.f32 0.0, %v2771
      %v2773 = vpop.f32.mrb[0].mxu0
      %v2774 = vpop.f32.mrb[0].mxu0
      %v2775 = vadd.f32 0.0, %v2774
      %v2776 = vpop.f32.mrb[0].mxu0
      %2777 = vmatprep.mubr.bf16.mxu0 0
      %2778 = vmatmul.mubr.bf16.gmra.mrb[0].mxu0 %v2690
      %v2779 = vpop.f32.mrb[0].mxu0
      %v2780 = vadd.f32 0.0, %v2779
      %v2781 = vpop.f32.mrb[0].mxu0
      %v2782 = vpop.f32.mrb[0].mxu0
      %v2783 = vadd.f32 0.0, %v2782
      %v2784 = vpop.f32.mrb[0].mxu0
      %2785 = vmatprep.mubr.bf16.mxu0 0
      %2786 = vmatmul.mubr.bf16.gmra.mrb[0].mxu0 %v2693
      %v2787 = vpop.f32.mrb[0].mxu0
      %v2788 = vadd.f32 0.0, %v2787
      %v2789 = vpop.f32.mrb[0].mxu0
      %v2790 = vpop.f32.mrb[0].mxu0
      %v2791 = vadd.f32 0.0, %v2790
      %v2792 = vpop.f32.mrb[0].mxu0
      %2793 = vmatprep.mubr.bf16.mxu0 0
      %2794 = vmatmul.mubr.bf16.gmra.mrb[0].mxu0 %v2696
      %v2795 = vpop.f32.mrb[0].mxu0
      %v2796 = vadd.f32 0.0, %v2795
      %v2797 = vpop.f32.mrb[0].mxu0
      %v2798 = vpop.f32.mrb[0].mxu0
      %v2799 = vadd.f32 0.0, %v2798
      %v2800 = vpop.f32.mrb[0].mxu0
      %2801 = vmatprep.mubr.bf16.mxu0 0
      %2802 = vmatmul.mubr.bf16.gmra.mrb[0].mxu0 %v2699
      %v2803 = vpop.f32.mrb[0].mxu0
      %v2804 = vadd.f32 0.0, %v2803
      %v2805 = vpop.f32.mrb[0].mxu0
      %v2806 = vpop.f32.mrb[0].mxu0
      %v2807 = vadd.f32 0.0, %v2806
      %v2808 = vpop.f32.mrb[0].mxu0
      %2809 = vmatprep.mubr.bf16.mxu0 0
      %2810 = vmatmul.mubr.bf16.gmra.mrb[0].mxu0 %v2702
      %v2811 = vpop.f32.mrb[0].mxu0
      %v2812 = vadd.f32 0.0, %v2811
      %v2813 = vpop.f32.mrb[0].mxu0
      %v2814 = vpop.f32.mrb[0].mxu0
      %v2815 = vadd.f32 0.0, %v2814
      %v2816 = vpop.f32.mrb[0].mxu0
      %2817 = vmatprep.mubr.bf16.mxu0 0
      %2818 = vmatmul.mubr.bf16.gmra.mrb[0].mxu0 %v2705
      %v2819 = vpop.f32.mrb[0].mxu0
      %v2820 = vadd.f32 0.0, %v2819
      %v2821 = vpop.f32.mrb[0].mxu0
      %v2822 = vpop.f32.mrb[0].mxu0
      %v2823 = vadd.f32 0.0, %v2822
      %v2824 = vpop.f32.mrb[0].mxu0
      %2825 = vmatprep.mubr.bf16.mxu0 0
      %2826 = vmatmul.mubr.bf16.gmra.mrb[0].mxu0 %v2708
      %v2827 = vpop.f32.mrb[0].mxu0
      %v2828 = vadd.f32 0.0, %v2827
      %v2829 = vpop.f32.mrb[0].mxu0
      %v2830 = vpop.f32.mrb[0].mxu0
      %v2831 = vadd.f32 0.0, %v2830
      %v2832 = vpop.f32.mrb[0].mxu0
      %2833 = vmatprep.mubr.bf16.mxu0 0
      %2834 = vmatmul.mubr.bf16.gmra.mrb[0].mxu0 %v2711
      %v2835 = vpop.f32.mrb[0].mxu0
      %v2836 = vadd.f32 0.0, %v2835
      %v2837 = vpop.f32.mrb[0].mxu0
      %v2838 = vpop.f32.mrb[0].mxu0
      %v2839 = vadd.f32 0.0, %v2838
      %v2840 = vpop.f32.mrb[0].mxu0
      %2841 = vmatprep.mubr.bf16.mxu0 0
      %2842 = vmatmul.mubr.bf16.gmra.mrb[0].mxu0 %v2714
      %v2843 = vpop.f32.mrb[0].mxu0
      %v2844 = vadd.f32 0.0, %v2843
      %v2845 = vpop.f32.mrb[0].mxu0
      %v2846 = vpop.f32.mrb[0].mxu0
      %v2847 = vadd.f32 0.0, %v2846
      %v2848 = vpop.f32.mrb[0].mxu0
      %2849 = vmatprep.mubr.bf16.mxu0 0
      %2850 = vmatmul.mubr.bf16.gmra.mrb[0].mxu0 %v2717
      %v2851 = vpop.f32.mrb[0].mxu0
      %v2852 = vadd.f32 0.0, %v2851
      %v2853 = vpop.f32.mrb[0].mxu0
      %v2854 = vpop.f32.mrb[0].mxu0
      %v2855 = vadd.f32 0.0, %v2854
      %v2856 = vpop.f32.mrb[0].mxu0
      %2857 = vmatprep.mubr.bf16.mxu0 0
      %2858 = vmatmul.mubr.bf16.gmra.mrb[0].mxu0 %v2720
      %v2859 = vpop.f32.mrb[0].mxu0
      %v2860 = vadd.f32 0.0, %v2859
      %v2861 = vpop.f32.mrb[0].mxu0
      %v2862 = vpop.f32.mrb[0].mxu0
      %v2863 = vadd.f32 0.0, %v2862
      %v2864 = vpop.f32.mrb[0].mxu0
      %2865 = vmatprep.mubr.bf16.mxu0 0
      %2866 = vmatmul.mubr.bf16.gmra.mrb[0].mxu0 %v2723
      %v2867 = vpop.f32.mrb[0].mxu0
      %v2868 = vadd.f32 0.0, %v2867
      %v2869 = vpop.f32.mrb[0].mxu0
      %v2870 = vpop.f32.mrb[0].mxu0
      %v2871 = vadd.f32 0.0, %v2870
      %v2872 = vpop.f32.mrb[0].mxu0
      %2873 = vmatprep.mubr.bf16.mxu0 0
      %2874 = vmatmul.mubr.bf16.gmra.mrb[0].mxu0 %v2726
      %v2875 = vpop.f32.mrb[0].mxu0
      %v2876 = vadd.f32 0.0, %v2875
      %v2877 = vpop.f32.mrb[0].mxu0
      %v2878 = vpop.f32.mrb[0].mxu0
      %v2879 = vadd.f32 0.0, %v2878
      %v2880 = vpop.f32.mrb[0].mxu0
      %2881 = vmatprep.mubr.bf16.mxu0 0
      %2882 = vmatmul.mubr.bf16.gmra.mrb[0].mxu0 %v2729
      %v2883 = vpop.f32.mrb[0].mxu0
      %v2884 = vadd.f32 0.0, %v2883
      %v2885 = vpop.f32.mrb[0].mxu0
      %v2886 = vpop.f32.mrb[0].mxu0
      %v2887 = vadd.f32 0.0, %v2886
      %v2888 = vpop.f32.mrb[0].mxu0
      %2889 = vmatprep.mubr.bf16.mxu0 0
      %2890 = vmatmul.mubr.bf16.gmra.mrb[0].mxu0 %v2732
      %v2891 = vpop.f32.mrb[0].mxu0
      %v2892 = vadd.f32 0.0, %v2891
      %v2893 = vpop.f32.mrb[0].mxu0
      %v2894 = vpop.f32.mrb[0].mxu0
      %v2895 = vadd.f32 0.0, %v2894
      %v2896 = vpop.f32.mrb[0].mxu0
      %2897 = vdwg.mxu0
      %v2898 = vadd.f32 %v2604, %v2772
      %v2899 = vadd.f32 %v2605, %v2775
      %v2900 = vadd.f32 %v2606, %v2780
      %v2901 = vadd.f32 %v2607, %v2783
      %v2902 = vadd.f32 %v2608, %v2788
      %v2903 = vadd.f32 %v2609, %v2791
      %v2904 = vadd.f32 %v2610, %v2796
      %v2905 = vadd.f32 %v2611, %v2799
      %v2906 = vadd.f32 %v2612, %v2804
      %v2907 = vadd.f32 %v2613, %v2807
      %v2908 = vadd.f32 %v2614, %v2812
      %v2909 = vadd.f32 %v2615, %v2815
      %v2910 = vadd.f32 %v2616, %v2820
      %v2911 = vadd.f32 %v2617, %v2823
      %v2912 = vadd.f32 %v2618, %v2828
      %v2913 = vadd.f32 %v2619, %v2831
      %v2914 = vadd.f32 %v2620, %v2836
      %v2915 = vadd.f32 %v2621, %v2839
      %v2916 = vadd.f32 %v2622, %v2844
      %v2917 = vadd.f32 %v2623, %v2847
      %v2918 = vadd.f32 %v2624, %v2852
      %v2919 = vadd.f32 %v2625, %v2855
      %v2920 = vadd.f32 %v2626, %v2860
      %v2921 = vadd.f32 %v2627, %v2863
      %v2922 = vadd.f32 %v2628, %v2868
      %v2923 = vadd.f32 %v2629, %v2871
      %v2924 = vadd.f32 %v2630, %v2876
      %v2925 = vadd.f32 %v2631, %v2879
      %v2926 = vadd.f32 %v2632, %v2884
      %v2927 = vadd.f32 %v2633, %v2887
      %v2928 = vadd.f32 %v2634, %v2892
      %v2929 = vadd.f32 %v2635, %v2895
      %v2930 = vmax.f32 %v2898, 0.0
      %v2931 = vmax.f32 %v2899, 0.0
      %v2932 = vmax.f32 %v2900, 0.0
      %v2933 = vmax.f32 %v2901, 0.0
      %v2934 = vmax.f32 %v2902, 0.0
      %v2935 = vmax.f32 %v2903, 0.0
      %v2936 = vmax.f32 %v2904, 0.0
      %v2937 = vmax.f32 %v2905, 0.0
      %v2938 = vmax.f32 %v2906, 0.0
      %v2939 = vmax.f32 %v2907, 0.0
      %v2940 = vmax.f32 %v2908, 0.0
      %v2941 = vmax.f32 %v2909, 0.0
      %v2942 = vmax.f32 %v2910, 0.0
      %v2943 = vmax.f32 %v2911, 0.0
      %v2944 = vmax.f32 %v2912, 0.0
      %v2945 = vmax.f32 %v2913, 0.0
      %v2946 = vmax.f32 %v2914, 0.0
      %v2947 = vmax.f32 %v2915, 0.0
      %v2948 = vmax.f32 %v2916, 0.0
      %v2949 = vmax.f32 %v2917, 0.0
      %v2950 = vmax.f32 %v2918, 0.0
      %v2951 = vmax.f32 %v2919, 0.0
      %v2952 = vmax.f32 %v2920, 0.0
      %v2953 = vmax.f32 %v2921, 0.0
      %v2954 = vmax.f32 %v2922, 0.0
      %v2955 = vmax.f32 %v2923, 0.0
      %v2956 = vmax.f32 %v2924, 0.0
      %v2957 = vmax.f32 %v2925, 0.0
      %v2958 = vmax.f32 %v2926, 0.0
      %v2959 = vmax.f32 %v2927, 0.0
      %v2960 = vmax.f32 %v2928, 0.0
      %v2961 = vmax.f32 %v2929, 0.0
      %s2962 = scalar_lea.vmem [#allocation3], 24
      %2963 = vst.msk [vmem:[%s2962 + $0x1] sm:$0xff] %vm172, %v2930
      %2964 = vst.msk [vmem:[%s2962 + $0x9] sm:$0xff] %vm172, %v2931
      %2965 = vst.msk [vmem:[%s2962 + $0x19] sm:$0xff] %vm172, %v2932
      %2966 = vst.msk [vmem:[%s2962 + $0x21] sm:$0xff] %vm172, %v2933
      %2967 = vst.msk [vmem:[%s2962 + $0x31] sm:$0xff] %vm172, %v2934
      %2968 = vst.msk [vmem:[%s2962 + $0x39] sm:$0xff] %vm172, %v2935
      %2969 = vst.msk [vmem:[%s2962 + $0x49] sm:$0xff] %vm172, %v2936
      %2970 = vst.msk [vmem:[%s2962 + $0x51] sm:$0xff] %vm172, %v2937
      %2971 = vst.msk [vmem:[%s2962 + $0x61] sm:$0xff] %vm172, %v2938
      %2972 = vst.msk [vmem:[%s2962 + $0x69] sm:$0xff] %vm172, %v2939
      %2973 = vst.msk [vmem:[%s2962 + $0x79] sm:$0xff] %vm172, %v2940
      %2974 = vst.msk [vmem:[%s2962 + $0x81] sm:$0xff] %vm172, %v2941
      %2975 = vst.msk [vmem:[%s2962 + $0x91] sm:$0xff] %vm172, %v2942
      %2976 = vst.msk [vmem:[%s2962 + $0x99] sm:$0xff] %vm172, %v2943
      %2977 = vst.msk [vmem:[%s2962 + $0xa9] sm:$0xff] %vm172, %v2944
      %2978 = vst.msk [vmem:[%s2962 + $0xb1] sm:$0xff] %vm172, %v2945
      %2979 = vst.msk [vmem:[%s2962 + $0xc1] sm:$0xff] %vm172, %v2946
      %2980 = vst.msk [vmem:[%s2962 + $0xc9] sm:$0xff] %vm172, %v2947
      %2981 = vst.msk [vmem:[%s2962 + $0xd9] sm:$0xff] %vm172, %v2948
      %2982 = vst.msk [vmem:[%s2962 + $0xe1] sm:$0xff] %vm172, %v2949
      %2983 = vst.msk [vmem:[%s2962 + $0xf1] sm:$0xff] %vm172, %v2950
      %2984 = vst.msk [vmem:[%s2962 + $0xf9] sm:$0xff] %vm172, %v2951
      %2985 = vst.msk [vmem:[%s2962 + $0x109] sm:$0xff] %vm172, %v2952
      %2986 = vst.msk [vmem:[%s2962 + $0x111] sm:$0xff] %vm172, %v2953
      %2987 = vst.msk [vmem:[%s2962 + $0x121] sm:$0xff] %vm172, %v2954
      %2988 = vst.msk [vmem:[%s2962 + $0x129] sm:$0xff] %vm172, %v2955
      %2989 = vst.msk [vmem:[%s2962 + $0x139] sm:$0xff] %vm172, %v2956
      %2990 = vst.msk [vmem:[%s2962 + $0x141] sm:$0xff] %vm172, %v2957
      %2991 = vst.msk [vmem:[%s2962 + $0x151] sm:$0xff] %vm172, %v2958
      %2992 = vst.msk [vmem:[%s2962 + $0x159] sm:$0xff] %vm172, %v2959
      %2993 = vst.msk [vmem:[%s2962 + $0x169] sm:$0xff] %vm172, %v2960
      %2994 = vst.msk [vmem:[%s2962 + $0x171] sm:$0xff] %vm172, %v2961
      %v2995 = vld [vmem:[#allocation3] sm:$0xff]
      %v2996 = vld [vmem:[#allocation3 + $0x8] sm:$0xff]
      %v2997 = vld [vmem:[#allocation3 + $0x18] sm:$0xff]
      %v2998 = vld [vmem:[#allocation3 + $0x20] sm:$0xff]
      %v2999 = vld [vmem:[#allocation3 + $0x30] sm:$0xff]
      %v3000 = vld [vmem:[#allocation3 + $0x38] sm:$0xff]
      %v3001 = vld [vmem:[#allocation3 + $0x48] sm:$0xff]
      %v3002 = vld [vmem:[#allocation3 + $0x50] sm:$0xff]
      %v3003 = vld [vmem:[#allocation3 + $0x60] sm:$0xff]
      %v3004 = vld [vmem:[#allocation3 + $0x68] sm:$0xff]
      %v3005 = vld [vmem:[#allocation3 + $0x78] sm:$0xff]
      %v3006 = vld [vmem:[#allocation3 + $0x80] sm:$0xff]
      %v3007 = vld [vmem:[#allocation3 + $0x90] sm:$0xff]
      %v3008 = vld [vmem:[#allocation3 + $0x98] sm:$0xff]
      %v3009 = vld [vmem:[#allocation3 + $0xa8] sm:$0xff]
      %v3010 = vld [vmem:[#allocation3 + $0xb0] sm:$0xff]
      %v3011 = vld [vmem:[#allocation3 + $0xc0] sm:$0xff]
      %v3012 = vld [vmem:[#allocation3 + $0xc8] sm:$0xff]
      %v3013 = vld [vmem:[#allocation3 + $0xd8] sm:$0xff]
      %v3014 = vld [vmem:[#allocation3 + $0xe0] sm:$0xff]
      %v3015 = vld [vmem:[#allocation3 + $0xf0] sm:$0xff]
      %v3016 = vld [vmem:[#allocation3 + $0xf8] sm:$0xff]
      %v3017 = vld [vmem:[#allocation3 + $0x108] sm:$0xff]
      %v3018 = vld [vmem:[#allocation3 + $0x110] sm:$0xff]
      %v3019 = vld [vmem:[#allocation3 + $0x120] sm:$0xff]
      %v3020 = vld [vmem:[#allocation3 + $0x128] sm:$0xff]
      %v3021 = vld [vmem:[#allocation3 + $0x138] sm:$0xff]
      %v3022 = vld [vmem:[#allocation3 + $0x140] sm:$0xff]
      %v3023 = vld [vmem:[#allocation3 + $0x150] sm:$0xff]
      %v3024 = vld [vmem:[#allocation3 + $0x158] sm:$0xff]
      %v3025 = vld [vmem:[#allocation3 + $0x168] sm:$0xff]
      %v3026 = vld [vmem:[#allocation3 + $0x170] sm:$0xff]
      %v3027 = vpack.c.bf16 %v2996, %v2995
      %v3028 = vpack.c.bf16 %v2998, %v2997
      %v3029 = vpack.c.bf16 %v3000, %v2999
      %v3030 = vpack.c.bf16 %v3002, %v3001
      %v3031 = vpack.c.bf16 %v3004, %v3003
      %v3032 = vpack.c.bf16 %v3006, %v3005
      %v3033 = vpack.c.bf16 %v3008, %v3007
      %v3034 = vpack.c.bf16 %v3010, %v3009
      %v3035 = vpack.c.bf16 %v3012, %v3011
      %v3036 = vpack.c.bf16 %v3014, %v3013
      %v3037 = vpack.c.bf16 %v3016, %v3015
      %v3038 = vpack.c.bf16 %v3018, %v3017
      %v3039 = vpack.c.bf16 %v3020, %v3019
      %v3040 = vpack.c.bf16 %v3022, %v3021
      %v3041 = vpack.c.bf16 %v3024, %v3023
      %v3042 = vpack.c.bf16 %v3026, %v3025
      %v3043 = vld [vmem:[%s2] sm:$0x3]
      %v3044 = vld [vmem:[#allocation3 + $0x1] sm:$0xff]
      %v3045 = vld [vmem:[#allocation3 + $0x9] sm:$0xff]
      %v3046 = vld [vmem:[#allocation3 + $0x19] sm:$0xff]
      %v3047 = vld [vmem:[#allocation3 + $0x21] sm:$0xff]
      %v3048 = vld [vmem:[#allocation3 + $0x31] sm:$0xff]
      %v3049 = vld [vmem:[#allocation3 + $0x39] sm:$0xff]
      %v3050 = vld [vmem:[#allocation3 + $0x49] sm:$0xff]
      %v3051 = vld [vmem:[#allocation3 + $0x51] sm:$0xff]
      %v3052 = vld [vmem:[#allocation3 + $0x61] sm:$0xff]
      %v3053 = vld [vmem:[#allocation3 + $0x69] sm:$0xff]
      %v3054 = vld [vmem:[#allocation3 + $0x79] sm:$0xff]
      %v3055 = vld [vmem:[#allocation3 + $0x81] sm:$0xff]
      %v3056 = vld [vmem:[#allocation3 + $0x91] sm:$0xff]
      %v3057 = vld [vmem:[#allocation3 + $0x99] sm:$0xff]
      %v3058 = vld [vmem:[#allocation3 + $0xa9] sm:$0xff]
      %v3059 = vld [vmem:[#allocation3 + $0xb1] sm:$0xff]
      %v3060 = vld [vmem:[#allocation3 + $0xc1] sm:$0xff]
      %v3061 = vld [vmem:[#allocation3 + $0xc9] sm:$0xff]
      %v3062 = vld [vmem:[#allocation3 + $0xd9] sm:$0xff]
      %v3063 = vld [vmem:[#allocation3 + $0xe1] sm:$0xff]
      %v3064 = vld [vmem:[#allocation3 + $0xf1] sm:$0xff]
      %v3065 = vld [vmem:[#allocation3 + $0xf9] sm:$0xff]
      %v3066 = vld [vmem:[#allocation3 + $0x109] sm:$0xff]
      %v3067 = vld [vmem:[#allocation3 + $0x111] sm:$0xff]
      %v3068 = vld [vmem:[#allocation3 + $0x121] sm:$0xff]
      %v3069 = vld [vmem:[#allocation3 + $0x129] sm:$0xff]
      %v3070 = vld [vmem:[#allocation3 + $0x139] sm:$0xff]
      %v3071 = vld [vmem:[#allocation3 + $0x141] sm:$0xff]
      %v3072 = vld [vmem:[#allocation3 + $0x151] sm:$0xff]
      %v3073 = vld [vmem:[#allocation3 + $0x159] sm:$0xff]
      %v3074 = vld [vmem:[#allocation3 + $0x169] sm:$0xff]
      %v3075 = vld [vmem:[#allocation3 + $0x171] sm:$0xff]
      %v3076 = vpack.c.bf16 %v3045, %v3044
      %v3077 = vpack.c.bf16 %v3047, %v3046
      %v3078 = vpack.c.bf16 %v3049, %v3048
      %v3079 = vpack.c.bf16 %v3051, %v3050
      %v3080 = vpack.c.bf16 %v3053, %v3052
      %v3081 = vpack.c.bf16 %v3055, %v3054
      %v3082 = vpack.c.bf16 %v3057, %v3056
      %v3083 = vpack.c.bf16 %v3059, %v3058
      %v3084 = vpack.c.bf16 %v3061, %v3060
      %v3085 = vpack.c.bf16 %v3063, %v3062
      %v3086 = vpack.c.bf16 %v3065, %v3064
      %v3087 = vpack.c.bf16 %v3067, %v3066
      %v3088 = vpack.c.bf16 %v3069, %v3068
      %v3089 = vpack.c.bf16 %v3071, %v3070
      %v3090 = vpack.c.bf16 %v3073, %v3072
      %v3091 = vpack.c.bf16 %v3075, %v3074
      %s3092 = scalar_lea.vmem %s2, 2
      %v3093 = vld [vmem:[%s3092] sm:$0x3]
      %v3095 = vsel %vm172, %v3076, 0
      %v3098 = vsel %vm172, %v3077, 0
      %v3101 = vsel %vm172, %v3078, 0
      %v3104 = vsel %vm172, %v3079, 0
      %v3107 = vsel %vm172, %v3080, 0
      %v3110 = vsel %vm172, %v3081, 0
      %v3113 = vsel %vm172, %v3082, 0
      %v3116 = vsel %vm172, %v3083, 0
      %v3119 = vsel %vm172, %v3084, 0
      %v3122 = vsel %vm172, %v3085, 0
      %v3125 = vsel %vm172, %v3086, 0
      %v3128 = vsel %vm172, %v3087, 0
      %v3131 = vsel %vm172, %v3088, 0
      %v3134 = vsel %vm172, %v3089, 0
      %v3137 = vsel %vm172, %v3090, 0
      %v3140 = vsel %vm172, %v3091, 0
      %v3143 = vsel %vm494, %v3093, 0
      %3145 = vmatprep.subr.bf16.mxu0 0
      %3146 = vmatpush1.bf16.msra.mxu0 %v3143
      %3147 = vmatprep.subr.bf16.mxu0 0
      %3148 = vmatpush1.bf16.msra.mxu0 0
      %3149 = vmatprep.subr.bf16.mxu0 0
      %3150 = vmatpush1.bf16.msra.mxu0 0
      %3151 = vmatprep.subr.bf16.mxu0 0
      %3152 = vmatpush1.bf16.msra.mxu0 0
      %3153 = vmatprep.subr.bf16.mxu0 0
      %3154 = vmatpush1.bf16.msra.mxu0 0
      %3155 = vmatprep.subr.bf16.mxu0 0
      %3156 = vmatpush1.bf16.msra.mxu0 0
      %3157 = vmatprep.subr.bf16.mxu0 0
      %3158 = vmatpush1.bf16.msra.mxu0 0
      %3159 = vmatprep.subr.bf16.mxu0 0
      %3160 = vmatpush1.bf16.msra.mxu0 0
      %3161 = vmatprep.subr.bf16.mxu0 0
      %3162 = vmatpush1.bf16.msra.mxu0 0
      %3163 = vmatprep.subr.bf16.mxu0 0
      %3164 = vmatpush1.bf16.msra.mxu0 0
      %3165 = vmatprep.subr.bf16.mxu0 0
      %3166 = vmatpush1.bf16.msra.mxu0 0
      %3167 = vmatprep.subr.bf16.mxu0 0
      %3168 = vmatpush1.bf16.msra.mxu0 0
      %3169 = vmatprep.subr.bf16.mxu0 0
      %3170 = vmatpush1.bf16.msra.mxu0 0
      %3171 = vmatprep.subr.bf16.mxu0 0
      %3172 = vmatpush1.bf16.msra.mxu0 0
      %3173 = vmatprep.subr.bf16.mxu0 0
      %3174 = vmatpush1.bf16.msra.mxu0 0
      %3175 = vmatprep.subr.bf16.mxu0 0
      %3176 = vmatpush1.bf16.msra.mxu0 0
      %3177 = vmatprep.mubr.bf16.mxu0 0
      %3178 = vmatmul.mubr.bf16.gmra.mrb[0].mxu0 %v3095
      %v3179 = vpop.f32.mrb[0].mxu0
      %v3180 = vadd.f32 0.0, %v3179
      %v3181 = vpop.f32.mrb[0].mxu0
      %v3182 = vpop.f32.mrb[0].mxu0
      %v3183 = vadd.f32 0.0, %v3182
      %v3184 = vpop.f32.mrb[0].mxu0
      %3185 = vmatprep.mubr.bf16.mxu0 0
      %3186 = vmatmul.mubr.bf16.gmra.mrb[0].mxu0 %v3098
      %v3187 = vpop.f32.mrb[0].mxu0
      %v3188 = vadd.f32 0.0, %v3187
      %v3189 = vpop.f32.mrb[0].mxu0
      %v3190 = vpop.f32.mrb[0].mxu0
      %v3191 = vadd.f32 0.0, %v3190
      %v3192 = vpop.f32.mrb[0].mxu0
      %3193 = vmatprep.mubr.bf16.mxu0 0
      %3194 = vmatmul.mubr.bf16.gmra.mrb[0].mxu0 %v3101
      %v3195 = vpop.f32.mrb[0].mxu0
      %v3196 = vadd.f32 0.0, %v3195
      %v3197 = vpop.f32.mrb[0].mxu0
      %v3198 = vpop.f32.mrb[0].mxu0
      %v3199 = vadd.f32 0.0, %v3198
      %v3200 = vpop.f32.mrb[0].mxu0
      %3201 = vmatprep.mubr.bf16.mxu0 0
      %3202 = vmatmul.mubr.bf16.gmra.mrb[0].mxu0 %v3104
      %v3203 = vpop.f32.mrb[0].mxu0
      %v3204 = vadd.f32 0.0, %v3203
      %v3205 = vpop.f32.mrb[0].mxu0
      %v3206 = vpop.f32.mrb[0].mxu0
      %v3207 = vadd.f32 0.0, %v3206
      %v3208 = vpop.f32.mrb[0].mxu0
      %3209 = vmatprep.mubr.bf16.mxu0 0
      %3210 = vmatmul.mubr.bf16.gmra.mrb[0].mxu0 %v3107
      %v3211 = vpop.f32.mrb[0].mxu0
      %v3212 = vadd.f32 0.0, %v3211
      %v3213 = vpop.f32.mrb[0].mxu0
      %v3214 = vpop.f32.mrb[0].mxu0
      %v3215 = vadd.f32 0.0, %v3214
      %v3216 = vpop.f32.mrb[0].mxu0
      %3217 = vmatprep.mubr.bf16.mxu0 0
      %3218 = vmatmul.mubr.bf16.gmra.mrb[0].mxu0 %v3110
      %v3219 = vpop.f32.mrb[0].mxu0
      %v3220 = vadd.f32 0.0, %v3219
      %v3221 = vpop.f32.mrb[0].mxu0
      %v3222 = vpop.f32.mrb[0].mxu0
      %v3223 = vadd.f32 0.0, %v3222
      %v3224 = vpop.f32.mrb[0].mxu0
      %3225 = vmatprep.mubr.bf16.mxu0 0
      %3226 = vmatmul.mubr.bf16.gmra.mrb[0].mxu0 %v3113
      %v3227 = vpop.f32.mrb[0].mxu0
      %v3228 = vadd.f32 0.0, %v3227
      %v3229 = vpop.f32.mrb[0].mxu0
      %v3230 = vpop.f32.mrb[0].mxu0
      %v3231 = vadd.f32 0.0, %v3230
      %v3232 = vpop.f32.mrb[0].mxu0
      %3233 = vmatprep.mubr.bf16.mxu0 0
      %3234 = vmatmul.mubr.bf16.gmra.mrb[0].mxu0 %v3116
      %v3235 = vpop.f32.mrb[0].mxu0
      %v3236 = vadd.f32 0.0, %v3235
      %v3237 = vpop.f32.mrb[0].mxu0
      %v3238 = vpop.f32.mrb[0].mxu0
      %v3239 = vadd.f32 0.0, %v3238
      %v3240 = vpop.f32.mrb[0].mxu0
      %3241 = vmatprep.mubr.bf16.mxu0 0
      %3242 = vmatmul.mubr.bf16.gmra.mrb[0].mxu0 %v3119
      %v3243 = vpop.f32.mrb[0].mxu0
      %v3244 = vadd.f32 0.0, %v3243
      %v3245 = vpop.f32.mrb[0].mxu0
      %v3246 = vpop.f32.mrb[0].mxu0
      %v3247 = vadd.f32 0.0, %v3246
      %v3248 = vpop.f32.mrb[0].mxu0
      %3249 = vmatprep.mubr.bf16.mxu0 0
      %3250 = vmatmul.mubr.bf16.gmra.mrb[0].mxu0 %v3122
      %v3251 = vpop.f32.mrb[0].mxu0
      %v3252 = vadd.f32 0.0, %v3251
      %v3253 = vpop.f32.mrb[0].mxu0
      %v3254 = vpop.f32.mrb[0].mxu0
      %v3255 = vadd.f32 0.0, %v3254
      %v3256 = vpop.f32.mrb[0].mxu0
      %3257 = vmatprep.mubr.bf16.mxu0 0
      %3258 = vmatmul.mubr.bf16.gmra.mrb[0].mxu0 %v3125
      %v3259 = vpop.f32.mrb[0].mxu0
      %v3260 = vadd.f32 0.0, %v3259
      %v3261 = vpop.f32.mrb[0].mxu0
      %v3262 = vpop.f32.mrb[0].mxu0
      %v3263 = vadd.f32 0.0, %v3262
      %v3264 = vpop.f32.mrb[0].mxu0
      %3265 = vmatprep.mubr.bf16.mxu0 0
      %3266 = vmatmul.mubr.bf16.gmra.mrb[0].mxu0 %v3128
      %v3267 = vpop.f32.mrb[0].mxu0
      %v3268 = vadd.f32 0.0, %v3267
      %v3269 = vpop.f32.mrb[0].mxu0
      %v3270 = vpop.f32.mrb[0].mxu0
      %v3271 = vadd.f32 0.0, %v3270
      %v3272 = vpop.f32.mrb[0].mxu0
      %3273 = vmatprep.mubr.bf16.mxu0 0
      %3274 = vmatmul.mubr.bf16.gmra.mrb[0].mxu0 %v3131
      %v3275 = vpop.f32.mrb[0].mxu0
      %v3276 = vadd.f32 0.0, %v3275
      %v3277 = vpop.f32.mrb[0].mxu0
      %v3278 = vpop.f32.mrb[0].mxu0
      %v3279 = vadd.f32 0.0, %v3278
      %v3280 = vpop.f32.mrb[0].mxu0
      %3281 = vmatprep.mubr.bf16.mxu0 0
      %3282 = vmatmul.mubr.bf16.gmra.mrb[0].mxu0 %v3134
      %v3283 = vpop.f32.mrb[0].mxu0
      %v3284 = vadd.f32 0.0, %v3283
      %v3285 = vpop.f32.mrb[0].mxu0
      %v3286 = vpop.f32.mrb[0].mxu0
      %v3287 = vadd.f32 0.0, %v3286
      %v3288 = vpop.f32.mrb[0].mxu0
      %3289 = vmatprep.mubr.bf16.mxu0 0
      %3290 = vmatmul.mubr.bf16.gmra.mrb[0].mxu0 %v3137
      %v3291 = vpop.f32.mrb[0].mxu0
      %v3292 = vadd.f32 0.0, %v3291
      %v3293 = vpop.f32.mrb[0].mxu0
      %v3294 = vpop.f32.mrb[0].mxu0
      %v3295 = vadd.f32 0.0, %v3294
      %v3296 = vpop.f32.mrb[0].mxu0
      %3297 = vmatprep.mubr.bf16.mxu0 0
      %3298 = vmatmul.mubr.bf16.gmra.mrb[0].mxu0 %v3140
      %v3299 = vpop.f32.mrb[0].mxu0
      %v3300 = vadd.f32 0.0, %v3299
      %v3301 = vpop.f32.mrb[0].mxu0
      %v3302 = vpop.f32.mrb[0].mxu0
      %v3303 = vadd.f32 0.0, %v3302
      %v3304 = vpop.f32.mrb[0].mxu0
      %3305 = vdwg.mxu0
      %v3307 = vsel %vm172, %v3027, 0
      %v3310 = vsel %vm172, %v3028, 0
      %v3313 = vsel %vm172, %v3029, 0
      %v3316 = vsel %vm172, %v3030, 0
      %v3319 = vsel %vm172, %v3031, 0
      %v3322 = vsel %vm172, %v3032, 0
      %v3325 = vsel %vm172, %v3033, 0
      %v3328 = vsel %vm172, %v3034, 0
      %v3331 = vsel %vm172, %v3035, 0
      %v3334 = vsel %vm172, %v3036, 0
      %v3337 = vsel %vm172, %v3037, 0
      %v3340 = vsel %vm172, %v3038, 0
      %v3343 = vsel %vm172, %v3039, 0
      %v3346 = vsel %vm172, %v3040, 0
      %v3349 = vsel %vm172, %v3041, 0
      %v3352 = vsel %vm172, %v3042, 0
      %v3355 = vsel %vm494, %v3043, 0
      %3357 = vmatprep.subr.bf16.mxu0 0
      %3358 = vmatpush1.bf16.msra.mxu0 %v3355
      %3359 = vmatprep.subr.bf16.mxu0 0
      %3360 = vmatpush1.bf16.msra.mxu0 0
      %3361 = vmatprep.subr.bf16.mxu0 0
      %3362 = vmatpush1.bf16.msra.mxu0 0
      %3363 = vmatprep.subr.bf16.mxu0 0
      %3364 = vmatpush1.bf16.msra.mxu0 0
      %3365 = vmatprep.subr.bf16.mxu0 0
      %3366 = vmatpush1.bf16.msra.mxu0 0
      %3367 = vmatprep.subr.bf16.mxu0 0
      %3368 = vmatpush1.bf16.msra.mxu0 0
      %3369 = vmatprep.subr.bf16.mxu0 0
      %3370 = vmatpush1.bf16.msra.mxu0 0
      %3371 = vmatprep.subr.bf16.mxu0 0
      %3372 = vmatpush1.bf16.msra.mxu0 0
      %3373 = vmatprep.subr.bf16.mxu0 0
      %3374 = vmatpush1.bf16.msra.mxu0 0
      %3375 = vmatprep.subr.bf16.mxu0 0
      %3376 = vmatpush1.bf16.msra.mxu0 0
      %3377 = vmatprep.subr.bf16.mxu0 0
      %3378 = vmatpush1.bf16.msra.mxu0 0
      %3379 = vmatprep.subr.bf16.mxu0 0
      %3380 = vmatpush1.bf16.msra.mxu0 0
      %3381 = vmatprep.subr.bf16.mxu0 0
      %3382 = vmatpush1.bf16.msra.mxu0 0
      %3383 = vmatprep.subr.bf16.mxu0 0
      %3384 = vmatpush1.bf16.msra.mxu0 0
      %3385 = vmatprep.subr.bf16.mxu0 0
      %3386 = vmatpush1.bf16.msra.mxu0 0
      %3387 = vmatprep.subr.bf16.mxu0 0
      %3388 = vmatpush1.bf16.msra.mxu0 0
      %3389 = vmatprep.mubr.bf16.mxu0 0
      %3390 = vmatmul.mubr.bf16.gmra.mrb[0].mxu0 %v3307
      %v3391 = vpop.f32.mrb[0].mxu0
      %v3392 = vadd.f32 %v3180, %v3391
      %v3393 = vpop.f32.mrb[0].mxu0
      %v3394 = vpop.f32.mrb[0].mxu0
      %v3395 = vadd.f32 %v3183, %v3394
      %v3396 = vpop.f32.mrb[0].mxu0
      %3397 = vmatprep.mubr.bf16.mxu0 0
      %3398 = vmatmul.mubr.bf16.gmra.mrb[0].mxu0 %v3310
      %v3399 = vpop.f32.mrb[0].mxu0
      %v3400 = vadd.f32 %v3188, %v3399
      %v3401 = vpop.f32.mrb[0].mxu0
      %v3402 = vpop.f32.mrb[0].mxu0
      %v3403 = vadd.f32 %v3191, %v3402
      %v3404 = vpop.f32.mrb[0].mxu0
      %3405 = vmatprep.mubr.bf16.mxu0 0
      %3406 = vmatmul.mubr.bf16.gmra.mrb[0].mxu0 %v3313
      %v3407 = vpop.f32.mrb[0].mxu0
      %v3408 = vadd.f32 %v3196, %v3407
      %v3409 = vpop.f32.mrb[0].mxu0
      %v3410 = vpop.f32.mrb[0].mxu0
      %v3411 = vadd.f32 %v3199, %v3410
      %v3412 = vpop.f32.mrb[0].mxu0
      %3413 = vmatprep.mubr.bf16.mxu0 0
      %3414 = vmatmul.mubr.bf16.gmra.mrb[0].mxu0 %v3316
      %v3415 = vpop.f32.mrb[0].mxu0
      %v3416 = vadd.f32 %v3204, %v3415
      %v3417 = vpop.f32.mrb[0].mxu0
      %v3418 = vpop.f32.mrb[0].mxu0
      %v3419 = vadd.f32 %v3207, %v3418
      %v3420 = vpop.f32.mrb[0].mxu0
      %3421 = vmatprep.mubr.bf16.mxu0 0
      %3422 = vmatmul.mubr.bf16.gmra.mrb[0].mxu0 %v3319
      %v3423 = vpop.f32.mrb[0].mxu0
      %v3424 = vadd.f32 %v3212, %v3423
      %v3425 = vpop.f32.mrb[0].mxu0
      %v3426 = vpop.f32.mrb[0].mxu0
      %v3427 = vadd.f32 %v3215, %v3426
      %v3428 = vpop.f32.mrb[0].mxu0
      %3429 = vmatprep.mubr.bf16.mxu0 0
      %3430 = vmatmul.mubr.bf16.gmra.mrb[0].mxu0 %v3322
      %v3431 = vpop.f32.mrb[0].mxu0
      %v3432 = vadd.f32 %v3220, %v3431
      %v3433 = vpop.f32.mrb[0].mxu0
      %v3434 = vpop.f32.mrb[0].mxu0
      %v3435 = vadd.f32 %v3223, %v3434
      %v3436 = vpop.f32.mrb[0].mxu0
      %3437 = vmatprep.mubr.bf16.mxu0 0
      %3438 = vmatmul.mubr.bf16.gmra.mrb[0].mxu0 %v3325
      %v3439 = vpop.f32.mrb[0].mxu0
      %v3440 = vadd.f32 %v3228, %v3439
      %v3441 = vpop.f32.mrb[0].mxu0
      %v3442 = vpop.f32.mrb[0].mxu0
      %v3443 = vadd.f32 %v3231, %v3442
      %v3444 = vpop.f32.mrb[0].mxu0
      %3445 = vmatprep.mubr.bf16.mxu0 0
      %3446 = vmatmul.mubr.bf16.gmra.mrb[0].mxu0 %v3328
      %v3447 = vpop.f32.mrb[0].mxu0
      %v3448 = vadd.f32 %v3236, %v3447
      %v3449 = vpop.f32.mrb[0].mxu0
      %v3450 = vpop.f32.mrb[0].mxu0
      %v3451 = vadd.f32 %v3239, %v3450
      %v3452 = vpop.f32.mrb[0].mxu0
      %3453 = vmatprep.mubr.bf16.mxu0 0
      %3454 = vmatmul.mubr.bf16.gmra.mrb[0].mxu0 %v3331
      %v3455 = vpop.f32.mrb[0].mxu0
      %v3456 = vadd.f32 %v3244, %v3455
      %v3457 = vpop.f32.mrb[0].mxu0
      %v3458 = vpop.f32.mrb[0].mxu0
      %v3459 = vadd.f32 %v3247, %v3458
      %v3460 = vpop.f32.mrb[0].mxu0
      %3461 = vmatprep.mubr.bf16.mxu0 0
      %3462 = vmatmul.mubr.bf16.gmra.mrb[0].mxu0 %v3334
      %v3463 = vpop.f32.mrb[0].mxu0
      %v3464 = vadd.f32 %v3252, %v3463
      %v3465 = vpop.f32.mrb[0].mxu0
      %v3466 = vpop.f32.mrb[0].mxu0
      %v3467 = vadd.f32 %v3255, %v3466
      %v3468 = vpop.f32.mrb[0].mxu0
      %3469 = vmatprep.mubr.bf16.mxu0 0
      %3470 = vmatmul.mubr.bf16.gmra.mrb[0].mxu0 %v3337
      %v3471 = vpop.f32.mrb[0].mxu0
      %v3472 = vadd.f32 %v3260, %v3471
      %v3473 = vpop.f32.mrb[0].mxu0
      %v3474 = vpop.f32.mrb[0].mxu0
      %v3475 = vadd.f32 %v3263, %v3474
      %v3476 = vpop.f32.mrb[0].mxu0
      %3477 = vmatprep.mubr.bf16.mxu0 0
      %3478 = vmatmul.mubr.bf16.gmra.mrb[0].mxu0 %v3340
      %v3479 = vpop.f32.mrb[0].mxu0
      %v3480 = vadd.f32 %v3268, %v3479
      %v3481 = vpop.f32.mrb[0].mxu0
      %v3482 = vpop.f32.mrb[0].mxu0
      %v3483 = vadd.f32 %v3271, %v3482
      %v3484 = vpop.f32.mrb[0].mxu0
      %3485 = vmatprep.mubr.bf16.mxu0 0
      %3486 = vmatmul.mubr.bf16.gmra.mrb[0].mxu0 %v3343
      %v3487 = vpop.f32.mrb[0].mxu0
      %v3488 = vadd.f32 %v3276, %v3487
      %v3489 = vpop.f32.mrb[0].mxu0
      %v3490 = vpop.f32.mrb[0].mxu0
      %v3491 = vadd.f32 %v3279, %v3490
      %v3492 = vpop.f32.mrb[0].mxu0
      %3493 = vmatprep.mubr.bf16.mxu0 0
      %3494 = vmatmul.mubr.bf16.gmra.mrb[0].mxu0 %v3346
      %v3495 = vpop.f32.mrb[0].mxu0
      %v3496 = vadd.f32 %v3284, %v3495
      %v3497 = vpop.f32.mrb[0].mxu0
      %v3498 = vpop.f32.mrb[0].mxu0
      %v3499 = vadd.f32 %v3287, %v3498
      %v3500 = vpop.f32.mrb[0].mxu0
      %3501 = vmatprep.mubr.bf16.mxu0 0
      %3502 = vmatmul.mubr.bf16.gmra.mrb[0].mxu0 %v3349
      %v3503 = vpop.f32.mrb[0].mxu0
      %v3504 = vadd.f32 %v3292, %v3503
      %v3505 = vpop.f32.mrb[0].mxu0
      %v3506 = vpop.f32.mrb[0].mxu0
      %v3507 = vadd.f32 %v3295, %v3506
      %v3508 = vpop.f32.mrb[0].mxu0
      %3509 = vmatprep.mubr.bf16.mxu0 0
      %3510 = vmatmul.mubr.bf16.gmra.mrb[0].mxu0 %v3352
      %v3511 = vpop.f32.mrb[0].mxu0
      %v3512 = vadd.f32 %v3300, %v3511
      %v3513 = vpop.f32.mrb[0].mxu0
      %v3514 = vpop.f32.mrb[0].mxu0
      %v3515 = vadd.f32 %v3303, %v3514
      %v3516 = vpop.f32.mrb[0].mxu0
      %3517 = vdwg.mxu0
      %v3518 = vld [vmem:[#allocation3 + $0x2] sm:$0xff]
      %v3519 = vld [vmem:[#allocation3 + $0xa] sm:$0xff]
      %v3520 = vld [vmem:[#allocation3 + $0x1a] sm:$0xff]
      %v3521 = vld [vmem:[#allocation3 + $0x22] sm:$0xff]
      %v3522 = vld [vmem:[#allocation3 + $0x32] sm:$0xff]
      %v3523 = vld [vmem:[#allocation3 + $0x3a] sm:$0xff]
      %v3524 = vld [vmem:[#allocation3 + $0x4a] sm:$0xff]
      %v3525 = vld [vmem:[#allocation3 + $0x52] sm:$0xff]
      %v3526 = vld [vmem:[#allocation3 + $0x62] sm:$0xff]
      %v3527 = vld [vmem:[#allocation3 + $0x6a] sm:$0xff]
      %v3528 = vld [vmem:[#allocation3 + $0x7a] sm:$0xff]
      %v3529 = vld [vmem:[#allocation3 + $0x82] sm:$0xff]
      %v3530 = vld [vmem:[#allocation3 + $0x92] sm:$0xff]
      %v3531 = vld [vmem:[#allocation3 + $0x9a] sm:$0xff]
      %v3532 = vld [vmem:[#allocation3 + $0xaa] sm:$0xff]
      %v3533 = vld [vmem:[#allocation3 + $0xb2] sm:$0xff]
      %v3534 = vld [vmem:[#allocation3 + $0xc2] sm:$0xff]
      %v3535 = vld [vmem:[#allocation3 + $0xca] sm:$0xff]
      %v3536 = vld [vmem:[#allocation3 + $0xda] sm:$0xff]
      %v3537 = vld [vmem:[#allocation3 + $0xe2] sm:$0xff]
      %v3538 = vld [vmem:[#allocation3 + $0xf2] sm:$0xff]
      %v3539 = vld [vmem:[#allocation3 + $0xfa] sm:$0xff]
      %v3540 = vld [vmem:[#allocation3 + $0x10a] sm:$0xff]
      %v3541 = vld [vmem:[#allocation3 + $0x112] sm:$0xff]
      %v3542 = vld [vmem:[#allocation3 + $0x122] sm:$0xff]
      %v3543 = vld [vmem:[#allocation3 + $0x12a] sm:$0xff]
      %v3544 = vld [vmem:[#allocation3 + $0x13a] sm:$0xff]
      %v3545 = vld [vmem:[#allocation3 + $0x142] sm:$0xff]
      %v3546 = vld [vmem:[#allocation3 + $0x152] sm:$0xff]
      %v3547 = vld [vmem:[#allocation3 + $0x15a] sm:$0xff]
      %v3548 = vld [vmem:[#allocation3 + $0x16a] sm:$0xff]
      %v3549 = vld [vmem:[#allocation3 + $0x172] sm:$0xff]
      %v3550 = vpack.c.bf16 %v3519, %v3518
      %v3551 = vpack.c.bf16 %v3521, %v3520
      %v3552 = vpack.c.bf16 %v3523, %v3522
      %v3553 = vpack.c.bf16 %v3525, %v3524
      %v3554 = vpack.c.bf16 %v3527, %v3526
      %v3555 = vpack.c.bf16 %v3529, %v3528
      %v3556 = vpack.c.bf16 %v3531, %v3530
      %v3557 = vpack.c.bf16 %v3533, %v3532
      %v3558 = vpack.c.bf16 %v3535, %v3534
      %v3559 = vpack.c.bf16 %v3537, %v3536
      %v3560 = vpack.c.bf16 %v3539, %v3538
      %v3561 = vpack.c.bf16 %v3541, %v3540
      %v3562 = vpack.c.bf16 %v3543, %v3542
      %v3563 = vpack.c.bf16 %v3545, %v3544
      %v3564 = vpack.c.bf16 %v3547, %v3546
      %v3565 = vpack.c.bf16 %v3549, %v3548
      %s3566 = scalar_lea.vmem %s2, 4
      %v3567 = vld [vmem:[%s3566] sm:$0x3]
      %v3569 = vsel %vm172, %v3550, 0
      %v3572 = vsel %vm172, %v3551, 0
      %v3575 = vsel %vm172, %v3552, 0
      %v3578 = vsel %vm172, %v3553, 0
      %v3581 = vsel %vm172, %v3554, 0
      %v3584 = vsel %vm172, %v3555, 0
      %v3587 = vsel %vm172, %v3556, 0
      %v3590 = vsel %vm172, %v3557, 0
      %v3593 = vsel %vm172, %v3558, 0
      %v3596 = vsel %vm172, %v3559, 0
      %v3599 = vsel %vm172, %v3560, 0
      %v3602 = vsel %vm172, %v3561, 0
      %v3605 = vsel %vm172, %v3562, 0
      %v3608 = vsel %vm172, %v3563, 0
      %v3611 = vsel %vm172, %v3564, 0
      %v3614 = vsel %vm172, %v3565, 0
      %v3617 = vsel %vm494, %v3567, 0
      %3619 = vmatprep.subr.bf16.mxu0 0
      %3620 = vmatpush1.bf16.msra.mxu0 %v3617
      %3621 = vmatprep.subr.bf16.mxu0 0
      %3622 = vmatpush1.bf16.msra.mxu0 0
      %3623 = vmatprep.subr.bf16.mxu0 0
      %3624 = vmatpush1.bf16.msra.mxu0 0
      %3625 = vmatprep.subr.bf16.mxu0 0
      %3626 = vmatpush1.bf16.msra.mxu0 0
      %3627 = vmatprep.subr.bf16.mxu0 0
      %3628 = vmatpush1.bf16.msra.mxu0 0
      %3629 = vmatprep.subr.bf16.mxu0 0
      %3630 = vmatpush1.bf16.msra.mxu0 0
      %3631 = vmatprep.subr.bf16.mxu0 0
      %3632 = vmatpush1.bf16.msra.mxu0 0
      %3633 = vmatprep.subr.bf16.mxu0 0
      %3634 = vmatpush1.bf16.msra.mxu0 0
      %3635 = vmatprep.subr.bf16.mxu0 0
      %3636 = vmatpush1.bf16.msra.mxu0 0
      %3637 = vmatprep.subr.bf16.mxu0 0
      %3638 = vmatpush1.bf16.msra.mxu0 0
      %3639 = vmatprep.subr.bf16.mxu0 0
      %3640 = vmatpush1.bf16.msra.mxu0 0
      %3641 = vmatprep.subr.bf16.mxu0 0
      %3642 = vmatpush1.bf16.msra.mxu0 0
      %3643 = vmatprep.subr.bf16.mxu0 0
      %3644 = vmatpush1.bf16.msra.mxu0 0
      %3645 = vmatprep.subr.bf16.mxu0 0
      %3646 = vmatpush1.bf16.msra.mxu0 0
      %3647 = vmatprep.subr.bf16.mxu0 0
      %3648 = vmatpush1.bf16.msra.mxu0 0
      %3649 = vmatprep.subr.bf16.mxu0 0
      %3650 = vmatpush1.bf16.msra.mxu0 0
      %3651 = vmatprep.mubr.bf16.mxu0 0
      %3652 = vmatmul.mubr.bf16.gmra.mrb[0].mxu0 %v3569
      %v3653 = vpop.f32.mrb[0].mxu0
      %v3654 = vadd.f32 0.0, %v3653
      %v3655 = vpop.f32.mrb[0].mxu0
      %v3656 = vpop.f32.mrb[0].mxu0
      %v3657 = vadd.f32 0.0, %v3656
      %v3658 = vpop.f32.mrb[0].mxu0
      %3659 = vmatprep.mubr.bf16.mxu0 0
      %3660 = vmatmul.mubr.bf16.gmra.mrb[0].mxu0 %v3572
      %v3661 = vpop.f32.mrb[0].mxu0
      %v3662 = vadd.f32 0.0, %v3661
      %v3663 = vpop.f32.mrb[0].mxu0
      %v3664 = vpop.f32.mrb[0].mxu0
      %v3665 = vadd.f32 0.0, %v3664
      %v3666 = vpop.f32.mrb[0].mxu0
      %3667 = vmatprep.mubr.bf16.mxu0 0
      %3668 = vmatmul.mubr.bf16.gmra.mrb[0].mxu0 %v3575
      %v3669 = vpop.f32.mrb[0].mxu0
      %v3670 = vadd.f32 0.0, %v3669
      %v3671 = vpop.f32.mrb[0].mxu0
      %v3672 = vpop.f32.mrb[0].mxu0
      %v3673 = vadd.f32 0.0, %v3672
      %v3674 = vpop.f32.mrb[0].mxu0
      %3675 = vmatprep.mubr.bf16.mxu0 0
      %3676 = vmatmul.mubr.bf16.gmra.mrb[0].mxu0 %v3578
      %v3677 = vpop.f32.mrb[0].mxu0
      %v3678 = vadd.f32 0.0, %v3677
      %v3679 = vpop.f32.mrb[0].mxu0
      %v3680 = vpop.f32.mrb[0].mxu0
      %v3681 = vadd.f32 0.0, %v3680
      %v3682 = vpop.f32.mrb[0].mxu0
      %3683 = vmatprep.mubr.bf16.mxu0 0
      %3684 = vmatmul.mubr.bf16.gmra.mrb[0].mxu0 %v3581
      %v3685 = vpop.f32.mrb[0].mxu0
      %v3686 = vadd.f32 0.0, %v3685
      %v3687 = vpop.f32.mrb[0].mxu0
      %v3688 = vpop.f32.mrb[0].mxu0
      %v3689 = vadd.f32 0.0, %v3688
      %v3690 = vpop.f32.mrb[0].mxu0
      %3691 = vmatprep.mubr.bf16.mxu0 0
      %3692 = vmatmul.mubr.bf16.gmra.mrb[0].mxu0 %v3584
      %v3693 = vpop.f32.mrb[0].mxu0
      %v3694 = vadd.f32 0.0, %v3693
      %v3695 = vpop.f32.mrb[0].mxu0
      %v3696 = vpop.f32.mrb[0].mxu0
      %v3697 = vadd.f32 0.0, %v3696
      %v3698 = vpop.f32.mrb[0].mxu0
      %3699 = vmatprep.mubr.bf16.mxu0 0
      %3700 = vmatmul.mubr.bf16.gmra.mrb[0].mxu0 %v3587
      %v3701 = vpop.f32.mrb[0].mxu0
      %v3702 = vadd.f32 0.0, %v3701
      %v3703 = vpop.f32.mrb[0].mxu0
      %v3704 = vpop.f32.mrb[0].mxu0
      %v3705 = vadd.f32 0.0, %v3704
      %v3706 = vpop.f32.mrb[0].mxu0
      %3707 = vmatprep.mubr.bf16.mxu0 0
      %3708 = vmatmul.mubr.bf16.gmra.mrb[0].mxu0 %v3590
      %v3709 = vpop.f32.mrb[0].mxu0
      %v3710 = vadd.f32 0.0, %v3709
      %v3711 = vpop.f32.mrb[0].mxu0
      %v3712 = vpop.f32.mrb[0].mxu0
      %v3713 = vadd.f32 0.0, %v3712
      %v3714 = vpop.f32.mrb[0].mxu0
      %3715 = vmatprep.mubr.bf16.mxu0 0
      %3716 = vmatmul.mubr.bf16.gmra.mrb[0].mxu0 %v3593
      %v3717 = vpop.f32.mrb[0].mxu0
      %v3718 = vadd.f32 0.0, %v3717
      %v3719 = vpop.f32.mrb[0].mxu0
      %v3720 = vpop.f32.mrb[0].mxu0
      %v3721 = vadd.f32 0.0, %v3720
      %v3722 = vpop.f32.mrb[0].mxu0
      %3723 = vmatprep.mubr.bf16.mxu0 0
      %3724 = vmatmul.mubr.bf16.gmra.mrb[0].mxu0 %v3596
      %v3725 = vpop.f32.mrb[0].mxu0
      %v3726 = vadd.f32 0.0, %v3725
      %v3727 = vpop.f32.mrb[0].mxu0
      %v3728 = vpop.f32.mrb[0].mxu0
      %v3729 = vadd.f32 0.0, %v3728
      %v3730 = vpop.f32.mrb[0].mxu0
      %3731 = vmatprep.mubr.bf16.mxu0 0
      %3732 = vmatmul.mubr.bf16.gmra.mrb[0].mxu0 %v3599
      %v3733 = vpop.f32.mrb[0].mxu0
      %v3734 = vadd.f32 0.0, %v3733
      %v3735 = vpop.f32.mrb[0].mxu0
      %v3736 = vpop.f32.mrb[0].mxu0
      %v3737 = vadd.f32 0.0, %v3736
      %v3738 = vpop.f32.mrb[0].mxu0
      %3739 = vmatprep.mubr.bf16.mxu0 0
      %3740 = vmatmul.mubr.bf16.gmra.mrb[0].mxu0 %v3602
      %v3741 = vpop.f32.mrb[0].mxu0
      %v3742 = vadd.f32 0.0, %v3741
      %v3743 = vpop.f32.mrb[0].mxu0
      %v3744 = vpop.f32.mrb[0].mxu0
      %v3745 = vadd.f32 0.0, %v3744
      %v3746 = vpop.f32.mrb[0].mxu0
      %3747 = vmatprep.mubr.bf16.mxu0 0
      %3748 = vmatmul.mubr.bf16.gmra.mrb[0].mxu0 %v3605
      %v3749 = vpop.f32.mrb[0].mxu0
      %v3750 = vadd.f32 0.0, %v3749
      %v3751 = vpop.f32.mrb[0].mxu0
      %v3752 = vpop.f32.mrb[0].mxu0
      %v3753 = vadd.f32 0.0, %v3752
      %v3754 = vpop.f32.mrb[0].mxu0
      %3755 = vmatprep.mubr.bf16.mxu0 0
      %3756 = vmatmul.mubr.bf16.gmra.mrb[0].mxu0 %v3608
      %v3757 = vpop.f32.mrb[0].mxu0
      %v3758 = vadd.f32 0.0, %v3757
      %v3759 = vpop.f32.mrb[0].mxu0
      %v3760 = vpop.f32.mrb[0].mxu0
      %v3761 = vadd.f32 0.0, %v3760
      %v3762 = vpop.f32.mrb[0].mxu0
      %3763 = vmatprep.mubr.bf16.mxu0 0
      %3764 = vmatmul.mubr.bf16.gmra.mrb[0].mxu0 %v3611
      %v3765 = vpop.f32.mrb[0].mxu0
      %v3766 = vadd.f32 0.0, %v3765
      %v3767 = vpop.f32.mrb[0].mxu0
      %v3768 = vpop.f32.mrb[0].mxu0
      %v3769 = vadd.f32 0.0, %v3768
      %v3770 = vpop.f32.mrb[0].mxu0
      %3771 = vmatprep.mubr.bf16.mxu0 0
      %3772 = vmatmul.mubr.bf16.gmra.mrb[0].mxu0 %v3614
      %v3773 = vpop.f32.mrb[0].mxu0
      %v3774 = vadd.f32 0.0, %v3773
      %v3775 = vpop.f32.mrb[0].mxu0
      %v3776 = vpop.f32.mrb[0].mxu0
      %v3777 = vadd.f32 0.0, %v3776
      %v3778 = vpop.f32.mrb[0].mxu0
      %3779 = vdwg.mxu0
      %v3780 = vadd.f32 %v3392, %v3654
      %v3781 = vadd.f32 %v3395, %v3657
      %v3782 = vadd.f32 %v3400, %v3662
      %v3783 = vadd.f32 %v3403, %v3665
      %v3784 = vadd.f32 %v3408, %v3670
      %v3785 = vadd.f32 %v3411, %v3673
      %v3786 = vadd.f32 %v3416, %v3678
      %v3787 = vadd.f32 %v3419, %v3681
      %v3788 = vadd.f32 %v3424, %v3686
      %v3789 = vadd.f32 %v3427, %v3689
      %v3790 = vadd.f32 %v3432, %v3694
      %v3791 = vadd.f32 %v3435, %v3697
      %v3792 = vadd.f32 %v3440, %v3702
      %v3793 = vadd.f32 %v3443, %v3705
      %v3794 = vadd.f32 %v3448, %v3710
      %v3795 = vadd.f32 %v3451, %v3713
      %v3796 = vadd.f32 %v3456, %v3718
      %v3797 = vadd.f32 %v3459, %v3721
      %v3798 = vadd.f32 %v3464, %v3726
      %v3799 = vadd.f32 %v3467, %v3729
      %v3800 = vadd.f32 %v3472, %v3734
      %v3801 = vadd.f32 %v3475, %v3737
      %v3802 = vadd.f32 %v3480, %v3742
      %v3803 = vadd.f32 %v3483, %v3745
      %v3804 = vadd.f32 %v3488, %v3750
      %v3805 = vadd.f32 %v3491, %v3753
      %v3806 = vadd.f32 %v3496, %v3758
      %v3807 = vadd.f32 %v3499, %v3761
      %v3808 = vadd.f32 %v3504, %v3766
      %v3809 = vadd.f32 %v3507, %v3769
      %v3810 = vadd.f32 %v3512, %v3774
      %v3811 = vadd.f32 %v3515, %v3777
      %v3812 = vld [vmem:[%s2962] sm:$0xff]
      %v3813 = vld [vmem:[%s2962 + $0x8] sm:$0xff]
      %v3814 = vld [vmem:[%s2962 + $0x18] sm:$0xff]
      %v3815 = vld [vmem:[%s2962 + $0x20] sm:$0xff]
      %v3816 = vld [vmem:[%s2962 + $0x30] sm:$0xff]
      %v3817 = vld [vmem:[%s2962 + $0x38] sm:$0xff]
      %v3818 = vld [vmem:[%s2962 + $0x48] sm:$0xff]
      %v3819 = vld [vmem:[%s2962 + $0x50] sm:$0xff]
      %v3820 = vld [vmem:[%s2962 + $0x60] sm:$0xff]
      %v3821 = vld [vmem:[%s2962 + $0x68] sm:$0xff]
      %v3822 = vld [vmem:[%s2962 + $0x78] sm:$0xff]
      %v3823 = vld [vmem:[%s2962 + $0x80] sm:$0xff]
      %v3824 = vld [vmem:[%s2962 + $0x90] sm:$0xff]
      %v3825 = vld [vmem:[%s2962 + $0x98] sm:$0xff]
      %v3826 = vld [vmem:[%s2962 + $0xa8] sm:$0xff]
      %v3827 = vld [vmem:[%s2962 + $0xb0] sm:$0xff]
      %v3828 = vld [vmem:[%s2962 + $0xc0] sm:$0xff]
      %v3829 = vld [vmem:[%s2962 + $0xc8] sm:$0xff]
      %v3830 = vld [vmem:[%s2962 + $0xd8] sm:$0xff]
      %v3831 = vld [vmem:[%s2962 + $0xe0] sm:$0xff]
      %v3832 = vld [vmem:[%s2962 + $0xf0] sm:$0xff]
      %v3833 = vld [vmem:[%s2962 + $0xf8] sm:$0xff]
      %v3834 = vld [vmem:[%s2962 + $0x108] sm:$0xff]
      %v3835 = vld [vmem:[%s2962 + $0x110] sm:$0xff]
      %v3836 = vld [vmem:[%s2962 + $0x120] sm:$0xff]
      %v3837 = vld [vmem:[%s2962 + $0x128] sm:$0xff]
      %v3838 = vld [vmem:[%s2962 + $0x138] sm:$0xff]
      %v3839 = vld [vmem:[%s2962 + $0x140] sm:$0xff]
      %v3840 = vld [vmem:[%s2962 + $0x150] sm:$0xff]
      %v3841 = vld [vmem:[%s2962 + $0x158] sm:$0xff]
      %v3842 = vld [vmem:[%s2962 + $0x168] sm:$0xff]
      %v3843 = vld [vmem:[%s2962 + $0x170] sm:$0xff]
      %v3844 = vpack.c.bf16 %v3813, %v3812
      %v3845 = vpack.c.bf16 %v3815, %v3814
      %v3846 = vpack.c.bf16 %v3817, %v3816
      %v3847 = vpack.c.bf16 %v3819, %v3818
      %v3848 = vpack.c.bf16 %v3821, %v3820
      %v3849 = vpack.c.bf16 %v3823, %v3822
      %v3850 = vpack.c.bf16 %v3825, %v3824
      %v3851 = vpack.c.bf16 %v3827, %v3826
      %v3852 = vpack.c.bf16 %v3829, %v3828
      %v3853 = vpack.c.bf16 %v3831, %v3830
      %v3854 = vpack.c.bf16 %v3833, %v3832
      %v3855 = vpack.c.bf16 %v3835, %v3834
      %v3856 = vpack.c.bf16 %v3837, %v3836
      %v3857 = vpack.c.bf16 %v3839, %v3838
      %v3858 = vpack.c.bf16 %v3841, %v3840
      %v3859 = vpack.c.bf16 %v3843, %v3842
      %s3860 = scalar_lea.vmem %s2, 6
      %v3861 = vld [vmem:[%s3860] sm:$0x3]
      %v3863 = vsel %vm172, %v3844, 0
      %v3866 = vsel %vm172, %v3845, 0
      %v3869 = vsel %vm172, %v3846, 0
      %v3872 = vsel %vm172, %v3847, 0
      %v3875 = vsel %vm172, %v3848, 0
      %v3878 = vsel %vm172, %v3849, 0
      %v3881 = vsel %vm172, %v3850, 0
      %v3884 = vsel %vm172, %v3851, 0
      %v3887 = vsel %vm172, %v3852, 0
      %v3890 = vsel %vm172, %v3853, 0
      %v3893 = vsel %vm172, %v3854, 0
      %v3896 = vsel %vm172, %v3855, 0
      %v3899 = vsel %vm172, %v3856, 0
      %v3902 = vsel %vm172, %v3857, 0
      %v3905 = vsel %vm172, %v3858, 0
      %v3908 = vsel %vm172, %v3859, 0
      %v3911 = vsel %vm494, %v3861, 0
      %3913 = vmatprep.subr.bf16.mxu0 0
      %3914 = vmatpush1.bf16.msra.mxu0 %v3911
      %3915 = vmatprep.subr.bf16.mxu0 0
      %3916 = vmatpush1.bf16.msra.mxu0 0
      %3917 = vmatprep.subr.bf16.mxu0 0
      %3918 = vmatpush1.bf16.msra.mxu0 0
      %3919 = vmatprep.subr.bf16.mxu0 0
      %3920 = vmatpush1.bf16.msra.mxu0 0
      %3921 = vmatprep.subr.bf16.mxu0 0
      %3922 = vmatpush1.bf16.msra.mxu0 0
      %3923 = vmatprep.subr.bf16.mxu0 0
      %3924 = vmatpush1.bf16.msra.mxu0 0
      %3925 = vmatprep.subr.bf16.mxu0 0
      %3926 = vmatpush1.bf16.msra.mxu0 0
      %3927 = vmatprep.subr.bf16.mxu0 0
      %3928 = vmatpush1.bf16.msra.mxu0 0
      %3929 = vmatprep.subr.bf16.mxu0 0
      %3930 = vmatpush1.bf16.msra.mxu0 0
      %3931 = vmatprep.subr.bf16.mxu0 0
      %3932 = vmatpush1.bf16.msra.mxu0 0
      %3933 = vmatprep.subr.bf16.mxu0 0
      %3934 = vmatpush1.bf16.msra.mxu0 0
      %3935 = vmatprep.subr.bf16.mxu0 0
      %3936 = vmatpush1.bf16.msra.mxu0 0
      %3937 = vmatprep.subr.bf16.mxu0 0
      %3938 = vmatpush1.bf16.msra.mxu0 0
      %3939 = vmatprep.subr.bf16.mxu0 0
      %3940 = vmatpush1.bf16.msra.mxu0 0
      %3941 = vmatprep.subr.bf16.mxu0 0
      %3942 = vmatpush1.bf16.msra.mxu0 0
      %3943 = vmatprep.subr.bf16.mxu0 0
      %3944 = vmatpush1.bf16.msra.mxu0 0
      %3945 = vmatprep.mubr.bf16.mxu0 0
      %3946 = vmatmul.mubr.bf16.gmra.mrb[0].mxu0 %v3863
      %v3947 = vpop.f32.mrb[0].mxu0
      %v3948 = vadd.f32 0.0, %v3947
      %v3949 = vpop.f32.mrb[0].mxu0
      %v3950 = vpop.f32.mrb[0].mxu0
      %v3951 = vadd.f32 0.0, %v3950
      %v3952 = vpop.f32.mrb[0].mxu0
      %3953 = vmatprep.mubr.bf16.mxu0 0
      %3954 = vmatmul.mubr.bf16.gmra.mrb[0].mxu0 %v3866
      %v3955 = vpop.f32.mrb[0].mxu0
      %v3956 = vadd.f32 0.0, %v3955
      %v3957 = vpop.f32.mrb[0].mxu0
      %v3958 = vpop.f32.mrb[0].mxu0
      %v3959 = vadd.f32 0.0, %v3958
      %v3960 = vpop.f32.mrb[0].mxu0
      %3961 = vmatprep.mubr.bf16.mxu0 0
      %3962 = vmatmul.mubr.bf16.gmra.mrb[0].mxu0 %v3869
      %v3963 = vpop.f32.mrb[0].mxu0
      %v3964 = vadd.f32 0.0, %v3963
      %v3965 = vpop.f32.mrb[0].mxu0
      %v3966 = vpop.f32.mrb[0].mxu0
      %v3967 = vadd.f32 0.0, %v3966
      %v3968 = vpop.f32.mrb[0].mxu0
      %3969 = vmatprep.mubr.bf16.mxu0 0
      %3970 = vmatmul.mubr.bf16.gmra.mrb[0].mxu0 %v3872
      %v3971 = vpop.f32.mrb[0].mxu0
      %v3972 = vadd.f32 0.0, %v3971
      %v3973 = vpop.f32.mrb[0].mxu0
      %v3974 = vpop.f32.mrb[0].mxu0
      %v3975 = vadd.f32 0.0, %v3974
      %v3976 = vpop.f32.mrb[0].mxu0
      %3977 = vmatprep.mubr.bf16.mxu0 0
      %3978 = vmatmul.mubr.bf16.gmra.mrb[0].mxu0 %v3875
      %v3979 = vpop.f32.mrb[0].mxu0
      %v3980 = vadd.f32 0.0, %v3979
      %v3981 = vpop.f32.mrb[0].mxu0
      %v3982 = vpop.f32.mrb[0].mxu0
      %v3983 = vadd.f32 0.0, %v3982
      %v3984 = vpop.f32.mrb[0].mxu0
      %3985 = vmatprep.mubr.bf16.mxu0 0
      %3986 = vmatmul.mubr.bf16.gmra.mrb[0].mxu0 %v3878
      %v3987 = vpop.f32.mrb[0].mxu0
      %v3988 = vadd.f32 0.0, %v3987
      %v3989 = vpop.f32.mrb[0].mxu0
      %v3990 = vpop.f32.mrb[0].mxu0
      %v3991 = vadd.f32 0.0, %v3990
      %v3992 = vpop.f32.mrb[0].mxu0
      %3993 = vmatprep.mubr.bf16.mxu0 0
      %3994 = vmatmul.mubr.bf16.gmra.mrb[0].mxu0 %v3881
      %v3995 = vpop.f32.mrb[0].mxu0
      %v3996 = vadd.f32 0.0, %v3995
      %v3997 = vpop.f32.mrb[0].mxu0
      %v3998 = vpop.f32.mrb[0].mxu0
      %v3999 = vadd.f32 0.0, %v3998
      %v4000 = vpop.f32.mrb[0].mxu0
      %4001 = vmatprep.mubr.bf16.mxu0 0
      %4002 = vmatmul.mubr.bf16.gmra.mrb[0].mxu0 %v3884
      %v4003 = vpop.f32.mrb[0].mxu0
      %v4004 = vadd.f32 0.0, %v4003
      %v4005 = vpop.f32.mrb[0].mxu0
      %v4006 = vpop.f32.mrb[0].mxu0
      %v4007 = vadd.f32 0.0, %v4006
      %v4008 = vpop.f32.mrb[0].mxu0
      %4009 = vmatprep.mubr.bf16.mxu0 0
      %4010 = vmatmul.mubr.bf16.gmra.mrb[0].mxu0 %v3887
      %v4011 = vpop.f32.mrb[0].mxu0
      %v4012 = vadd.f32 0.0, %v4011
      %v4013 = vpop.f32.mrb[0].mxu0
      %v4014 = vpop.f32.mrb[0].mxu0
      %v4015 = vadd.f32 0.0, %v4014
      %v4016 = vpop.f32.mrb[0].mxu0
      %4017 = vmatprep.mubr.bf16.mxu0 0
      %4018 = vmatmul.mubr.bf16.gmra.mrb[0].mxu0 %v3890
      %v4019 = vpop.f32.mrb[0].mxu0
      %v4020 = vadd.f32 0.0, %v4019
      %v4021 = vpop.f32.mrb[0].mxu0
      %v4022 = vpop.f32.mrb[0].mxu0
      %v4023 = vadd.f32 0.0, %v4022
      %v4024 = vpop.f32.mrb[0].mxu0
      %4025 = vmatprep.mubr.bf16.mxu0 0
      %4026 = vmatmul.mubr.bf16.gmra.mrb[0].mxu0 %v3893
      %v4027 = vpop.f32.mrb[0].mxu0
      %v4028 = vadd.f32 0.0, %v4027
      %v4029 = vpop.f32.mrb[0].mxu0
      %v4030 = vpop.f32.mrb[0].mxu0
      %v4031 = vadd.f32 0.0, %v4030
      %v4032 = vpop.f32.mrb[0].mxu0
      %4033 = vmatprep.mubr.bf16.mxu0 0
      %4034 = vmatmul.mubr.bf16.gmra.mrb[0].mxu0 %v3896
      %v4035 = vpop.f32.mrb[0].mxu0
      %v4036 = vadd.f32 0.0, %v4035
      %v4037 = vpop.f32.mrb[0].mxu0
      %v4038 = vpop.f32.mrb[0].mxu0
      %v4039 = vadd.f32 0.0, %v4038
      %v4040 = vpop.f32.mrb[0].mxu0
      %4041 = vmatprep.mubr.bf16.mxu0 0
      %4042 = vmatmul.mubr.bf16.gmra.mrb[0].mxu0 %v3899
      %v4043 = vpop.f32.mrb[0].mxu0
      %v4044 = vadd.f32 0.0, %v4043
      %v4045 = vpop.f32.mrb[0].mxu0
      %v4046 = vpop.f32.mrb[0].mxu0
      %v4047 = vadd.f32 0.0, %v4046
      %v4048 = vpop.f32.mrb[0].mxu0
      %4049 = vmatprep.mubr.bf16.mxu0 0
      %4050 = vmatmul.mubr.bf16.gmra.mrb[0].mxu0 %v3902
      %v4051 = vpop.f32.mrb[0].mxu0
      %v4052 = vadd.f32 0.0, %v4051
      %v4053 = vpop.f32.mrb[0].mxu0
      %v4054 = vpop.f32.mrb[0].mxu0
      %v4055 = vadd.f32 0.0, %v4054
      %v4056 = vpop.f32.mrb[0].mxu0
      %4057 = vmatprep.mubr.bf16.mxu0 0
      %4058 = vmatmul.mubr.bf16.gmra.mrb[0].mxu0 %v3905
      %v4059 = vpop.f32.mrb[0].mxu0
      %v4060 = vadd.f32 0.0, %v4059
      %v4061 = vpop.f32.mrb[0].mxu0
      %v4062 = vpop.f32.mrb[0].mxu0
      %v4063 = vadd.f32 0.0, %v4062
      %v4064 = vpop.f32.mrb[0].mxu0
      %4065 = vmatprep.mubr.bf16.mxu0 0
      %4066 = vmatmul.mubr.bf16.gmra.mrb[0].mxu0 %v3908
      %v4067 = vpop.f32.mrb[0].mxu0
      %v4068 = vadd.f32 0.0, %v4067
      %v4069 = vpop.f32.mrb[0].mxu0
      %v4070 = vpop.f32.mrb[0].mxu0
      %v4071 = vadd.f32 0.0, %v4070
      %v4072 = vpop.f32.mrb[0].mxu0
      %4073 = vdwg.mxu0
      %v4074 = vadd.f32 %v3780, %v3948
      %v4075 = vadd.f32 %v3781, %v3951
      %v4076 = vadd.f32 %v3782, %v3956
      %v4077 = vadd.f32 %v3783, %v3959
      %v4078 = vadd.f32 %v3784, %v3964
      %v4079 = vadd.f32 %v3785, %v3967
      %v4080 = vadd.f32 %v3786, %v3972
      %v4081 = vadd.f32 %v3787, %v3975
      %v4082 = vadd.f32 %v3788, %v3980
      %v4083 = vadd.f32 %v3789, %v3983
      %v4084 = vadd.f32 %v3790, %v3988
      %v4085 = vadd.f32 %v3791, %v3991
      %v4086 = vadd.f32 %v3792, %v3996
      %v4087 = vadd.f32 %v3793, %v3999
      %v4088 = vadd.f32 %v3794, %v4004
      %v4089 = vadd.f32 %v3795, %v4007
      %v4090 = vadd.f32 %v3796, %v4012
      %v4091 = vadd.f32 %v3797, %v4015
      %v4092 = vadd.f32 %v3798, %v4020
      %v4093 = vadd.f32 %v3799, %v4023
      %v4094 = vadd.f32 %v3800, %v4028
      %v4095 = vadd.f32 %v3801, %v4031
      %v4096 = vadd.f32 %v3802, %v4036
      %v4097 = vadd.f32 %v3803, %v4039
      %v4098 = vadd.f32 %v3804, %v4044
      %v4099 = vadd.f32 %v3805, %v4047
      %v4100 = vadd.f32 %v3806, %v4052
      %v4101 = vadd.f32 %v3807, %v4055
      %v4102 = vadd.f32 %v3808, %v4060
      %v4103 = vadd.f32 %v3809, %v4063
      %v4104 = vadd.f32 %v3810, %v4068
      %v4105 = vadd.f32 %v3811, %v4071
      %v4106 = vld [vmem:[%s2962 + $0x1] sm:$0xff]
      %v4107 = vld [vmem:[%s2962 + $0x9] sm:$0xff]
      %v4108 = vld [vmem:[%s2962 + $0x19] sm:$0xff]
      %v4109 = vld [vmem:[%s2962 + $0x21] sm:$0xff]
      %v4110 = vld [vmem:[%s2962 + $0x31] sm:$0xff]
      %v4111 = vld [vmem:[%s2962 + $0x39] sm:$0xff]
      %v4112 = vld [vmem:[%s2962 + $0x49] sm:$0xff]
      %v4113 = vld [vmem:[%s2962 + $0x51] sm:$0xff]
      %v4114 = vld [vmem:[%s2962 + $0x61] sm:$0xff]
      %v4115 = vld [vmem:[%s2962 + $0x69] sm:$0xff]
      %v4116 = vld [vmem:[%s2962 + $0x79] sm:$0xff]
      %v4117 = vld [vmem:[%s2962 + $0x81] sm:$0xff]
      %v4118 = vld [vmem:[%s2962 + $0x91] sm:$0xff]
      %v4119 = vld [vmem:[%s2962 + $0x99] sm:$0xff]
      %v4120 = vld [vmem:[%s2962 + $0xa9] sm:$0xff]
      %v4121 = vld [vmem:[%s2962 + $0xb1] sm:$0xff]
      %v4122 = vld [vmem:[%s2962 + $0xc1] sm:$0xff]
      %v4123 = vld [vmem:[%s2962 + $0xc9] sm:$0xff]
      %v4124 = vld [vmem:[%s2962 + $0xd9] sm:$0xff]
      %v4125 = vld [vmem:[%s2962 + $0xe1] sm:$0xff]
      %v4126 = vld [vmem:[%s2962 + $0xf1] sm:$0xff]
      %v4127 = vld [vmem:[%s2962 + $0xf9] sm:$0xff]
      %v4128 = vld [vmem:[%s2962 + $0x109] sm:$0xff]
      %v4129 = vld [vmem:[%s2962 + $0x111] sm:$0xff]
      %v4130 = vld [vmem:[%s2962 + $0x121] sm:$0xff]
      %v4131 = vld [vmem:[%s2962 + $0x129] sm:$0xff]
      %v4132 = vld [vmem:[%s2962 + $0x139] sm:$0xff]
      %v4133 = vld [vmem:[%s2962 + $0x141] sm:$0xff]
      %v4134 = vld [vmem:[%s2962 + $0x151] sm:$0xff]
      %v4135 = vld [vmem:[%s2962 + $0x159] sm:$0xff]
      %v4136 = vld [vmem:[%s2962 + $0x169] sm:$0xff]
      %v4137 = vld [vmem:[%s2962 + $0x171] sm:$0xff]
      %v4138 = vpack.c.bf16 %v4107, %v4106
      %v4139 = vpack.c.bf16 %v4109, %v4108
      %v4140 = vpack.c.bf16 %v4111, %v4110
      %v4141 = vpack.c.bf16 %v4113, %v4112
      %v4142 = vpack.c.bf16 %v4115, %v4114
      %v4143 = vpack.c.bf16 %v4117, %v4116
      %v4144 = vpack.c.bf16 %v4119, %v4118
      %v4145 = vpack.c.bf16 %v4121, %v4120
      %v4146 = vpack.c.bf16 %v4123, %v4122
      %v4147 = vpack.c.bf16 %v4125, %v4124
      %v4148 = vpack.c.bf16 %v4127, %v4126
      %v4149 = vpack.c.bf16 %v4129, %v4128
      %v4150 = vpack.c.bf16 %v4131, %v4130
      %v4151 = vpack.c.bf16 %v4133, %v4132
      %v4152 = vpack.c.bf16 %v4135, %v4134
      %v4153 = vpack.c.bf16 %v4137, %v4136
      %s4154 = scalar_lea.vmem %s2, 8
      %v4155 = vld [vmem:[%s4154] sm:$0x3]
      %v4157 = vsel %vm172, %v4138, 0
      %v4160 = vsel %vm172, %v4139, 0
      %v4163 = vsel %vm172, %v4140, 0
      %v4166 = vsel %vm172, %v4141, 0
      %v4169 = vsel %vm172, %v4142, 0
      %v4172 = vsel %vm172, %v4143, 0
      %v4175 = vsel %vm172, %v4144, 0
      %v4178 = vsel %vm172, %v4145, 0
      %v4181 = vsel %vm172, %v4146, 0
      %v4184 = vsel %vm172, %v4147, 0
      %v4187 = vsel %vm172, %v4148, 0
      %v4190 = vsel %vm172, %v4149, 0
      %v4193 = vsel %vm172, %v4150, 0
      %v4196 = vsel %vm172, %v4151, 0
      %v4199 = vsel %vm172, %v4152, 0
      %v4202 = vsel %vm172, %v4153, 0
      %v4205 = vsel %vm494, %v4155, 0
      %4207 = vmatprep.subr.bf16.mxu0 0
      %4208 = vmatpush1.bf16.msra.mxu0 %v4205
      %4209 = vmatprep.subr.bf16.mxu0 0
      %4210 = vmatpush1.bf16.msra.mxu0 0
      %4211 = vmatprep.subr.bf16.mxu0 0
      %4212 = vmatpush1.bf16.msra.mxu0 0
      %4213 = vmatprep.subr.bf16.mxu0 0
      %4214 = vmatpush1.bf16.msra.mxu0 0
      %4215 = vmatprep.subr.bf16.mxu0 0
      %4216 = vmatpush1.bf16.msra.mxu0 0
      %4217 = vmatprep.subr.bf16.mxu0 0
      %4218 = vmatpush1.bf16.msra.mxu0 0
      %4219 = vmatprep.subr.bf16.mxu0 0
      %4220 = vmatpush1.bf16.msra.mxu0 0
      %4221 = vmatprep.subr.bf16.mxu0 0
      %4222 = vmatpush1.bf16.msra.mxu0 0
      %4223 = vmatprep.subr.bf16.mxu0 0
      %4224 = vmatpush1.bf16.msra.mxu0 0
      %4225 = vmatprep.subr.bf16.mxu0 0
      %4226 = vmatpush1.bf16.msra.mxu0 0
      %4227 = vmatprep.subr.bf16.mxu0 0
      %4228 = vmatpush1.bf16.msra.mxu0 0
      %4229 = vmatprep.subr.bf16.mxu0 0
      %4230 = vmatpush1.bf16.msra.mxu0 0
      %4231 = vmatprep.subr.bf16.mxu0 0
      %4232 = vmatpush1.bf16.msra.mxu0 0
      %4233 = vmatprep.subr.bf16.mxu0 0
      %4234 = vmatpush1.bf16.msra.mxu0 0
      %4235 = vmatprep.subr.bf16.mxu0 0
      %4236 = vmatpush1.bf16.msra.mxu0 0
      %4237 = vmatprep.subr.bf16.mxu0 0
      %4238 = vmatpush1.bf16.msra.mxu0 0
      %4239 = vmatprep.mubr.bf16.mxu0 0
      %4240 = vmatmul.mubr.bf16.gmra.mrb[0].mxu0 %v4157
      %v4241 = vpop.f32.mrb[0].mxu0
      %v4242 = vadd.f32 0.0, %v4241
      %v4243 = vpop.f32.mrb[0].mxu0
      %v4244 = vpop.f32.mrb[0].mxu0
      %v4245 = vadd.f32 0.0, %v4244
      %v4246 = vpop.f32.mrb[0].mxu0
      %4247 = vmatprep.mubr.bf16.mxu0 0
      %4248 = vmatmul.mubr.bf16.gmra.mrb[0].mxu0 %v4160
      %v4249 = vpop.f32.mrb[0].mxu0
      %v4250 = vadd.f32 0.0, %v4249
      %v4251 = vpop.f32.mrb[0].mxu0
      %v4252 = vpop.f32.mrb[0].mxu0
      %v4253 = vadd.f32 0.0, %v4252
      %v4254 = vpop.f32.mrb[0].mxu0
      %4255 = vmatprep.mubr.bf16.mxu0 0
      %4256 = vmatmul.mubr.bf16.gmra.mrb[0].mxu0 %v4163
      %v4257 = vpop.f32.mrb[0].mxu0
      %v4258 = vadd.f32 0.0, %v4257
      %v4259 = vpop.f32.mrb[0].mxu0
      %v4260 = vpop.f32.mrb[0].mxu0
      %v4261 = vadd.f32 0.0, %v4260
      %v4262 = vpop.f32.mrb[0].mxu0
      %4263 = vmatprep.mubr.bf16.mxu0 0
      %4264 = vmatmul.mubr.bf16.gmra.mrb[0].mxu0 %v4166
      %v4265 = vpop.f32.mrb[0].mxu0
      %v4266 = vadd.f32 0.0, %v4265
      %v4267 = vpop.f32.mrb[0].mxu0
      %v4268 = vpop.f32.mrb[0].mxu0
      %v4269 = vadd.f32 0.0, %v4268
      %v4270 = vpop.f32.mrb[0].mxu0
      %4271 = vmatprep.mubr.bf16.mxu0 0
      %4272 = vmatmul.mubr.bf16.gmra.mrb[0].mxu0 %v4169
      %v4273 = vpop.f32.mrb[0].mxu0
      %v4274 = vadd.f32 0.0, %v4273
      %v4275 = vpop.f32.mrb[0].mxu0
      %v4276 = vpop.f32.mrb[0].mxu0
      %v4277 = vadd.f32 0.0, %v4276
      %v4278 = vpop.f32.mrb[0].mxu0
      %4279 = vmatprep.mubr.bf16.mxu0 0
      %4280 = vmatmul.mubr.bf16.gmra.mrb[0].mxu0 %v4172
      %v4281 = vpop.f32.mrb[0].mxu0
      %v4282 = vadd.f32 0.0, %v4281
      %v4283 = vpop.f32.mrb[0].mxu0
      %v4284 = vpop.f32.mrb[0].mxu0
      %v4285 = vadd.f32 0.0, %v4284
      %v4286 = vpop.f32.mrb[0].mxu0
      %4287 = vmatprep.mubr.bf16.mxu0 0
      %4288 = vmatmul.mubr.bf16.gmra.mrb[0].mxu0 %v4175
      %v4289 = vpop.f32.mrb[0].mxu0
      %v4290 = vadd.f32 0.0, %v4289
      %v4291 = vpop.f32.mrb[0].mxu0
      %v4292 = vpop.f32.mrb[0].mxu0
      %v4293 = vadd.f32 0.0, %v4292
      %v4294 = vpop.f32.mrb[0].mxu0
      %4295 = vmatprep.mubr.bf16.mxu0 0
      %4296 = vmatmul.mubr.bf16.gmra.mrb[0].mxu0 %v4178
      %v4297 = vpop.f32.mrb[0].mxu0
      %v4298 = vadd.f32 0.0, %v4297
      %v4299 = vpop.f32.mrb[0].mxu0
      %v4300 = vpop.f32.mrb[0].mxu0
      %v4301 = vadd.f32 0.0, %v4300
      %v4302 = vpop.f32.mrb[0].mxu0
      %4303 = vmatprep.mubr.bf16.mxu0 0
      %4304 = vmatmul.mubr.bf16.gmra.mrb[0].mxu0 %v4181
      %v4305 = vpop.f32.mrb[0].mxu0
      %v4306 = vadd.f32 0.0, %v4305
      %v4307 = vpop.f32.mrb[0].mxu0
      %v4308 = vpop.f32.mrb[0].mxu0
      %v4309 = vadd.f32 0.0, %v4308
      %v4310 = vpop.f32.mrb[0].mxu0
      %4311 = vmatprep.mubr.bf16.mxu0 0
      %4312 = vmatmul.mubr.bf16.gmra.mrb[0].mxu0 %v4184
      %v4313 = vpop.f32.mrb[0].mxu0
      %v4314 = vadd.f32 0.0, %v4313
      %v4315 = vpop.f32.mrb[0].mxu0
      %v4316 = vpop.f32.mrb[0].mxu0
      %v4317 = vadd.f32 0.0, %v4316
      %v4318 = vpop.f32.mrb[0].mxu0
      %4319 = vmatprep.mubr.bf16.mxu0 0
      %4320 = vmatmul.mubr.bf16.gmra.mrb[0].mxu0 %v4187
      %v4321 = vpop.f32.mrb[0].mxu0
      %v4322 = vadd.f32 0.0, %v4321
      %v4323 = vpop.f32.mrb[0].mxu0
      %v4324 = vpop.f32.mrb[0].mxu0
      %v4325 = vadd.f32 0.0, %v4324
      %v4326 = vpop.f32.mrb[0].mxu0
      %4327 = vmatprep.mubr.bf16.mxu0 0
      %4328 = vmatmul.mubr.bf16.gmra.mrb[0].mxu0 %v4190
      %v4329 = vpop.f32.mrb[0].mxu0
      %v4330 = vadd.f32 0.0, %v4329
      %v4331 = vpop.f32.mrb[0].mxu0
      %v4332 = vpop.f32.mrb[0].mxu0
      %v4333 = vadd.f32 0.0, %v4332
      %v4334 = vpop.f32.mrb[0].mxu0
      %4335 = vmatprep.mubr.bf16.mxu0 0
      %4336 = vmatmul.mubr.bf16.gmra.mrb[0].mxu0 %v4193
      %v4337 = vpop.f32.mrb[0].mxu0
      %v4338 = vadd.f32 0.0, %v4337
      %v4339 = vpop.f32.mrb[0].mxu0
      %v4340 = vpop.f32.mrb[0].mxu0
      %v4341 = vadd.f32 0.0, %v4340
      %v4342 = vpop.f32.mrb[0].mxu0
      %4343 = vmatprep.mubr.bf16.mxu0 0
      %4344 = vmatmul.mubr.bf16.gmra.mrb[0].mxu0 %v4196
      %v4345 = vpop.f32.mrb[0].mxu0
      %v4346 = vadd.f32 0.0, %v4345
      %v4347 = vpop.f32.mrb[0].mxu0
      %v4348 = vpop.f32.mrb[0].mxu0
      %v4349 = vadd.f32 0.0, %v4348
      %v4350 = vpop.f32.mrb[0].mxu0
      %4351 = vmatprep.mubr.bf16.mxu0 0
      %4352 = vmatmul.mubr.bf16.gmra.mrb[0].mxu0 %v4199
      %v4353 = vpop.f32.mrb[0].mxu0
      %v4354 = vadd.f32 0.0, %v4353
      %v4355 = vpop.f32.mrb[0].mxu0
      %v4356 = vpop.f32.mrb[0].mxu0
      %v4357 = vadd.f32 0.0, %v4356
      %v4358 = vpop.f32.mrb[0].mxu0
      %4359 = vmatprep.mubr.bf16.mxu0 0
      %4360 = vmatmul.mubr.bf16.gmra.mrb[0].mxu0 %v4202
      %v4361 = vpop.f32.mrb[0].mxu0
      %v4362 = vadd.f32 0.0, %v4361
      %v4363 = vpop.f32.mrb[0].mxu0
      %v4364 = vpop.f32.mrb[0].mxu0
      %v4365 = vadd.f32 0.0, %v4364
      %v4366 = vpop.f32.mrb[0].mxu0
      %4367 = vdwg.mxu0
      %v4368 = vadd.f32 %v4074, %v4242
      %v4369 = vadd.f32 %v4075, %v4245
      %v4370 = vadd.f32 %v4076, %v4250
      %v4371 = vadd.f32 %v4077, %v4253
      %v4372 = vadd.f32 %v4078, %v4258
      %v4373 = vadd.f32 %v4079, %v4261
      %v4374 = vadd.f32 %v4080, %v4266
      %v4375 = vadd.f32 %v4081, %v4269
      %v4376 = vadd.f32 %v4082, %v4274
      %v4377 = vadd.f32 %v4083, %v4277
      %v4378 = vadd.f32 %v4084, %v4282
      %v4379 = vadd.f32 %v4085, %v4285
      %v4380 = vadd.f32 %v4086, %v4290
      %v4381 = vadd.f32 %v4087, %v4293
      %v4382 = vadd.f32 %v4088, %v4298
      %v4383 = vadd.f32 %v4089, %v4301
      %v4384 = vadd.f32 %v4090, %v4306
      %v4385 = vadd.f32 %v4091, %v4309
      %v4386 = vadd.f32 %v4092, %v4314
      %v4387 = vadd.f32 %v4093, %v4317
      %v4388 = vadd.f32 %v4094, %v4322
      %v4389 = vadd.f32 %v4095, %v4325
      %v4390 = vadd.f32 %v4096, %v4330
      %v4391 = vadd.f32 %v4097, %v4333
      %v4392 = vadd.f32 %v4098, %v4338
      %v4393 = vadd.f32 %v4099, %v4341
      %v4394 = vadd.f32 %v4100, %v4346
      %v4395 = vadd.f32 %v4101, %v4349
      %v4396 = vadd.f32 %v4102, %v4354
      %v4397 = vadd.f32 %v4103, %v4357
      %v4398 = vadd.f32 %v4104, %v4362
      %v4399 = vadd.f32 %v4105, %v4365
      %v4400 = vld [vmem:[%s2962 + $0x2] sm:$0xff]
      %v4401 = vld [vmem:[%s2962 + $0xa] sm:$0xff]
      %v4402 = vld [vmem:[%s2962 + $0x1a] sm:$0xff]
      %v4403 = vld [vmem:[%s2962 + $0x22] sm:$0xff]
      %v4404 = vld [vmem:[%s2962 + $0x32] sm:$0xff]
      %v4405 = vld [vmem:[%s2962 + $0x3a] sm:$0xff]
      %v4406 = vld [vmem:[%s2962 + $0x4a] sm:$0xff]
      %v4407 = vld [vmem:[%s2962 + $0x52] sm:$0xff]
      %v4408 = vld [vmem:[%s2962 + $0x62] sm:$0xff]
      %v4409 = vld [vmem:[%s2962 + $0x6a] sm:$0xff]
      %v4410 = vld [vmem:[%s2962 + $0x7a] sm:$0xff]
      %v4411 = vld [vmem:[%s2962 + $0x82] sm:$0xff]
      %v4412 = vld [vmem:[%s2962 + $0x92] sm:$0xff]
      %v4413 = vld [vmem:[%s2962 + $0x9a] sm:$0xff]
      %v4414 = vld [vmem:[%s2962 + $0xaa] sm:$0xff]
      %v4415 = vld [vmem:[%s2962 + $0xb2] sm:$0xff]
      %v4416 = vld [vmem:[%s2962 + $0xc2] sm:$0xff]
      %v4417 = vld [vmem:[%s2962 + $0xca] sm:$0xff]
      %v4418 = vld [vmem:[%s2962 + $0xda] sm:$0xff]
      %v4419 = vld [vmem:[%s2962 + $0xe2] sm:$0xff]
      %v4420 = vld [vmem:[%s2962 + $0xf2] sm:$0xff]
      %v4421 = vld [vmem:[%s2962 + $0xfa] sm:$0xff]
      %v4422 = vld [vmem:[%s2962 + $0x10a] sm:$0xff]
      %v4423 = vld [vmem:[%s2962 + $0x112] sm:$0xff]
      %v4424 = vld [vmem:[%s2962 + $0x122] sm:$0xff]
      %v4425 = vld [vmem:[%s2962 + $0x12a] sm:$0xff]
      %v4426 = vld [vmem:[%s2962 + $0x13a] sm:$0xff]
      %v4427 = vld [vmem:[%s2962 + $0x142] sm:$0xff]
      %v4428 = vld [vmem:[%s2962 + $0x152] sm:$0xff]
      %v4429 = vld [vmem:[%s2962 + $0x15a] sm:$0xff]
      %v4430 = vld [vmem:[%s2962 + $0x16a] sm:$0xff]
      %v4431 = vld [vmem:[%s2962 + $0x172] sm:$0xff]
      %v4432 = vpack.c.bf16 %v4401, %v4400
      %v4433 = vpack.c.bf16 %v4403, %v4402
      %v4434 = vpack.c.bf16 %v4405, %v4404
      %v4435 = vpack.c.bf16 %v4407, %v4406
      %v4436 = vpack.c.bf16 %v4409, %v4408
      %v4437 = vpack.c.bf16 %v4411, %v4410
      %v4438 = vpack.c.bf16 %v4413, %v4412
      %v4439 = vpack.c.bf16 %v4415, %v4414
      %v4440 = vpack.c.bf16 %v4417, %v4416
      %v4441 = vpack.c.bf16 %v4419, %v4418
      %v4442 = vpack.c.bf16 %v4421, %v4420
      %v4443 = vpack.c.bf16 %v4423, %v4422
      %v4444 = vpack.c.bf16 %v4425, %v4424
      %v4445 = vpack.c.bf16 %v4427, %v4426
      %v4446 = vpack.c.bf16 %v4429, %v4428
      %v4447 = vpack.c.bf16 %v4431, %v4430
      %s4448 = scalar_lea.vmem %s2, 10
      %v4449 = vld [vmem:[%s4448] sm:$0x3]
      %v4451 = vsel %vm172, %v4432, 0
      %v4454 = vsel %vm172, %v4433, 0
      %v4457 = vsel %vm172, %v4434, 0
      %v4460 = vsel %vm172, %v4435, 0
      %v4463 = vsel %vm172, %v4436, 0
      %v4466 = vsel %vm172, %v4437, 0
      %v4469 = vsel %vm172, %v4438, 0
      %v4472 = vsel %vm172, %v4439, 0
      %v4475 = vsel %vm172, %v4440, 0
      %v4478 = vsel %vm172, %v4441, 0
      %v4481 = vsel %vm172, %v4442, 0
      %v4484 = vsel %vm172, %v4443, 0
      %v4487 = vsel %vm172, %v4444, 0
      %v4490 = vsel %vm172, %v4445, 0
      %v4493 = vsel %vm172, %v4446, 0
      %v4496 = vsel %vm172, %v4447, 0
      %v4499 = vsel %vm494, %v4449, 0
      %4501 = vmatprep.subr.bf16.mxu0 0
      %4502 = vmatpush1.bf16.msra.mxu0 %v4499
      %4503 = vmatprep.subr.bf16.mxu0 0
      %4504 = vmatpush1.bf16.msra.mxu0 0
      %4505 = vmatprep.subr.bf16.mxu0 0
      %4506 = vmatpush1.bf16.msra.mxu0 0
      %4507 = vmatprep.subr.bf16.mxu0 0
      %4508 = vmatpush1.bf16.msra.mxu0 0
      %4509 = vmatprep.subr.bf16.mxu0 0
      %4510 = vmatpush1.bf16.msra.mxu0 0
      %4511 = vmatprep.subr.bf16.mxu0 0
      %4512 = vmatpush1.bf16.msra.mxu0 0
      %4513 = vmatprep.subr.bf16.mxu0 0
      %4514 = vmatpush1.bf16.msra.mxu0 0
      %4515 = vmatprep.subr.bf16.mxu0 0
      %4516 = vmatpush1.bf16.msra.mxu0 0
      %4517 = vmatprep.subr.bf16.mxu0 0
      %4518 = vmatpush1.bf16.msra.mxu0 0
      %4519 = vmatprep.subr.bf16.mxu0 0
      %4520 = vmatpush1.bf16.msra.mxu0 0
      %4521 = vmatprep.subr.bf16.mxu0 0
      %4522 = vmatpush1.bf16.msra.mxu0 0
      %4523 = vmatprep.subr.bf16.mxu0 0
      %4524 = vmatpush1.bf16.msra.mxu0 0
      %4525 = vmatprep.subr.bf16.mxu0 0
      %4526 = vmatpush1.bf16.msra.mxu0 0
      %4527 = vmatprep.subr.bf16.mxu0 0
      %4528 = vmatpush1.bf16.msra.mxu0 0
      %4529 = vmatprep.subr.bf16.mxu0 0
      %4530 = vmatpush1.bf16.msra.mxu0 0
      %4531 = vmatprep.subr.bf16.mxu0 0
      %4532 = vmatpush1.bf16.msra.mxu0 0
      %4533 = vmatprep.mubr.bf16.mxu0 0
      %4534 = vmatmul.mubr.bf16.gmra.mrb[0].mxu0 %v4451
      %v4535 = vpop.f32.mrb[0].mxu0
      %v4536 = vadd.f32 0.0, %v4535
      %v4537 = vpop.f32.mrb[0].mxu0
      %v4538 = vpop.f32.mrb[0].mxu0
      %v4539 = vadd.f32 0.0, %v4538
      %v4540 = vpop.f32.mrb[0].mxu0
      %4541 = vmatprep.mubr.bf16.mxu0 0
      %4542 = vmatmul.mubr.bf16.gmra.mrb[0].mxu0 %v4454
      %v4543 = vpop.f32.mrb[0].mxu0
      %v4544 = vadd.f32 0.0, %v4543
      %v4545 = vpop.f32.mrb[0].mxu0
      %v4546 = vpop.f32.mrb[0].mxu0
      %v4547 = vadd.f32 0.0, %v4546
      %v4548 = vpop.f32.mrb[0].mxu0
      %4549 = vmatprep.mubr.bf16.mxu0 0
      %4550 = vmatmul.mubr.bf16.gmra.mrb[0].mxu0 %v4457
      %v4551 = vpop.f32.mrb[0].mxu0
      %v4552 = vadd.f32 0.0, %v4551
      %v4553 = vpop.f32.mrb[0].mxu0
      %v4554 = vpop.f32.mrb[0].mxu0
      %v4555 = vadd.f32 0.0, %v4554
      %v4556 = vpop.f32.mrb[0].mxu0
      %4557 = vmatprep.mubr.bf16.mxu0 0
      %4558 = vmatmul.mubr.bf16.gmra.mrb[0].mxu0 %v4460
      %v4559 = vpop.f32.mrb[0].mxu0
      %v4560 = vadd.f32 0.0, %v4559
      %v4561 = vpop.f32.mrb[0].mxu0
      %v4562 = vpop.f32.mrb[0].mxu0
      %v4563 = vadd.f32 0.0, %v4562
      %v4564 = vpop.f32.mrb[0].mxu0
      %4565 = vmatprep.mubr.bf16.mxu0 0
      %4566 = vmatmul.mubr.bf16.gmra.mrb[0].mxu0 %v4463
      %v4567 = vpop.f32.mrb[0].mxu0
      %v4568 = vadd.f32 0.0, %v4567
      %v4569 = vpop.f32.mrb[0].mxu0
      %v4570 = vpop.f32.mrb[0].mxu0
      %v4571 = vadd.f32 0.0, %v4570
      %v4572 = vpop.f32.mrb[0].mxu0
      %4573 = vmatprep.mubr.bf16.mxu0 0
      %4574 = vmatmul.mubr.bf16.gmra.mrb[0].mxu0 %v4466
      %v4575 = vpop.f32.mrb[0].mxu0
      %v4576 = vadd.f32 0.0, %v4575
      %v4577 = vpop.f32.mrb[0].mxu0
      %v4578 = vpop.f32.mrb[0].mxu0
      %v4579 = vadd.f32 0.0, %v4578
      %v4580 = vpop.f32.mrb[0].mxu0
      %4581 = vmatprep.mubr.bf16.mxu0 0
      %4582 = vmatmul.mubr.bf16.gmra.mrb[0].mxu0 %v4469
      %v4583 = vpop.f32.mrb[0].mxu0
      %v4584 = vadd.f32 0.0, %v4583
      %v4585 = vpop.f32.mrb[0].mxu0
      %v4586 = vpop.f32.mrb[0].mxu0
      %v4587 = vadd.f32 0.0, %v4586
      %v4588 = vpop.f32.mrb[0].mxu0
      %4589 = vmatprep.mubr.bf16.mxu0 0
      %4590 = vmatmul.mubr.bf16.gmra.mrb[0].mxu0 %v4472
      %v4591 = vpop.f32.mrb[0].mxu0
      %v4592 = vadd.f32 0.0, %v4591
      %v4593 = vpop.f32.mrb[0].mxu0
      %v4594 = vpop.f32.mrb[0].mxu0
      %v4595 = vadd.f32 0.0, %v4594
      %v4596 = vpop.f32.mrb[0].mxu0
      %4597 = vmatprep.mubr.bf16.mxu0 0
      %4598 = vmatmul.mubr.bf16.gmra.mrb[0].mxu0 %v4475
      %v4599 = vpop.f32.mrb[0].mxu0
      %v4600 = vadd.f32 0.0, %v4599
      %v4601 = vpop.f32.mrb[0].mxu0
      %v4602 = vpop.f32.mrb[0].mxu0
      %v4603 = vadd.f32 0.0, %v4602
      %v4604 = vpop.f32.mrb[0].mxu0
      %4605 = vmatprep.mubr.bf16.mxu0 0
      %4606 = vmatmul.mubr.bf16.gmra.mrb[0].mxu0 %v4478
      %v4607 = vpop.f32.mrb[0].mxu0
      %v4608 = vadd.f32 0.0, %v4607
      %v4609 = vpop.f32.mrb[0].mxu0
      %v4610 = vpop.f32.mrb[0].mxu0
      %v4611 = vadd.f32 0.0, %v4610
      %v4612 = vpop.f32.mrb[0].mxu0
      %4613 = vmatprep.mubr.bf16.mxu0 0
      %4614 = vmatmul.mubr.bf16.gmra.mrb[0].mxu0 %v4481
      %v4615 = vpop.f32.mrb[0].mxu0
      %v4616 = vadd.f32 0.0, %v4615
      %v4617 = vpop.f32.mrb[0].mxu0
      %v4618 = vpop.f32.mrb[0].mxu0
      %v4619 = vadd.f32 0.0, %v4618
      %v4620 = vpop.f32.mrb[0].mxu0
      %4621 = vmatprep.mubr.bf16.mxu0 0
      %4622 = vmatmul.mubr.bf16.gmra.mrb[0].mxu0 %v4484
      %v4623 = vpop.f32.mrb[0].mxu0
      %v4624 = vadd.f32 0.0, %v4623
      %v4625 = vpop.f32.mrb[0].mxu0
      %v4626 = vpop.f32.mrb[0].mxu0
      %v4627 = vadd.f32 0.0, %v4626
      %v4628 = vpop.f32.mrb[0].mxu0
      %4629 = vmatprep.mubr.bf16.mxu0 0
      %4630 = vmatmul.mubr.bf16.gmra.mrb[0].mxu0 %v4487
      %v4631 = vpop.f32.mrb[0].mxu0
      %v4632 = vadd.f32 0.0, %v4631
      %v4633 = vpop.f32.mrb[0].mxu0
      %v4634 = vpop.f32.mrb[0].mxu0
      %v4635 = vadd.f32 0.0, %v4634
      %v4636 = vpop.f32.mrb[0].mxu0
      %4637 = vmatprep.mubr.bf16.mxu0 0
      %4638 = vmatmul.mubr.bf16.gmra.mrb[0].mxu0 %v4490
      %v4639 = vpop.f32.mrb[0].mxu0
      %v4640 = vadd.f32 0.0, %v4639
      %v4641 = vpop.f32.mrb[0].mxu0
      %v4642 = vpop.f32.mrb[0].mxu0
      %v4643 = vadd.f32 0.0, %v4642
      %v4644 = vpop.f32.mrb[0].mxu0
      %4645 = vmatprep.mubr.bf16.mxu0 0
      %4646 = vmatmul.mubr.bf16.gmra.mrb[0].mxu0 %v4493
      %v4647 = vpop.f32.mrb[0].mxu0
      %v4648 = vadd.f32 0.0, %v4647
      %v4649 = vpop.f32.mrb[0].mxu0
      %v4650 = vpop.f32.mrb[0].mxu0
      %v4651 = vadd.f32 0.0, %v4650
      %v4652 = vpop.f32.mrb[0].mxu0
      %4653 = vmatprep.mubr.bf16.mxu0 0
      %4654 = vmatmul.mubr.bf16.gmra.mrb[0].mxu0 %v4496
      %v4655 = vpop.f32.mrb[0].mxu0
      %v4656 = vadd.f32 0.0, %v4655
      %v4657 = vpop.f32.mrb[0].mxu0
      %v4658 = vpop.f32.mrb[0].mxu0
      %v4659 = vadd.f32 0.0, %v4658
      %v4660 = vpop.f32.mrb[0].mxu0
      %4661 = vdwg.mxu0
      %v4662 = vadd.f32 %v4368, %v4536
      %v4663 = vadd.f32 %v4369, %v4539
      %v4664 = vadd.f32 %v4370, %v4544
      %v4665 = vadd.f32 %v4371, %v4547
      %v4666 = vadd.f32 %v4372, %v4552
      %v4667 = vadd.f32 %v4373, %v4555
      %v4668 = vadd.f32 %v4374, %v4560
      %v4669 = vadd.f32 %v4375, %v4563
      %v4670 = vadd.f32 %v4376, %v4568
      %v4671 = vadd.f32 %v4377, %v4571
      %v4672 = vadd.f32 %v4378, %v4576
      %v4673 = vadd.f32 %v4379, %v4579
      %v4674 = vadd.f32 %v4380, %v4584
      %v4675 = vadd.f32 %v4381, %v4587
      %v4676 = vadd.f32 %v4382, %v4592
      %v4677 = vadd.f32 %v4383, %v4595
      %v4678 = vadd.f32 %v4384, %v4600
      %v4679 = vadd.f32 %v4385, %v4603
      %v4680 = vadd.f32 %v4386, %v4608
      %v4681 = vadd.f32 %v4387, %v4611
      %v4682 = vadd.f32 %v4388, %v4616
      %v4683 = vadd.f32 %v4389, %v4619
      %v4684 = vadd.f32 %v4390, %v4624
      %v4685 = vadd.f32 %v4391, %v4627
      %v4686 = vadd.f32 %v4392, %v4632
      %v4687 = vadd.f32 %v4393, %v4635
      %v4688 = vadd.f32 %v4394, %v4640
      %v4689 = vadd.f32 %v4395, %v4643
      %v4690 = vadd.f32 %v4396, %v4648
      %v4691 = vadd.f32 %v4397, %v4651
      %v4692 = vadd.f32 %v4398, %v4656
      %v4693 = vadd.f32 %v4399, %v4659
      %s4694 = scalar_lea.vmem [#allocation3], 48
      %v4695 = vld [vmem:[%s4694] sm:$0xff]
      %v4696 = vld [vmem:[%s4694 + $0x8] sm:$0xff]
      %v4697 = vld [vmem:[%s4694 + $0x18] sm:$0xff]
      %v4698 = vld [vmem:[%s4694 + $0x20] sm:$0xff]
      %v4699 = vld [vmem:[%s4694 + $0x30] sm:$0xff]
      %v4700 = vld [vmem:[%s4694 + $0x38] sm:$0xff]
      %v4701 = vld [vmem:[%s4694 + $0x48] sm:$0xff]
      %v4702 = vld [vmem:[%s4694 + $0x50] sm:$0xff]
      %v4703 = vld [vmem:[%s4694 + $0x60] sm:$0xff]
      %v4704 = vld [vmem:[%s4694 + $0x68] sm:$0xff]
      %v4705 = vld [vmem:[%s4694 + $0x78] sm:$0xff]
      %v4706 = vld [vmem:[%s4694 + $0x80] sm:$0xff]
      %v4707 = vld [vmem:[%s4694 + $0x90] sm:$0xff]
      %v4708 = vld [vmem:[%s4694 + $0x98] sm:$0xff]
      %v4709 = vld [vmem:[%s4694 + $0xa8] sm:$0xff]
      %v4710 = vld [vmem:[%s4694 + $0xb0] sm:$0xff]
      %v4711 = vld [vmem:[%s4694 + $0xc0] sm:$0xff]
      %v4712 = vld [vmem:[%s4694 + $0xc8] sm:$0xff]
      %v4713 = vld [vmem:[%s4694 + $0xd8] sm:$0xff]
      %v4714 = vld [vmem:[%s4694 + $0xe0] sm:$0xff]
      %v4715 = vld [vmem:[%s4694 + $0xf0] sm:$0xff]
      %v4716 = vld [vmem:[%s4694 + $0xf8] sm:$0xff]
      %v4717 = vld [vmem:[%s4694 + $0x108] sm:$0xff]
      %v4718 = vld [vmem:[%s4694 + $0x110] sm:$0xff]
      %v4719 = vld [vmem:[%s4694 + $0x120] sm:$0xff]
      %v4720 = vld [vmem:[%s4694 + $0x128] sm:$0xff]
      %v4721 = vld [vmem:[%s4694 + $0x138] sm:$0xff]
      %v4722 = vld [vmem:[%s4694 + $0x140] sm:$0xff]
      %v4723 = vld [vmem:[%s4694 + $0x150] sm:$0xff]
      %v4724 = vld [vmem:[%s4694 + $0x158] sm:$0xff]
      %v4725 = vld [vmem:[%s4694 + $0x168] sm:$0xff]
      %v4726 = vld [vmem:[%s4694 + $0x170] sm:$0xff]
      %v4727 = vpack.c.bf16 %v4696, %v4695
      %v4728 = vpack.c.bf16 %v4698, %v4697
      %v4729 = vpack.c.bf16 %v4700, %v4699
      %v4730 = vpack.c.bf16 %v4702, %v4701
      %v4731 = vpack.c.bf16 %v4704, %v4703
      %v4732 = vpack.c.bf16 %v4706, %v4705
      %v4733 = vpack.c.bf16 %v4708, %v4707
      %v4734 = vpack.c.bf16 %v4710, %v4709
      %v4735 = vpack.c.bf16 %v4712, %v4711
      %v4736 = vpack.c.bf16 %v4714, %v4713
      %v4737 = vpack.c.bf16 %v4716, %v4715
      %v4738 = vpack.c.bf16 %v4718, %v4717
      %v4739 = vpack.c.bf16 %v4720, %v4719
      %v4740 = vpack.c.bf16 %v4722, %v4721
      %v4741 = vpack.c.bf16 %v4724, %v4723
      %v4742 = vpack.c.bf16 %v4726, %v4725
      %s4743 = scalar_lea.vmem %s2, 12
      %v4744 = vld [vmem:[%s4743] sm:$0x3]
      %v4746 = vsel %vm172, %v4727, 0
      %v4749 = vsel %vm172, %v4728, 0
      %v4752 = vsel %vm172, %v4729, 0
      %v4755 = vsel %vm172, %v4730, 0
      %v4758 = vsel %vm172, %v4731, 0
      %v4761 = vsel %vm172, %v4732, 0
      %v4764 = vsel %vm172, %v4733, 0
      %v4767 = vsel %vm172, %v4734, 0
      %v4770 = vsel %vm172, %v4735, 0
      %v4773 = vsel %vm172, %v4736, 0
      %v4776 = vsel %vm172, %v4737, 0
      %v4779 = vsel %vm172, %v4738, 0
      %v4782 = vsel %vm172, %v4739, 0
      %v4785 = vsel %vm172, %v4740, 0
      %v4788 = vsel %vm172, %v4741, 0
      %v4791 = vsel %vm172, %v4742, 0
      %v4794 = vsel %vm494, %v4744, 0
      %4796 = vmatprep.subr.bf16.mxu0 0
      %4797 = vmatpush1.bf16.msra.mxu0 %v4794
      %4798 = vmatprep.subr.bf16.mxu0 0
      %4799 = vmatpush1.bf16.msra.mxu0 0
      %4800 = vmatprep.subr.bf16.mxu0 0
      %4801 = vmatpush1.bf16.msra.mxu0 0
      %4802 = vmatprep.subr.bf16.mxu0 0
      %4803 = vmatpush1.bf16.msra.mxu0 0
      %4804 = vmatprep.subr.bf16.mxu0 0
      %4805 = vmatpush1.bf16.msra.mxu0 0
      %4806 = vmatprep.subr.bf16.mxu0 0
      %4807 = vmatpush1.bf16.msra.mxu0 0
      %4808 = vmatprep.subr.bf16.mxu0 0
      %4809 = vmatpush1.bf16.msra.mxu0 0
      %4810 = vmatprep.subr.bf16.mxu0 0
      %4811 = vmatpush1.bf16.msra.mxu0 0
      %4812 = vmatprep.subr.bf16.mxu0 0
      %4813 = vmatpush1.bf16.msra.mxu0 0
      %4814 = vmatprep.subr.bf16.mxu0 0
      %4815 = vmatpush1.bf16.msra.mxu0 0
      %4816 = vmatprep.subr.bf16.mxu0 0
      %4817 = vmatpush1.bf16.msra.mxu0 0
      %4818 = vmatprep.subr.bf16.mxu0 0
      %4819 = vmatpush1.bf16.msra.mxu0 0
      %4820 = vmatprep.subr.bf16.mxu0 0
      %4821 = vmatpush1.bf16.msra.mxu0 0
      %4822 = vmatprep.subr.bf16.mxu0 0
      %4823 = vmatpush1.bf16.msra.mxu0 0
      %4824 = vmatprep.subr.bf16.mxu0 0
      %4825 = vmatpush1.bf16.msra.mxu0 0
      %4826 = vmatprep.subr.bf16.mxu0 0
      %4827 = vmatpush1.bf16.msra.mxu0 0
      %4828 = vmatprep.mubr.bf16.mxu0 0
      %4829 = vmatmul.mubr.bf16.gmra.mrb[0].mxu0 %v4746
      %v4830 = vpop.f32.mrb[0].mxu0
      %v4831 = vadd.f32 0.0, %v4830
      %v4832 = vpop.f32.mrb[0].mxu0
      %v4833 = vpop.f32.mrb[0].mxu0
      %v4834 = vadd.f32 0.0, %v4833
      %v4835 = vpop.f32.mrb[0].mxu0
      %4836 = vmatprep.mubr.bf16.mxu0 0
      %4837 = vmatmul.mubr.bf16.gmra.mrb[0].mxu0 %v4749
      %v4838 = vpop.f32.mrb[0].mxu0
      %v4839 = vadd.f32 0.0, %v4838
      %v4840 = vpop.f32.mrb[0].mxu0
      %v4841 = vpop.f32.mrb[0].mxu0
      %v4842 = vadd.f32 0.0, %v4841
      %v4843 = vpop.f32.mrb[0].mxu0
      %4844 = vmatprep.mubr.bf16.mxu0 0
      %4845 = vmatmul.mubr.bf16.gmra.mrb[0].mxu0 %v4752
      %v4846 = vpop.f32.mrb[0].mxu0
      %v4847 = vadd.f32 0.0, %v4846
      %v4848 = vpop.f32.mrb[0].mxu0
      %v4849 = vpop.f32.mrb[0].mxu0
      %v4850 = vadd.f32 0.0, %v4849
      %v4851 = vpop.f32.mrb[0].mxu0
      %4852 = vmatprep.mubr.bf16.mxu0 0
      %4853 = vmatmul.mubr.bf16.gmra.mrb[0].mxu0 %v4755
      %v4854 = vpop.f32.mrb[0].mxu0
      %v4855 = vadd.f32 0.0, %v4854
      %v4856 = vpop.f32.mrb[0].mxu0
      %v4857 = vpop.f32.mrb[0].mxu0
      %v4858 = vadd.f32 0.0, %v4857
      %v4859 = vpop.f32.mrb[0].mxu0
      %4860 = vmatprep.mubr.bf16.mxu0 0
      %4861 = vmatmul.mubr.bf16.gmra.mrb[0].mxu0 %v4758
      %v4862 = vpop.f32.mrb[0].mxu0
      %v4863 = vadd.f32 0.0, %v4862
      %v4864 = vpop.f32.mrb[0].mxu0
      %v4865 = vpop.f32.mrb[0].mxu0
      %v4866 = vadd.f32 0.0, %v4865
      %v4867 = vpop.f32.mrb[0].mxu0
      %4868 = vmatprep.mubr.bf16.mxu0 0
      %4869 = vmatmul.mubr.bf16.gmra.mrb[0].mxu0 %v4761
      %v4870 = vpop.f32.mrb[0].mxu0
      %v4871 = vadd.f32 0.0, %v4870
      %v4872 = vpop.f32.mrb[0].mxu0
      %v4873 = vpop.f32.mrb[0].mxu0
      %v4874 = vadd.f32 0.0, %v4873
      %v4875 = vpop.f32.mrb[0].mxu0
      %4876 = vmatprep.mubr.bf16.mxu0 0
      %4877 = vmatmul.mubr.bf16.gmra.mrb[0].mxu0 %v4764
      %v4878 = vpop.f32.mrb[0].mxu0
      %v4879 = vadd.f32 0.0, %v4878
      %v4880 = vpop.f32.mrb[0].mxu0
      %v4881 = vpop.f32.mrb[0].mxu0
      %v4882 = vadd.f32 0.0, %v4881
      %v4883 = vpop.f32.mrb[0].mxu0
      %4884 = vmatprep.mubr.bf16.mxu0 0
      %4885 = vmatmul.mubr.bf16.gmra.mrb[0].mxu0 %v4767
      %v4886 = vpop.f32.mrb[0].mxu0
      %v4887 = vadd.f32 0.0, %v4886
      %v4888 = vpop.f32.mrb[0].mxu0
      %v4889 = vpop.f32.mrb[0].mxu0
      %v4890 = vadd.f32 0.0, %v4889
      %v4891 = vpop.f32.mrb[0].mxu0
      %4892 = vmatprep.mubr.bf16.mxu0 0
      %4893 = vmatmul.mubr.bf16.gmra.mrb[0].mxu0 %v4770
      %v4894 = vpop.f32.mrb[0].mxu0
      %v4895 = vadd.f32 0.0, %v4894
      %v4896 = vpop.f32.mrb[0].mxu0
      %v4897 = vpop.f32.mrb[0].mxu0
      %v4898 = vadd.f32 0.0, %v4897
      %v4899 = vpop.f32.mrb[0].mxu0
      %4900 = vmatprep.mubr.bf16.mxu0 0
      %4901 = vmatmul.mubr.bf16.gmra.mrb[0].mxu0 %v4773
      %v4902 = vpop.f32.mrb[0].mxu0
      %v4903 = vadd.f32 0.0, %v4902
      %v4904 = vpop.f32.mrb[0].mxu0
      %v4905 = vpop.f32.mrb[0].mxu0
      %v4906 = vadd.f32 0.0, %v4905
      %v4907 = vpop.f32.mrb[0].mxu0
      %4908 = vmatprep.mubr.bf16.mxu0 0
      %4909 = vmatmul.mubr.bf16.gmra.mrb[0].mxu0 %v4776
      %v4910 = vpop.f32.mrb[0].mxu0
      %v4911 = vadd.f32 0.0, %v4910
      %v4912 = vpop.f32.mrb[0].mxu0
      %v4913 = vpop.f32.mrb[0].mxu0
      %v4914 = vadd.f32 0.0, %v4913
      %v4915 = vpop.f32.mrb[0].mxu0
      %4916 = vmatprep.mubr.bf16.mxu0 0
      %4917 = vmatmul.mubr.bf16.gmra.mrb[0].mxu0 %v4779
      %v4918 = vpop.f32.mrb[0].mxu0
      %v4919 = vadd.f32 0.0, %v4918
      %v4920 = vpop.f32.mrb[0].mxu0
      %v4921 = vpop.f32.mrb[0].mxu0
      %v4922 = vadd.f32 0.0, %v4921
      %v4923 = vpop.f32.mrb[0].mxu0
      %4924 = vmatprep.mubr.bf16.mxu0 0
      %4925 = vmatmul.mubr.bf16.gmra.mrb[0].mxu0 %v4782
      %v4926 = vpop.f32.mrb[0].mxu0
      %v4927 = vadd.f32 0.0, %v4926
      %v4928 = vpop.f32.mrb[0].mxu0
      %v4929 = vpop.f32.mrb[0].mxu0
      %v4930 = vadd.f32 0.0, %v4929
      %v4931 = vpop.f32.mrb[0].mxu0
      %4932 = vmatprep.mubr.bf16.mxu0 0
      %4933 = vmatmul.mubr.bf16.gmra.mrb[0].mxu0 %v4785
      %v4934 = vpop.f32.mrb[0].mxu0
      %v4935 = vadd.f32 0.0, %v4934
      %v4936 = vpop.f32.mrb[0].mxu0
      %v4937 = vpop.f32.mrb[0].mxu0
      %v4938 = vadd.f32 0.0, %v4937
      %v4939 = vpop.f32.mrb[0].mxu0
      %4940 = vmatprep.mubr.bf16.mxu0 0
      %4941 = vmatmul.mubr.bf16.gmra.mrb[0].mxu0 %v4788
      %v4942 = vpop.f32.mrb[0].mxu0
      %v4943 = vadd.f32 0.0, %v4942
      %v4944 = vpop.f32.mrb[0].mxu0
      %v4945 = vpop.f32.mrb[0].mxu0
      %v4946 = vadd.f32 0.0, %v4945
      %v4947 = vpop.f32.mrb[0].mxu0
      %4948 = vmatprep.mubr.bf16.mxu0 0
      %4949 = vmatmul.mubr.bf16.gmra.mrb[0].mxu0 %v4791
      %v4950 = vpop.f32.mrb[0].mxu0
      %v4951 = vadd.f32 0.0, %v4950
      %v4952 = vpop.f32.mrb[0].mxu0
      %v4953 = vpop.f32.mrb[0].mxu0
      %v4954 = vadd.f32 0.0, %v4953
      %v4955 = vpop.f32.mrb[0].mxu0
      %4956 = vdwg.mxu0
      %v4957 = vadd.f32 %v4662, %v4831
      %v4958 = vadd.f32 %v4663, %v4834
      %v4959 = vadd.f32 %v4664, %v4839
      %v4960 = vadd.f32 %v4665, %v4842
      %v4961 = vadd.f32 %v4666, %v4847
      %v4962 = vadd.f32 %v4667, %v4850
      %v4963 = vadd.f32 %v4668, %v4855
      %v4964 = vadd.f32 %v4669, %v4858
      %v4965 = vadd.f32 %v4670, %v4863
      %v4966 = vadd.f32 %v4671, %v4866
      %v4967 = vadd.f32 %v4672, %v4871
      %v4968 = vadd.f32 %v4673, %v4874
      %v4969 = vadd.f32 %v4674, %v4879
      %v4970 = vadd.f32 %v4675, %v4882
      %v4971 = vadd.f32 %v4676, %v4887
      %v4972 = vadd.f32 %v4677, %v4890
      %v4973 = vadd.f32 %v4678, %v4895
      %v4974 = vadd.f32 %v4679, %v4898
      %v4975 = vadd.f32 %v4680, %v4903
      %v4976 = vadd.f32 %v4681, %v4906
      %v4977 = vadd.f32 %v4682, %v4911
      %v4978 = vadd.f32 %v4683, %v4914
      %v4979 = vadd.f32 %v4684, %v4919
      %v4980 = vadd.f32 %v4685, %v4922
      %v4981 = vadd.f32 %v4686, %v4927
      %v4982 = vadd.f32 %v4687, %v4930
      %v4983 = vadd.f32 %v4688, %v4935
      %v4984 = vadd.f32 %v4689, %v4938
      %v4985 = vadd.f32 %v4690, %v4943
      %v4986 = vadd.f32 %v4691, %v4946
      %v4987 = vadd.f32 %v4692, %v4951
      %v4988 = vadd.f32 %v4693, %v4954
      %v4989 = vld [vmem:[%s4694 + $0x1] sm:$0xff]
      %v4990 = vld [vmem:[%s4694 + $0x9] sm:$0xff]
      %v4991 = vld [vmem:[%s4694 + $0x19] sm:$0xff]
      %v4992 = vld [vmem:[%s4694 + $0x21] sm:$0xff]
      %v4993 = vld [vmem:[%s4694 + $0x31] sm:$0xff]
      %v4994 = vld [vmem:[%s4694 + $0x39] sm:$0xff]
      %v4995 = vld [vmem:[%s4694 + $0x49] sm:$0xff]
      %v4996 = vld [vmem:[%s4694 + $0x51] sm:$0xff]
      %v4997 = vld [vmem:[%s4694 + $0x61] sm:$0xff]
      %v4998 = vld [vmem:[%s4694 + $0x69] sm:$0xff]
      %v4999 = vld [vmem:[%s4694 + $0x79] sm:$0xff]
      %v5000 = vld [vmem:[%s4694 + $0x81] sm:$0xff]
      %v5001 = vld [vmem:[%s4694 + $0x91] sm:$0xff]
      %v5002 = vld [vmem:[%s4694 + $0x99] sm:$0xff]
      %v5003 = vld [vmem:[%s4694 + $0xa9] sm:$0xff]
      %v5004 = vld [vmem:[%s4694 + $0xb1] sm:$0xff]
      %v5005 = vld [vmem:[%s4694 + $0xc1] sm:$0xff]
      %v5006 = vld [vmem:[%s4694 + $0xc9] sm:$0xff]
      %v5007 = vld [vmem:[%s4694 + $0xd9] sm:$0xff]
      %v5008 = vld [vmem:[%s4694 + $0xe1] sm:$0xff]
      %v5009 = vld [vmem:[%s4694 + $0xf1] sm:$0xff]
      %v5010 = vld [vmem:[%s4694 + $0xf9] sm:$0xff]
      %v5011 = vld [vmem:[%s4694 + $0x109] sm:$0xff]
      %v5012 = vld [vmem:[%s4694 + $0x111] sm:$0xff]
      %v5013 = vld [vmem:[%s4694 + $0x121] sm:$0xff]
      %v5014 = vld [vmem:[%s4694 + $0x129] sm:$0xff]
      %v5015 = vld [vmem:[%s4694 + $0x139] sm:$0xff]
      %v5016 = vld [vmem:[%s4694 + $0x141] sm:$0xff]
      %v5017 = vld [vmem:[%s4694 + $0x151] sm:$0xff]
      %v5018 = vld [vmem:[%s4694 + $0x159] sm:$0xff]
      %v5019 = vld [vmem:[%s4694 + $0x169] sm:$0xff]
      %v5020 = vld [vmem:[%s4694 + $0x171] sm:$0xff]
      %v5021 = vpack.c.bf16 %v4990, %v4989
      %v5022 = vpack.c.bf16 %v4992, %v4991
      %v5023 = vpack.c.bf16 %v4994, %v4993
      %v5024 = vpack.c.bf16 %v4996, %v4995
      %v5025 = vpack.c.bf16 %v4998, %v4997
      %v5026 = vpack.c.bf16 %v5000, %v4999
      %v5027 = vpack.c.bf16 %v5002, %v5001
      %v5028 = vpack.c.bf16 %v5004, %v5003
      %v5029 = vpack.c.bf16 %v5006, %v5005
      %v5030 = vpack.c.bf16 %v5008, %v5007
      %v5031 = vpack.c.bf16 %v5010, %v5009
      %v5032 = vpack.c.bf16 %v5012, %v5011
      %v5033 = vpack.c.bf16 %v5014, %v5013
      %v5034 = vpack.c.bf16 %v5016, %v5015
      %v5035 = vpack.c.bf16 %v5018, %v5017
      %v5036 = vpack.c.bf16 %v5020, %v5019
      %s5037 = scalar_lea.vmem %s2, 14
      %v5038 = vld [vmem:[%s5037] sm:$0x3]
      %v5040 = vsel %vm172, %v5021, 0
      %v5043 = vsel %vm172, %v5022, 0
      %v5046 = vsel %vm172, %v5023, 0
      %v5049 = vsel %vm172, %v5024, 0
      %v5052 = vsel %vm172, %v5025, 0
      %v5055 = vsel %vm172, %v5026, 0
      %v5058 = vsel %vm172, %v5027, 0
      %v5061 = vsel %vm172, %v5028, 0
      %v5064 = vsel %vm172, %v5029, 0
      %v5067 = vsel %vm172, %v5030, 0
      %v5070 = vsel %vm172, %v5031, 0
      %v5073 = vsel %vm172, %v5032, 0
      %v5076 = vsel %vm172, %v5033, 0
      %v5079 = vsel %vm172, %v5034, 0
      %v5082 = vsel %vm172, %v5035, 0
      %v5085 = vsel %vm172, %v5036, 0
      %v5088 = vsel %vm494, %v5038, 0
      %5090 = vmatprep.subr.bf16.mxu0 0
      %5091 = vmatpush1.bf16.msra.mxu0 %v5088
      %5092 = vmatprep.subr.bf16.mxu0 0
      %5093 = vmatpush1.bf16.msra.mxu0 0
      %5094 = vmatprep.subr.bf16.mxu0 0
      %5095 = vmatpush1.bf16.msra.mxu0 0
      %5096 = vmatprep.subr.bf16.mxu0 0
      %5097 = vmatpush1.bf16.msra.mxu0 0
      %5098 = vmatprep.subr.bf16.mxu0 0
      %5099 = vmatpush1.bf16.msra.mxu0 0
      %5100 = vmatprep.subr.bf16.mxu0 0
      %5101 = vmatpush1.bf16.msra.mxu0 0
      %5102 = vmatprep.subr.bf16.mxu0 0
      %5103 = vmatpush1.bf16.msra.mxu0 0
      %5104 = vmatprep.subr.bf16.mxu0 0
      %5105 = vmatpush1.bf16.msra.mxu0 0
      %5106 = vmatprep.subr.bf16.mxu0 0
      %5107 = vmatpush1.bf16.msra.mxu0 0
      %5108 = vmatprep.subr.bf16.mxu0 0
      %5109 = vmatpush1.bf16.msra.mxu0 0
      %5110 = vmatprep.subr.bf16.mxu0 0
      %5111 = vmatpush1.bf16.msra.mxu0 0
      %5112 = vmatprep.subr.bf16.mxu0 0
      %5113 = vmatpush1.bf16.msra.mxu0 0
      %5114 = vmatprep.subr.bf16.mxu0 0
      %5115 = vmatpush1.bf16.msra.mxu0 0
      %5116 = vmatprep.subr.bf16.mxu0 0
      %5117 = vmatpush1.bf16.msra.mxu0 0
      %5118 = vmatprep.subr.bf16.mxu0 0
      %5119 = vmatpush1.bf16.msra.mxu0 0
      %5120 = vmatprep.subr.bf16.mxu0 0
      %5121 = vmatpush1.bf16.msra.mxu0 0
      %5122 = vmatprep.mubr.bf16.mxu0 0
      %5123 = vmatmul.mubr.bf16.gmra.mrb[0].mxu0 %v5040
      %v5124 = vpop.f32.mrb[0].mxu0
      %v5125 = vadd.f32 0.0, %v5124
      %v5126 = vpop.f32.mrb[0].mxu0
      %v5127 = vpop.f32.mrb[0].mxu0
      %v5128 = vadd.f32 0.0, %v5127
      %v5129 = vpop.f32.mrb[0].mxu0
      %5130 = vmatprep.mubr.bf16.mxu0 0
      %5131 = vmatmul.mubr.bf16.gmra.mrb[0].mxu0 %v5043
      %v5132 = vpop.f32.mrb[0].mxu0
      %v5133 = vadd.f32 0.0, %v5132
      %v5134 = vpop.f32.mrb[0].mxu0
      %v5135 = vpop.f32.mrb[0].mxu0
      %v5136 = vadd.f32 0.0, %v5135
      %v5137 = vpop.f32.mrb[0].mxu0
      %5138 = vmatprep.mubr.bf16.mxu0 0
      %5139 = vmatmul.mubr.bf16.gmra.mrb[0].mxu0 %v5046
      %v5140 = vpop.f32.mrb[0].mxu0
      %v5141 = vadd.f32 0.0, %v5140
      %v5142 = vpop.f32.mrb[0].mxu0
      %v5143 = vpop.f32.mrb[0].mxu0
      %v5144 = vadd.f32 0.0, %v5143
      %v5145 = vpop.f32.mrb[0].mxu0
      %5146 = vmatprep.mubr.bf16.mxu0 0
      %5147 = vmatmul.mubr.bf16.gmra.mrb[0].mxu0 %v5049
      %v5148 = vpop.f32.mrb[0].mxu0
      %v5149 = vadd.f32 0.0, %v5148
      %v5150 = vpop.f32.mrb[0].mxu0
      %v5151 = vpop.f32.mrb[0].mxu0
      %v5152 = vadd.f32 0.0, %v5151
      %v5153 = vpop.f32.mrb[0].mxu0
      %5154 = vmatprep.mubr.bf16.mxu0 0
      %5155 = vmatmul.mubr.bf16.gmra.mrb[0].mxu0 %v5052
      %v5156 = vpop.f32.mrb[0].mxu0
      %v5157 = vadd.f32 0.0, %v5156
      %v5158 = vpop.f32.mrb[0].mxu0
      %v5159 = vpop.f32.mrb[0].mxu0
      %v5160 = vadd.f32 0.0, %v5159
      %v5161 = vpop.f32.mrb[0].mxu0
      %5162 = vmatprep.mubr.bf16.mxu0 0
      %5163 = vmatmul.mubr.bf16.gmra.mrb[0].mxu0 %v5055
      %v5164 = vpop.f32.mrb[0].mxu0
      %v5165 = vadd.f32 0.0, %v5164
      %v5166 = vpop.f32.mrb[0].mxu0
      %v5167 = vpop.f32.mrb[0].mxu0
      %v5168 = vadd.f32 0.0, %v5167
      %v5169 = vpop.f32.mrb[0].mxu0
      %5170 = vmatprep.mubr.bf16.mxu0 0
      %5171 = vmatmul.mubr.bf16.gmra.mrb[0].mxu0 %v5058
      %v5172 = vpop.f32.mrb[0].mxu0
      %v5173 = vadd.f32 0.0, %v5172
      %v5174 = vpop.f32.mrb[0].mxu0
      %v5175 = vpop.f32.mrb[0].mxu0
      %v5176 = vadd.f32 0.0, %v5175
      %v5177 = vpop.f32.mrb[0].mxu0
      %5178 = vmatprep.mubr.bf16.mxu0 0
      %5179 = vmatmul.mubr.bf16.gmra.mrb[0].mxu0 %v5061
      %v5180 = vpop.f32.mrb[0].mxu0
      %v5181 = vadd.f32 0.0, %v5180
      %v5182 = vpop.f32.mrb[0].mxu0
      %v5183 = vpop.f32.mrb[0].mxu0
      %v5184 = vadd.f32 0.0, %v5183
      %v5185 = vpop.f32.mrb[0].mxu0
      %5186 = vmatprep.mubr.bf16.mxu0 0
      %5187 = vmatmul.mubr.bf16.gmra.mrb[0].mxu0 %v5064
      %v5188 = vpop.f32.mrb[0].mxu0
      %v5189 = vadd.f32 0.0, %v5188
      %v5190 = vpop.f32.mrb[0].mxu0
      %v5191 = vpop.f32.mrb[0].mxu0
      %v5192 = vadd.f32 0.0, %v5191
      %v5193 = vpop.f32.mrb[0].mxu0
      %5194 = vmatprep.mubr.bf16.mxu0 0
      %5195 = vmatmul.mubr.bf16.gmra.mrb[0].mxu0 %v5067
      %v5196 = vpop.f32.mrb[0].mxu0
      %v5197 = vadd.f32 0.0, %v5196
      %v5198 = vpop.f32.mrb[0].mxu0
      %v5199 = vpop.f32.mrb[0].mxu0
      %v5200 = vadd.f32 0.0, %v5199
      %v5201 = vpop.f32.mrb[0].mxu0
      %5202 = vmatprep.mubr.bf16.mxu0 0
      %5203 = vmatmul.mubr.bf16.gmra.mrb[0].mxu0 %v5070
      %v5204 = vpop.f32.mrb[0].mxu0
      %v5205 = vadd.f32 0.0, %v5204
      %v5206 = vpop.f32.mrb[0].mxu0
      %v5207 = vpop.f32.mrb[0].mxu0
      %v5208 = vadd.f32 0.0, %v5207
      %v5209 = vpop.f32.mrb[0].mxu0
      %5210 = vmatprep.mubr.bf16.mxu0 0
      %5211 = vmatmul.mubr.bf16.gmra.mrb[0].mxu0 %v5073
      %v5212 = vpop.f32.mrb[0].mxu0
      %v5213 = vadd.f32 0.0, %v5212
      %v5214 = vpop.f32.mrb[0].mxu0
      %v5215 = vpop.f32.mrb[0].mxu0
      %v5216 = vadd.f32 0.0, %v5215
      %v5217 = vpop.f32.mrb[0].mxu0
      %5218 = vmatprep.mubr.bf16.mxu0 0
      %5219 = vmatmul.mubr.bf16.gmra.mrb[0].mxu0 %v5076
      %v5220 = vpop.f32.mrb[0].mxu0
      %v5221 = vadd.f32 0.0, %v5220
      %v5222 = vpop.f32.mrb[0].mxu0
      %v5223 = vpop.f32.mrb[0].mxu0
      %v5224 = vadd.f32 0.0, %v5223
      %v5225 = vpop.f32.mrb[0].mxu0
      %5226 = vmatprep.mubr.bf16.mxu0 0
      %5227 = vmatmul.mubr.bf16.gmra.mrb[0].mxu0 %v5079
      %v5228 = vpop.f32.mrb[0].mxu0
      %v5229 = vadd.f32 0.0, %v5228
      %v5230 = vpop.f32.mrb[0].mxu0
      %v5231 = vpop.f32.mrb[0].mxu0
      %v5232 = vadd.f32 0.0, %v5231
      %v5233 = vpop.f32.mrb[0].mxu0
      %5234 = vmatprep.mubr.bf16.mxu0 0
      %5235 = vmatmul.mubr.bf16.gmra.mrb[0].mxu0 %v5082
      %v5236 = vpop.f32.mrb[0].mxu0
      %v5237 = vadd.f32 0.0, %v5236
      %v5238 = vpop.f32.mrb[0].mxu0
      %v5239 = vpop.f32.mrb[0].mxu0
      %v5240 = vadd.f32 0.0, %v5239
      %v5241 = vpop.f32.mrb[0].mxu0
      %5242 = vmatprep.mubr.bf16.mxu0 0
      %5243 = vmatmul.mubr.bf16.gmra.mrb[0].mxu0 %v5085
      %v5244 = vpop.f32.mrb[0].mxu0
      %v5245 = vadd.f32 0.0, %v5244
      %v5246 = vpop.f32.mrb[0].mxu0
      %v5247 = vpop.f32.mrb[0].mxu0
      %v5248 = vadd.f32 0.0, %v5247
      %v5249 = vpop.f32.mrb[0].mxu0
      %5250 = vdwg.mxu0
      %v5251 = vadd.f32 %v4957, %v5125
      %v5252 = vadd.f32 %v4958, %v5128
      %v5253 = vadd.f32 %v4959, %v5133
      %v5254 = vadd.f32 %v4960, %v5136
      %v5255 = vadd.f32 %v4961, %v5141
      %v5256 = vadd.f32 %v4962, %v5144
      %v5257 = vadd.f32 %v4963, %v5149
      %v5258 = vadd.f32 %v4964, %v5152
      %v5259 = vadd.f32 %v4965, %v5157
      %v5260 = vadd.f32 %v4966, %v5160
      %v5261 = vadd.f32 %v4967, %v5165
      %v5262 = vadd.f32 %v4968, %v5168
      %v5263 = vadd.f32 %v4969, %v5173
      %v5264 = vadd.f32 %v4970, %v5176
      %v5265 = vadd.f32 %v4971, %v5181
      %v5266 = vadd.f32 %v4972, %v5184
      %v5267 = vadd.f32 %v4973, %v5189
      %v5268 = vadd.f32 %v4974, %v5192
      %v5269 = vadd.f32 %v4975, %v5197
      %v5270 = vadd.f32 %v4976, %v5200
      %v5271 = vadd.f32 %v4977, %v5205
      %v5272 = vadd.f32 %v4978, %v5208
      %v5273 = vadd.f32 %v4979, %v5213
      %v5274 = vadd.f32 %v4980, %v5216
      %v5275 = vadd.f32 %v4981, %v5221
      %v5276 = vadd.f32 %v4982, %v5224
      %v5277 = vadd.f32 %v4983, %v5229
      %v5278 = vadd.f32 %v4984, %v5232
      %v5279 = vadd.f32 %v4985, %v5237
      %v5280 = vadd.f32 %v4986, %v5240
      %v5281 = vadd.f32 %v4987, %v5245
      %v5282 = vadd.f32 %v4988, %v5248
      %v5283 = vld [vmem:[%s4694 + $0x2] sm:$0xff]
      %v5284 = vld [vmem:[%s4694 + $0xa] sm:$0xff]
      %v5285 = vld [vmem:[%s4694 + $0x1a] sm:$0xff]
      %v5286 = vld [vmem:[%s4694 + $0x22] sm:$0xff]
      %v5287 = vld [vmem:[%s4694 + $0x32] sm:$0xff]
      %v5288 = vld [vmem:[%s4694 + $0x3a] sm:$0xff]
      %v5289 = vld [vmem:[%s4694 + $0x4a] sm:$0xff]
      %v5290 = vld [vmem:[%s4694 + $0x52] sm:$0xff]
      %v5291 = vld [vmem:[%s4694 + $0x62] sm:$0xff]
      %v5292 = vld [vmem:[%s4694 + $0x6a] sm:$0xff]
      %v5293 = vld [vmem:[%s4694 + $0x7a] sm:$0xff]
      %v5294 = vld [vmem:[%s4694 + $0x82] sm:$0xff]
      %v5295 = vld [vmem:[%s4694 + $0x92] sm:$0xff]
      %v5296 = vld [vmem:[%s4694 + $0x9a] sm:$0xff]
      %v5297 = vld [vmem:[%s4694 + $0xaa] sm:$0xff]
      %v5298 = vld [vmem:[%s4694 + $0xb2] sm:$0xff]
      %v5299 = vld [vmem:[%s4694 + $0xc2] sm:$0xff]
      %v5300 = vld [vmem:[%s4694 + $0xca] sm:$0xff]
      %v5301 = vld [vmem:[%s4694 + $0xda] sm:$0xff]
      %v5302 = vld [vmem:[%s4694 + $0xe2] sm:$0xff]
      %v5303 = vld [vmem:[%s4694 + $0xf2] sm:$0xff]
      %v5304 = vld [vmem:[%s4694 + $0xfa] sm:$0xff]
      %v5305 = vld [vmem:[%s4694 + $0x10a] sm:$0xff]
      %v5306 = vld [vmem:[%s4694 + $0x112] sm:$0xff]
      %v5307 = vld [vmem:[%s4694 + $0x122] sm:$0xff]
      %v5308 = vld [vmem:[%s4694 + $0x12a] sm:$0xff]
      %v5309 = vld [vmem:[%s4694 + $0x13a] sm:$0xff]
      %v5310 = vld [vmem:[%s4694 + $0x142] sm:$0xff]
      %v5311 = vld [vmem:[%s4694 + $0x152] sm:$0xff]
      %v5312 = vld [vmem:[%s4694 + $0x15a] sm:$0xff]
      %v5313 = vld [vmem:[%s4694 + $0x16a] sm:$0xff]
      %v5314 = vld [vmem:[%s4694 + $0x172] sm:$0xff]
      %v5315 = vpack.c.bf16 %v5284, %v5283
      %v5316 = vpack.c.bf16 %v5286, %v5285
      %v5317 = vpack.c.bf16 %v5288, %v5287
      %v5318 = vpack.c.bf16 %v5290, %v5289
      %v5319 = vpack.c.bf16 %v5292, %v5291
      %v5320 = vpack.c.bf16 %v5294, %v5293
      %v5321 = vpack.c.bf16 %v5296, %v5295
      %v5322 = vpack.c.bf16 %v5298, %v5297
      %v5323 = vpack.c.bf16 %v5300, %v5299
      %v5324 = vpack.c.bf16 %v5302, %v5301
      %v5325 = vpack.c.bf16 %v5304, %v5303
      %v5326 = vpack.c.bf16 %v5306, %v5305
      %v5327 = vpack.c.bf16 %v5308, %v5307
      %v5328 = vpack.c.bf16 %v5310, %v5309
      %v5329 = vpack.c.bf16 %v5312, %v5311
      %v5330 = vpack.c.bf16 %v5314, %v5313
      %s5331 = scalar_lea.vmem %s2, 16
      %v5332 = vld [vmem:[%s5331] sm:$0x3]
      %v5334 = vsel %vm172, %v5315, 0
      %v5337 = vsel %vm172, %v5316, 0
      %v5340 = vsel %vm172, %v5317, 0
      %v5343 = vsel %vm172, %v5318, 0
      %v5346 = vsel %vm172, %v5319, 0
      %v5349 = vsel %vm172, %v5320, 0
      %v5352 = vsel %vm172, %v5321, 0
      %v5355 = vsel %vm172, %v5322, 0
      %v5358 = vsel %vm172, %v5323, 0
      %v5361 = vsel %vm172, %v5324, 0
      %v5364 = vsel %vm172, %v5325, 0
      %v5367 = vsel %vm172, %v5326, 0
      %v5370 = vsel %vm172, %v5327, 0
      %v5373 = vsel %vm172, %v5328, 0
      %v5376 = vsel %vm172, %v5329, 0
      %v5379 = vsel %vm172, %v5330, 0
      %v5382 = vsel %vm494, %v5332, 0
      %5384 = vmatprep.subr.bf16.mxu0 0
      %5385 = vmatpush1.bf16.msra.mxu0 %v5382
      %5386 = vmatprep.subr.bf16.mxu0 0
      %5387 = vmatpush1.bf16.msra.mxu0 0
      %5388 = vmatprep.subr.bf16.mxu0 0
      %5389 = vmatpush1.bf16.msra.mxu0 0
      %5390 = vmatprep.subr.bf16.mxu0 0
      %5391 = vmatpush1.bf16.msra.mxu0 0
      %5392 = vmatprep.subr.bf16.mxu0 0
      %5393 = vmatpush1.bf16.msra.mxu0 0
      %5394 = vmatprep.subr.bf16.mxu0 0
      %5395 = vmatpush1.bf16.msra.mxu0 0
      %5396 = vmatprep.subr.bf16.mxu0 0
      %5397 = vmatpush1.bf16.msra.mxu0 0
      %5398 = vmatprep.subr.bf16.mxu0 0
      %5399 = vmatpush1.bf16.msra.mxu0 0
      %5400 = vmatprep.subr.bf16.mxu0 0
      %5401 = vmatpush1.bf16.msra.mxu0 0
      %5402 = vmatprep.subr.bf16.mxu0 0
      %5403 = vmatpush1.bf16.msra.mxu0 0
      %5404 = vmatprep.subr.bf16.mxu0 0
      %5405 = vmatpush1.bf16.msra.mxu0 0
      %5406 = vmatprep.subr.bf16.mxu0 0
      %5407 = vmatpush1.bf16.msra.mxu0 0
      %5408 = vmatprep.subr.bf16.mxu0 0
      %5409 = vmatpush1.bf16.msra.mxu0 0
      %5410 = vmatprep.subr.bf16.mxu0 0
      %5411 = vmatpush1.bf16.msra.mxu0 0
      %5412 = vmatprep.subr.bf16.mxu0 0
      %5413 = vmatpush1.bf16.msra.mxu0 0
      %5414 = vmatprep.subr.bf16.mxu0 0
      %5415 = vmatpush1.bf16.msra.mxu0 0
      %5416 = vmatprep.mubr.bf16.mxu0 0
      %5417 = vmatmul.mubr.bf16.gmra.mrb[0].mxu0 %v5334
      %v5418 = vpop.f32.mrb[0].mxu0
      %v5419 = vadd.f32 0.0, %v5418
      %v5420 = vpop.f32.mrb[0].mxu0
      %v5421 = vpop.f32.mrb[0].mxu0
      %v5422 = vadd.f32 0.0, %v5421
      %v5423 = vpop.f32.mrb[0].mxu0
      %5424 = vmatprep.mubr.bf16.mxu0 0
      %5425 = vmatmul.mubr.bf16.gmra.mrb[0].mxu0 %v5337
      %v5426 = vpop.f32.mrb[0].mxu0
      %v5427 = vadd.f32 0.0, %v5426
      %v5428 = vpop.f32.mrb[0].mxu0
      %v5429 = vpop.f32.mrb[0].mxu0
      %v5430 = vadd.f32 0.0, %v5429
      %v5431 = vpop.f32.mrb[0].mxu0
      %5432 = vmatprep.mubr.bf16.mxu0 0
      %5433 = vmatmul.mubr.bf16.gmra.mrb[0].mxu0 %v5340
      %v5434 = vpop.f32.mrb[0].mxu0
      %v5435 = vadd.f32 0.0, %v5434
      %v5436 = vpop.f32.mrb[0].mxu0
      %v5437 = vpop.f32.mrb[0].mxu0
      %v5438 = vadd.f32 0.0, %v5437
      %v5439 = vpop.f32.mrb[0].mxu0
      %5440 = vmatprep.mubr.bf16.mxu0 0
      %5441 = vmatmul.mubr.bf16.gmra.mrb[0].mxu0 %v5343
      %v5442 = vpop.f32.mrb[0].mxu0
      %v5443 = vadd.f32 0.0, %v5442
      %v5444 = vpop.f32.mrb[0].mxu0
      %v5445 = vpop.f32.mrb[0].mxu0
      %v5446 = vadd.f32 0.0, %v5445
      %v5447 = vpop.f32.mrb[0].mxu0
      %5448 = vmatprep.mubr.bf16.mxu0 0
      %5449 = vmatmul.mubr.bf16.gmra.mrb[0].mxu0 %v5346
      %v5450 = vpop.f32.mrb[0].mxu0
      %v5451 = vadd.f32 0.0, %v5450
      %v5452 = vpop.f32.mrb[0].mxu0
      %v5453 = vpop.f32.mrb[0].mxu0
      %v5454 = vadd.f32 0.0, %v5453
      %v5455 = vpop.f32.mrb[0].mxu0
      %5456 = vmatprep.mubr.bf16.mxu0 0
      %5457 = vmatmul.mubr.bf16.gmra.mrb[0].mxu0 %v5349
      %v5458 = vpop.f32.mrb[0].mxu0
      %v5459 = vadd.f32 0.0, %v5458
      %v5460 = vpop.f32.mrb[0].mxu0
      %v5461 = vpop.f32.mrb[0].mxu0
      %v5462 = vadd.f32 0.0, %v5461
      %v5463 = vpop.f32.mrb[0].mxu0
      %5464 = vmatprep.mubr.bf16.mxu0 0
      %5465 = vmatmul.mubr.bf16.gmra.mrb[0].mxu0 %v5352
      %v5466 = vpop.f32.mrb[0].mxu0
      %v5467 = vadd.f32 0.0, %v5466
      %v5468 = vpop.f32.mrb[0].mxu0
      %v5469 = vpop.f32.mrb[0].mxu0
      %v5470 = vadd.f32 0.0, %v5469
      %v5471 = vpop.f32.mrb[0].mxu0
      %5472 = vmatprep.mubr.bf16.mxu0 0
      %5473 = vmatmul.mubr.bf16.gmra.mrb[0].mxu0 %v5355
      %v5474 = vpop.f32.mrb[0].mxu0
      %v5475 = vadd.f32 0.0, %v5474
      %v5476 = vpop.f32.mrb[0].mxu0
      %v5477 = vpop.f32.mrb[0].mxu0
      %v5478 = vadd.f32 0.0, %v5477
      %v5479 = vpop.f32.mrb[0].mxu0
      %5480 = vmatprep.mubr.bf16.mxu0 0
      %5481 = vmatmul.mubr.bf16.gmra.mrb[0].mxu0 %v5358
      %v5482 = vpop.f32.mrb[0].mxu0
      %v5483 = vadd.f32 0.0, %v5482
      %v5484 = vpop.f32.mrb[0].mxu0
      %v5485 = vpop.f32.mrb[0].mxu0
      %v5486 = vadd.f32 0.0, %v5485
      %v5487 = vpop.f32.mrb[0].mxu0
      %5488 = vmatprep.mubr.bf16.mxu0 0
      %5489 = vmatmul.mubr.bf16.gmra.mrb[0].mxu0 %v5361
      %v5490 = vpop.f32.mrb[0].mxu0
      %v5491 = vadd.f32 0.0, %v5490
      %v5492 = vpop.f32.mrb[0].mxu0
      %v5493 = vpop.f32.mrb[0].mxu0
      %v5494 = vadd.f32 0.0, %v5493
      %v5495 = vpop.f32.mrb[0].mxu0
      %5496 = vmatprep.mubr.bf16.mxu0 0
      %5497 = vmatmul.mubr.bf16.gmra.mrb[0].mxu0 %v5364
      %v5498 = vpop.f32.mrb[0].mxu0
      %v5499 = vadd.f32 0.0, %v5498
      %v5500 = vpop.f32.mrb[0].mxu0
      %v5501 = vpop.f32.mrb[0].mxu0
      %v5502 = vadd.f32 0.0, %v5501
      %v5503 = vpop.f32.mrb[0].mxu0
      %5504 = vmatprep.mubr.bf16.mxu0 0
      %5505 = vmatmul.mubr.bf16.gmra.mrb[0].mxu0 %v5367
      %v5506 = vpop.f32.mrb[0].mxu0
      %v5507 = vadd.f32 0.0, %v5506
      %v5508 = vpop.f32.mrb[0].mxu0
      %v5509 = vpop.f32.mrb[0].mxu0
      %v5510 = vadd.f32 0.0, %v5509
      %v5511 = vpop.f32.mrb[0].mxu0
      %5512 = vmatprep.mubr.bf16.mxu0 0
      %5513 = vmatmul.mubr.bf16.gmra.mrb[0].mxu0 %v5370
      %v5514 = vpop.f32.mrb[0].mxu0
      %v5515 = vadd.f32 0.0, %v5514
      %v5516 = vpop.f32.mrb[0].mxu0
      %v5517 = vpop.f32.mrb[0].mxu0
      %v5518 = vadd.f32 0.0, %v5517
      %v5519 = vpop.f32.mrb[0].mxu0
      %5520 = vmatprep.mubr.bf16.mxu0 0
      %5521 = vmatmul.mubr.bf16.gmra.mrb[0].mxu0 %v5373
      %v5522 = vpop.f32.mrb[0].mxu0
      %v5523 = vadd.f32 0.0, %v5522
      %v5524 = vpop.f32.mrb[0].mxu0
      %v5525 = vpop.f32.mrb[0].mxu0
      %v5526 = vadd.f32 0.0, %v5525
      %v5527 = vpop.f32.mrb[0].mxu0
      %5528 = vmatprep.mubr.bf16.mxu0 0
      %5529 = vmatmul.mubr.bf16.gmra.mrb[0].mxu0 %v5376
      %v5530 = vpop.f32.mrb[0].mxu0
      %v5531 = vadd.f32 0.0, %v5530
      %v5532 = vpop.f32.mrb[0].mxu0
      %v5533 = vpop.f32.mrb[0].mxu0
      %v5534 = vadd.f32 0.0, %v5533
      %v5535 = vpop.f32.mrb[0].mxu0
      %5536 = vmatprep.mubr.bf16.mxu0 0
      %5537 = vmatmul.mubr.bf16.gmra.mrb[0].mxu0 %v5379
      %v5538 = vpop.f32.mrb[0].mxu0
      %v5539 = vadd.f32 0.0, %v5538
      %v5540 = vpop.f32.mrb[0].mxu0
      %v5541 = vpop.f32.mrb[0].mxu0
      %v5542 = vadd.f32 0.0, %v5541
      %v5543 = vpop.f32.mrb[0].mxu0
      %5544 = vdwg.mxu0
      %v5545 = vadd.f32 %v5251, %v5419
      %v5546 = vadd.f32 %v5252, %v5422
      %v5547 = vadd.f32 %v5253, %v5427
      %v5548 = vadd.f32 %v5254, %v5430
      %v5549 = vadd.f32 %v5255, %v5435
      %v5550 = vadd.f32 %v5256, %v5438
      %v5551 = vadd.f32 %v5257, %v5443
      %v5552 = vadd.f32 %v5258, %v5446
      %v5553 = vadd.f32 %v5259, %v5451
      %v5554 = vadd.f32 %v5260, %v5454
      %v5555 = vadd.f32 %v5261, %v5459
      %v5556 = vadd.f32 %v5262, %v5462
      %v5557 = vadd.f32 %v5263, %v5467
      %v5558 = vadd.f32 %v5264, %v5470
      %v5559 = vadd.f32 %v5265, %v5475
      %v5560 = vadd.f32 %v5266, %v5478
      %v5561 = vadd.f32 %v5267, %v5483
      %v5562 = vadd.f32 %v5268, %v5486
      %v5563 = vadd.f32 %v5269, %v5491
      %v5564 = vadd.f32 %v5270, %v5494
      %v5565 = vadd.f32 %v5271, %v5499
      %v5566 = vadd.f32 %v5272, %v5502
      %v5567 = vadd.f32 %v5273, %v5507
      %v5568 = vadd.f32 %v5274, %v5510
      %v5569 = vadd.f32 %v5275, %v5515
      %v5570 = vadd.f32 %v5276, %v5518
      %v5571 = vadd.f32 %v5277, %v5523
      %v5572 = vadd.f32 %v5278, %v5526
      %v5573 = vadd.f32 %v5279, %v5531
      %v5574 = vadd.f32 %v5280, %v5534
      %v5575 = vadd.f32 %v5281, %v5539
      %v5576 = vadd.f32 %v5282, %v5542
      %v5577 = vadd.f32 %v5545, %v282
      %v5578 = vadd.f32 %v5546, %v283
      %v5579 = vadd.f32 %v5547, %v284
      %v5580 = vadd.f32 %v5548, %v285
      %v5581 = vadd.f32 %v5549, %v286
      %v5582 = vadd.f32 %v5550, %v287
      %v5583 = vadd.f32 %v5551, %v288
      %v5584 = vadd.f32 %v5552, %v289
      %v5585 = vadd.f32 %v5553, %v290
      %v5586 = vadd.f32 %v5554, %v291
      %v5587 = vadd.f32 %v5555, %v292
      %v5588 = vadd.f32 %v5556, %v293
      %v5589 = vadd.f32 %v5557, %v294
      %v5590 = vadd.f32 %v5558, %v295
      %v5591 = vadd.f32 %v5559, %v296
      %v5592 = vadd.f32 %v5560, %v297
      %v5593 = vadd.f32 %v5561, %v298
      %v5594 = vadd.f32 %v5562, %v299
      %v5595 = vadd.f32 %v5563, %v300
      %v5596 = vadd.f32 %v5564, %v301
      %v5597 = vadd.f32 %v5565, %v302
      %v5598 = vadd.f32 %v5566, %v303
      %v5599 = vadd.f32 %v5567, %v304
      %v5600 = vadd.f32 %v5568, %v305
      %v5601 = vadd.f32 %v5569, %v306
      %v5602 = vadd.f32 %v5570, %v307
      %v5603 = vadd.f32 %v5571, %v308
      %v5604 = vadd.f32 %v5572, %v309
      %v5605 = vadd.f32 %v5573, %v310
      %v5606 = vadd.f32 %v5574, %v311
      %v5607 = vadd.f32 %v5575, %v312
      %v5608 = vadd.f32 %v5576, %v313
      %5609 = vst.msk [vmem:[%s170] sm:$0xff] %vm172, %v5577
      %5610 = vst.msk [vmem:[%s170 + $0x8] sm:$0xff] %vm172, %v5578
      %5611 = vst.msk [vmem:[%s170 + $0x10] sm:$0xff] %vm172, %v5579
      %5612 = vst.msk [vmem:[%s170 + $0x18] sm:$0xff] %vm172, %v5580
      %5613 = vst.msk [vmem:[%s170 + $0x20] sm:$0xff] %vm172, %v5581
      %5614 = vst.msk [vmem:[%s170 + $0x28] sm:$0xff] %vm172, %v5582
      %5615 = vst.msk [vmem:[%s170 + $0x30] sm:$0xff] %vm172, %v5583
      %5616 = vst.msk [vmem:[%s170 + $0x38] sm:$0xff] %vm172, %v5584
      %5617 = vst.msk [vmem:[%s170 + $0x40] sm:$0xff] %vm172, %v5585
      %5618 = vst.msk [vmem:[%s170 + $0x48] sm:$0xff] %vm172, %v5586
      %5619 = vst.msk [vmem:[%s170 + $0x50] sm:$0xff] %vm172, %v5587
      %5620 = vst.msk [vmem:[%s170 + $0x58] sm:$0xff] %vm172, %v5588
      %5621 = vst.msk [vmem:[%s170 + $0x60] sm:$0xff] %vm172, %v5589
      %5622 = vst.msk [vmem:[%s170 + $0x68] sm:$0xff] %vm172, %v5590
      %5623 = vst.msk [vmem:[%s170 + $0x70] sm:$0xff] %vm172, %v5591
      %5624 = vst.msk [vmem:[%s170 + $0x78] sm:$0xff] %vm172, %v5592
      %5625 = vst.msk [vmem:[%s170 + $0x80] sm:$0xff] %vm172, %v5593
      %5626 = vst.msk [vmem:[%s170 + $0x88] sm:$0xff] %vm172, %v5594
      %5627 = vst.msk [vmem:[%s170 + $0x90] sm:$0xff] %vm172, %v5595
      %5628 = vst.msk [vmem:[%s170 + $0x98] sm:$0xff] %vm172, %v5596
      %5629 = vst.msk [vmem:[%s170 + $0xa0] sm:$0xff] %vm172, %v5597
      %5630 = vst.msk [vmem:[%s170 + $0xa8] sm:$0xff] %vm172, %v5598
      %5631 = vst.msk [vmem:[%s170 + $0xb0] sm:$0xff] %vm172, %v5599
      %5632 = vst.msk [vmem:[%s170 + $0xb8] sm:$0xff] %vm172, %v5600
      %5633 = vst.msk [vmem:[%s170 + $0xc0] sm:$0xff] %vm172, %v5601
      %5634 = vst.msk [vmem:[%s170 + $0xc8] sm:$0xff] %vm172, %v5602
      %5635 = vst.msk [vmem:[%s170 + $0xd0] sm:$0xff] %vm172, %v5603
      %5636 = vst.msk [vmem:[%s170 + $0xd8] sm:$0xff] %vm172, %v5604
      %5637 = vst.msk [vmem:[%s170 + $0xe0] sm:$0xff] %vm172, %v5605
      %5638 = vst.msk [vmem:[%s170 + $0xe8] sm:$0xff] %vm172, %v5606
      %5639 = vst.msk [vmem:[%s170 + $0xf0] sm:$0xff] %vm172, %v5607
      %5640 = vst.msk [vmem:[%s170 + $0xf8] sm:$0xff] %vm172, %v5608
      %p5641 = scmp.lt.s32.totalorder %s14, 1
      %s5642 = scalar_select %p5641, %s14, 1
      %s5643 = smul.addr %s5642, 32
      %s5644 = smul.addr %s5643, 8
      %s5645 = scalar_lea.vmem %s3, %s5644
      // Predicated region
      $region33: #{residual_block_forward.1} parent=31 // pred_check
        %p5646 = pneg %p100
      $region34: #{residual_block_forward.1} parent=31 // pred_check_branch
        %5648 = sbr.rel (%p5646) target = $region36
      $region35: #{residual_block_forward.1} parent=31 // pred_region
        _
      $region36: #{residual_block_forward.1} parent=31 // pred_fallthru
        _
    $region32: #{residual_block_forward.1} parent=5 // pred_fallthru
      _
    %p5649 = scmp.le.s32.totalorder 2, %s9
    // Predicated region
    $region37: #{residual_block_forward.1} parent=5 // pred_check
      %p5650 = pneg %p5649
    $region38: #{residual_block_forward.1} parent=5 // pred_check_branch
      %5652 = sbr.rel (%p5650) target = $region40
    $region39: #{residual_block_forward.1} parent=5 // pred_region
      %s5653 = ssub.s32 %s9, 2
      // Predicated region
      $region41: #{residual_block_forward.1} parent=39 // pred_check
        %p5654 = pneg %p106
      $region42: #{residual_block_forward.1} parent=39 // pred_check_branch
        %5656 = sbr.rel (%p5654) target = $region44
      $region43: #{residual_block_forward.1} parent=39 // pred_region
        %p5657 = scmp.lt.s32.totalorder %s15, 1
        %s5658 = scalar_select %p5657, %s15, 1
        %s5659 = smul.addr %s5658, 32
        %s5660 = smul.addr %s5659, 8
        %s5661 = scalar_lea.vmem %s3, %s5660
      $region44: #{residual_block_forward.1} parent=39 // pred_fallthru
        _
    $region40: #{residual_block_forward.1} parent=5 // pred_fallthru
      _
  $region6: #{residual_block_forward.1} parent=0 // loop_footer
    %s13 = sadd.s32 1, %s9
  $region7: #{residual_block_forward.1} parent=0 // loop_footer_branch
    %8 = sbr.rel target = $region3
  $region8: #{residual_block_forward.1} parent=0 // loop_exit
    _

</llo_original>
